<compile_context>
chip_gen: v7x
topology: tpu7x:2x2x1
jax: 0.10.0
libtpu: 0.0.40
codegen_flags: <defaults>
</compile_context>

<pallas_src>
import functools

import jax
import jax.numpy as jnp
from jax import lax
from jax.experimental import pallas as pl
from jax.experimental.pallas import tpu as pltpu


# ----------------------------------------------------------------------------
# Helpers
# ----------------------------------------------------------------------------
def _layernorm(x, gamma, beta, eps=1e-5):
    # PyTorch nn.LayerNorm: biased variance, eps inside rsqrt, affine params.
    mean = jnp.mean(x, axis=-1, keepdims=True)
    var = jnp.mean(jnp.square(x - mean), axis=-1, keepdims=True)
    return (x - mean) * lax.rsqrt(var + eps) * gamma + beta


# Row layout inside the packed (NUM_ROWS, ROW_W) parameter slab.
_R_LN_IN_G, _R_LN_IN_B = 0, 1
_R_LN_S_G, _R_LN_S_B = 2, 3
_R_LN_M_G, _R_LN_M_B = 4, 5
_R_B_IR, _R_B_IZ, _R_B_IN = 6, 7, 8
_R_B_HR, _R_B_HZ, _R_B_HN = 9, 10, 11
_R_MLP_B1, _R_MLP_B2 = 12, 13
_NUM_ROWS = 14


# ----------------------------------------------------------------------------
# Kernel
# ----------------------------------------------------------------------------
def slot_attention_kernel(
    x_ref, slots0_ref,
    wk_ref, wv_ref, wq_ref,
    gru_wi_ref, gru_wh_ref,
    mlp_w1_ref, mlp_w2_ref,
    rows_ref,
    out_ref,
    *, num_iterations, features, slot_size, mlp_hidden_size, epsilon, use_bf16,
):
    F, D, H = features, slot_size, mlp_hidden_size
    Bt, N, _ = x_ref.shape
    S = slots0_ref.shape[1]
    BS = Bt * S
    scale = D ** (-0.5)
    cd = jnp.bfloat16 if use_bf16 else jnp.float32

    # ---- hoist all parameter loads / broadcasts out of the unrolled loop ----
    wk = wk_ref[...].astype(cd)
    wv = wv_ref[...].astype(cd)
    wq = wq_ref[...].astype(cd)
    gwi = gru_wi_ref[...].astype(cd)
    gwh = gru_wh_ref[...].astype(cd)
    wi_r, wi_z, wi_n = gwi[0], gwi[1], gwi[2]
    wh_r, wh_z, wh_n = gwh[0], gwh[1], gwh[2]
    w1 = mlp_w1_ref[...].astype(cd)
    w2 = mlp_w2_ref[...].astype(cd)

    rows = rows_ref[...]
    ln_in_g = rows[_R_LN_IN_G:_R_LN_IN_G + 1, :F]
    ln_in_b = rows[_R_LN_IN_B:_R_LN_IN_B + 1, :F]
    ln_s_g = jnp.broadcast_to(rows[_R_LN_S_G:_R_LN_S_G + 1, :D], (BS, D))
    ln_s_b = jnp.broadcast_to(rows[_R_LN_S_B:_R_LN_S_B + 1, :D], (BS, D))
    ln_m_g = jnp.broadcast_to(rows[_R_LN_M_G:_R_LN_M_G + 1, :D], (BS, D))
    ln_m_b = jnp.broadcast_to(rows[_R_LN_M_B:_R_LN_M_B + 1, :D], (BS, D))
    b_ir = jnp.broadcast_to(rows[_R_B_IR:_R_B_IR + 1, :D], (BS, D))
    b_iz = jnp.broadcast_to(rows[_R_B_IZ:_R_B_IZ + 1, :D], (BS, D))
    b_in = jnp.broadcast_to(rows[_R_B_IN:_R_B_IN + 1, :D], (BS, D))
    b_hr = jnp.broadcast_to(rows[_R_B_HR:_R_B_HR + 1, :D], (BS, D))
    b_hz = jnp.broadcast_to(rows[_R_B_HZ:_R_B_HZ + 1, :D], (BS, D))
    b_hn = jnp.broadcast_to(rows[_R_B_HN:_R_B_HN + 1, :D], (BS, D))
    mlp_b1 = jnp.broadcast_to(rows[_R_MLP_B1:_R_MLP_B1 + 1, :H], (BS, H))
    mlp_b2 = jnp.broadcast_to(rows[_R_MLP_B2:_R_MLP_B2 + 1, :D], (BS, D))

    def mm(a, b):  # 2-D matmul; inputs cast for the MXU, f32 accumulation.
        return jnp.dot(a.astype(cd), b, preferred_element_type=jnp.float32)

    # ---- shared LayerNorm + k/v projections over all folded batches ----
    x2d = x_ref[...].reshape(Bt * N, F)
    inputs = _layernorm(x2d, ln_in_g, ln_in_b)
    k = mm(inputs, wk).reshape(Bt, N, D)            # (Bt, N, D)
    v = mm(inputs, wv).reshape(Bt, N, D)
    k_c = k.astype(cd)
    v_c = v.astype(cd)

    slots = slots0_ref[...].reshape(BS, D)          # (Bt*S, D), f32

    for _ in range(num_iterations):
        slots_prev = slots

        sn = _layernorm(slots, ln_s_g, ln_s_b)
        q = (mm(sn, wq) * scale).reshape(Bt, S, D)  # (Bt, S, D)

        # logits (Bt, S, N): contract D on the MXU (no explicit transpose).
        logits = jnp.einsum("bsd,bnd->bsn", q.astype(cd), k_c,
                            preferred_element_type=jnp.float32)
        # softmax over the slot axis (axis=1), f32.
        m = jnp.max(logits, axis=1, keepdims=True)
        e = jnp.exp(logits - m)
        attn = e * pl.reciprocal(jnp.sum(e, axis=1, keepdims=True), approx=False)
        attn = attn + epsilon
        # renormalize over the token axis (axis=2).
        attn = attn * pl.reciprocal(jnp.sum(attn, axis=2, keepdims=True),
                                    approx=False)

        # updates (Bt, S, D): contract N on the MXU (no explicit transpose).
        updates = jnp.einsum("bsn,bnd->bsd", attn.astype(cd), v_c,
                             preferred_element_type=jnp.float32).reshape(BS, D)

        # GRUCell over all Bt*S slot rows; per-gate (D, D) dots keep the gate
        # outputs lane-aligned (no mid-vreg column slicing).
        gi_r = mm(updates, wi_r) + b_ir
        gi_z = mm(updates, wi_z) + b_iz
        gi_n = mm(updates, wi_n) + b_in
        gh_r = mm(slots_prev, wh_r) + b_hr
        gh_z = mm(slots_prev, wh_z) + b_hz
        gh_n = mm(slots_prev, wh_n) + b_hn
        r = jax.nn.sigmoid(gi_r + gh_r)
        z = jax.nn.sigmoid(gi_z + gh_z)
        n = jnp.tanh(gi_n + r * gh_n)
        slots = (1.0 - z) * n + z * slots_prev

        # residual MLP
        mn = _layernorm(slots, ln_m_g, ln_m_b)
        h1 = jnp.maximum(mm(mn, w1) + mlp_b1, 0.0)
        slots = slots + mm(h1, w2) + mlp_b2

    out_ref[...] = slots.reshape(Bt, S, D).astype(out_ref.dtype)


# ----------------------------------------------------------------------------
# Wrapper
# ----------------------------------------------------------------------------
def _pack_rows(rows, width):
    out = []
    for r in rows:
        r = jnp.asarray(r, jnp.float32).reshape(1, -1)
        out.append(jnp.pad(r, ((0, 0), (0, width - r.shape[1]))))
    return jnp.concatenate(out, axis=0)


def slot_attention_pallas(x, slots_init, params, *, num_iterations, slot_size,
                          mlp_hidden_size, epsilon, batch_block=None,
                          use_bf16=False):
    b, n, f = x.shape
    s = slots_init.shape[1]
    D, H, F = slot_size, mlp_hidden_size, f

    if batch_block is None:
        batch_block = b if b <= 8 else 8
    assert b % batch_block == 0, "batch_block must divide batch"
    Bt = batch_block

    # Pack the small (1, *) LayerNorm / bias parameters into one row slab.
    row_w = max(128, F, D, H)
    bih, bhh = params["gru_bih"], params["gru_bhh"]
    rows = _pack_rows(
        [params["ln_in_g"], params["ln_in_b"],
         params["ln_s_g"], params["ln_s_b"],
         params["ln_m_g"], params["ln_m_b"],
         bih[:, 0 * D:1 * D], bih[:, 1 * D:2 * D], bih[:, 2 * D:3 * D],
         bhh[:, 0 * D:1 * D], bhh[:, 1 * D:2 * D], bhh[:, 2 * D:3 * D],
         params["mlp_b1"], params["mlp_b2"]],
        row_w)

    # Split the GRU weights per gate -> (3, D, D) operands (lane-aligned).
    wih, whh = params["gru_wih"], params["gru_whh"]
    gru_wi = jnp.stack(
        [wih[:, 0 * D:1 * D], wih[:, 1 * D:2 * D], wih[:, 2 * D:3 * D]], axis=0)
    gru_wh = jnp.stack(
        [whh[:, 0 * D:1 * D], whh[:, 1 * D:2 * D], whh[:, 2 * D:3 * D]], axis=0)

    kernel = functools.partial(
        slot_attention_kernel,
        num_iterations=num_iterations, features=F, slot_size=D,
        mlp_hidden_size=H, epsilon=epsilon, use_bf16=use_bf16)

    full2 = lambda shape: pl.BlockSpec(shape, lambda i: (0, 0))
    full3 = lambda shape: pl.BlockSpec(shape, lambda i: (0, 0, 0))

    in_specs = [
        pl.BlockSpec((Bt, n, F), lambda i: (i, 0, 0)),   # x
        pl.BlockSpec((Bt, s, D), lambda i: (i, 0, 0)),   # slots_init
        full2((F, D)), full2((F, D)), full2((D, D)),     # Wk, Wv, Wq
        full3((3, D, D)), full3((3, D, D)),              # GRU W_i*, W_h*
        full2((D, H)), full2((H, D)),                    # MLP W1, W2
        full2((_NUM_ROWS, row_w)),                       # packed LN/bias rows
    ]

    return pl.pallas_call(
        kernel,
        grid=(b // Bt,),
        in_specs=in_specs,
        out_specs=pl.BlockSpec((Bt, s, D), lambda i: (i, 0, 0)),
        out_shape=jax.ShapeDtypeStruct((b, s, D), jnp.float32),
        compiler_params=pltpu.CompilerParams(
            dimension_semantics=("parallel",)),
    )(x, slots_init, params["wk"], params["wv"], params["wq"],
      gru_wi, gru_wh, params["mlp_w1"], params["mlp_w2"], rows)


# ----------------------------------------------------------------------------
# Pure-JAX reference (mirrors the PyTorch forward exactly) for validation.
# ----------------------------------------------------------------------------
def slot_attention_ref(x, slots_init, params, *, num_iterations, slot_size, epsilon):
    inputs = _layernorm(x, params["ln_in_g"], params["ln_in_b"])
    k = inputs @ params["wk"]
    v = inputs @ params["wv"]
    slots = slots_init
    D = slot_size
    for _ in range(num_iterations):
        slots_prev = slots
        sn = _layernorm(slots, params["ln_s_g"], params["ln_s_b"])
        q = (sn @ params["wq"]) * (D ** -0.5)
        logits = jnp.einsum("bnd,bsd->bns", k, q)
        attn = jax.nn.softmax(logits, axis=-1) + epsilon
        attn = attn / jnp.sum(attn, axis=-2, keepdims=True)
        updates = jnp.einsum("bns,bnd->bsd", attn, v)
        gi = updates @ params["gru_wih"] + params["gru_bih"]
        gh = slots_prev @ params["gru_whh"] + params["gru_bhh"]
        r = jax.nn.sigmoid(gi[..., :D] + gh[..., :D])
        z = jax.nn.sigmoid(gi[..., D:2 * D] + gh[..., D:2 * D])
        nn_ = jnp.tanh(gi[..., 2 * D:] + r * gh[..., 2 * D:])
        slots = (1 - z) * nn_ + z * slots_prev
        mn = _layernorm(slots, params["ln_m_g"], params["ln_m_b"])
        h1 = jnp.maximum(mn @ params["mlp_w1"] + params["mlp_b1"], 0.0)
        slots = slots + h1 @ params["mlp_w2"] + params["mlp_b2"]
    return slots


# ----------------------------------------------------------------------------
# Main
# ----------------------------------------------------------------------------
if __name__ == "__main__":
    # Hyperparameters (SlotAttention.__init__)
    features = 32
    num_iterations = 3
    num_slots = 4
    slot_size = 64
    mlp_hidden_size = 128
    epsilon = 1e-8

    B, N = 2, 16  # batch, number of input tokens

    key = jax.random.PRNGKey(0)
    keys = jax.random.split(key, 16)

    def xavier(k, shape):
        fan_in, fan_out = shape[-2], shape[-1]
        bound = (6.0 / (fan_in + fan_out)) ** 0.5
        return jax.random.uniform(k, shape, jnp.float32, -bound, bound)

    D, H, F = slot_size, mlp_hidden_size, features
    gru_bound = 1.0 / (D ** 0.5)

    params = {
        "ln_in_g": jnp.ones((1, F), jnp.float32),
        "ln_in_b": jnp.zeros((1, F), jnp.float32),
        "wk": xavier(keys[0], (F, D)),
        "wv": xavier(keys[1], (F, D)),
        "wq": xavier(keys[2], (D, D)),
        "ln_s_g": jnp.ones((1, D), jnp.float32),
        "ln_s_b": jnp.zeros((1, D), jnp.float32),
        "gru_wih": jax.random.uniform(keys[3], (D, 3 * D), jnp.float32, -gru_bound, gru_bound),
        "gru_whh": jax.random.uniform(keys[4], (D, 3 * D), jnp.float32, -gru_bound, gru_bound),
        "gru_bih": jax.random.uniform(keys[5], (1, 3 * D), jnp.float32, -gru_bound, gru_bound),
        "gru_bhh": jax.random.uniform(keys[6], (1, 3 * D), jnp.float32, -gru_bound, gru_bound),
        "ln_m_g": jnp.ones((1, D), jnp.float32),
        "ln_m_b": jnp.zeros((1, D), jnp.float32),
        "mlp_w1": xavier(keys[7], (D, H)),
        "mlp_b1": jnp.zeros((1, H), jnp.float32),
        "mlp_w2": xavier(keys[8], (H, D)),
        "mlp_b2": jnp.zeros((1, D), jnp.float32),
    }
    slots_mu = xavier(keys[9], (1, 1, D))
    slots_log_sigma = xavier(keys[10], (1, 1, D))

    x = jax.random.normal(keys[11], (B, N, F), jnp.float32)
    # slots = mu + exp(log_sigma) * randn  (random slot init done in JAX glue,
    # matching the torch.randn in the module's forward).
    noise = jax.random.normal(keys[12], (B, num_slots, D), jnp.float32)
    slots_init = slots_mu + jnp.exp(slots_log_sigma) * noise

    ref = slot_attention_ref(
        x, slots_init, params,
        num_iterations=num_iterations, slot_size=slot_size, epsilon=epsilon)

    # f32 MXU path (default): must match the reference tightly.
    out = slot_attention_pallas(
        x, slots_init, params,
        num_iterations=num_iterations, slot_size=slot_size,
        mlp_hidden_size=mlp_hidden_size, epsilon=epsilon)
    out = jax.block_until_ready(out)
    assert out.shape == (B, num_slots, slot_size)
    assert jnp.allclose(out, ref, rtol=1e-4, atol=1e-4), (
        float(jnp.max(jnp.abs(out - ref))))

    # bf16-on-MXU path (v6e/v7x optimization): loose check only, since the
    # 3-iteration recurrence amplifies bf16 rounding.
    out_bf16 = slot_attention_pallas(
        x, slots_init, params,
        num_iterations=num_iterations, slot_size=slot_size,
        mlp_hidden_size=mlp_hidden_size, epsilon=epsilon, use_bf16=True)
    out_bf16 = jax.block_until_ready(out_bf16)
    assert bool(jnp.all(jnp.isfinite(out_bf16)))
    assert float(jnp.max(jnp.abs(out_bf16 - ref))) < 0.5

    print("KERNEL_OK")
</pallas_src>

<mosaic_0001>
module attributes {stable_mosaic.version = 11 : i64} {
  func.func @slot_attention_kernel(%arg0: i32, %arg1: memref<2x16x32xf32, #tpu.memory_space<vmem>>, %arg2: memref<2x4x64xf32, #tpu.memory_space<vmem>>, %arg3: memref<32x64xf32, #tpu.memory_space<vmem>>, %arg4: memref<32x64xf32, #tpu.memory_space<vmem>>, %arg5: memref<64x64xf32, #tpu.memory_space<vmem>>, %arg6: memref<3x64x64xf32, #tpu.memory_space<vmem>>, %arg7: memref<3x64x64xf32, #tpu.memory_space<vmem>>, %arg8: memref<64x128xf32, #tpu.memory_space<vmem>>, %arg9: memref<128x64xf32, #tpu.memory_space<vmem>>, %arg10: memref<14x128xf32, #tpu.memory_space<vmem>>, %arg11: memref<2x4x64xf32, #tpu.memory_space<vmem>>) attributes {dimension_semantics = [#tpu.dimension_semantics<parallel>], iteration_bounds = array<i64: 1>, scalar_prefetch = 0 : i64, scratch_operands = 0 : i64, tpu.core_type = #tpu.core_type<tc>, window_params = [{transform_indices = @transform_0, window_bounds = array<i64: 2, 16, 32>}, {transform_indices = @transform_1, window_bounds = array<i64: 2, 4, 64>}, {pipeline_mode = #tpu.pipeline_mode<synchronous>, transform_indices = @transform_2, window_bounds = array<i64: 32, 64>}, {pipeline_mode = #tpu.pipeline_mode<synchronous>, transform_indices = @transform_3, window_bounds = array<i64: 32, 64>}, {pipeline_mode = #tpu.pipeline_mode<synchronous>, transform_indices = @transform_4, window_bounds = array<i64: 64, 64>}, {pipeline_mode = #tpu.pipeline_mode<synchronous>, transform_indices = @transform_5, window_bounds = array<i64: 3, 64, 64>}, {pipeline_mode = #tpu.pipeline_mode<synchronous>, transform_indices = @transform_6, window_bounds = array<i64: 3, 64, 64>}, {pipeline_mode = #tpu.pipeline_mode<synchronous>, transform_indices = @transform_7, window_bounds = array<i64: 64, 128>}, {pipeline_mode = #tpu.pipeline_mode<synchronous>, transform_indices = @transform_8, window_bounds = array<i64: 128, 64>}, {pipeline_mode = #tpu.pipeline_mode<synchronous>, transform_indices = @transform_9, window_bounds = array<i64: 14, 128>}, {transform_indices = @transform_10, window_bounds = array<i64: 2, 4, 64>}]} {
    %c0 = arith.constant 0 : index
    %c0_0 = arith.constant 0 : index
    %0 = vector.load %arg3[%c0, %c0_0] : memref<32x64xf32, #tpu.memory_space<vmem>>, vector<32x64xf32>
    %c0_1 = arith.constant 0 : index
    %c0_2 = arith.constant 0 : index
    %1 = vector.load %arg4[%c0_1, %c0_2] : memref<32x64xf32, #tpu.memory_space<vmem>>, vector<32x64xf32>
    %c0_3 = arith.constant 0 : index
    %c0_4 = arith.constant 0 : index
    %2 = vector.load %arg5[%c0_3, %c0_4] : memref<64x64xf32, #tpu.memory_space<vmem>>, vector<64x64xf32>
    %c0_5 = arith.constant 0 : index
    %c0_6 = arith.constant 0 : index
    %c0_7 = arith.constant 0 : index
    %3 = vector.load %arg6[%c0_5, %c0_6, %c0_7] : memref<3x64x64xf32, #tpu.memory_space<vmem>>, vector<3x64x64xf32>
    %c0_8 = arith.constant 0 : index
    %c0_9 = arith.constant 0 : index
    %c0_10 = arith.constant 0 : index
    %4 = vector.load %arg7[%c0_8, %c0_9, %c0_10] : memref<3x64x64xf32, #tpu.memory_space<vmem>>, vector<3x64x64xf32>
    %5 = vector.extract_strided_slice %3 {offsets = [0, 0, 0], sizes = [1, 64, 64], strides = [1, 1, 1]} : vector<3x64x64xf32> to vector<1x64x64xf32>
    %6 = vector.shape_cast %5 : vector<1x64x64xf32> to vector<64x64xf32>
    %7 = vector.extract_strided_slice %3 {offsets = [1, 0, 0], sizes = [1, 64, 64], strides = [1, 1, 1]} : vector<3x64x64xf32> to vector<1x64x64xf32>
    %8 = vector.shape_cast %7 : vector<1x64x64xf32> to vector<64x64xf32>
    %9 = vector.extract_strided_slice %3 {offsets = [2, 0, 0], sizes = [1, 64, 64], strides = [1, 1, 1]} : vector<3x64x64xf32> to vector<1x64x64xf32>
    %10 = vector.shape_cast %9 : vector<1x64x64xf32> to vector<64x64xf32>
    %11 = vector.extract_strided_slice %4 {offsets = [0, 0, 0], sizes = [1, 64, 64], strides = [1, 1, 1]} : vector<3x64x64xf32> to vector<1x64x64xf32>
    %12 = vector.shape_cast %11 : vector<1x64x64xf32> to vector<64x64xf32>
    %13 = vector.extract_strided_slice %4 {offsets = [1, 0, 0], sizes = [1, 64, 64], strides = [1, 1, 1]} : vector<3x64x64xf32> to vector<1x64x64xf32>
    %14 = vector.shape_cast %13 : vector<1x64x64xf32> to vector<64x64xf32>
    %15 = vector.extract_strided_slice %4 {offsets = [2, 0, 0], sizes = [1, 64, 64], strides = [1, 1, 1]} : vector<3x64x64xf32> to vector<1x64x64xf32>
    %16 = vector.shape_cast %15 : vector<1x64x64xf32> to vector<64x64xf32>
    %c0_11 = arith.constant 0 : index
    %c0_12 = arith.constant 0 : index
    %17 = vector.load %arg8[%c0_11, %c0_12] : memref<64x128xf32, #tpu.memory_space<vmem>>, vector<64x128xf32>
    %c0_13 = arith.constant 0 : index
    %c0_14 = arith.constant 0 : index
    %18 = vector.load %arg9[%c0_13, %c0_14] : memref<128x64xf32, #tpu.memory_space<vmem>>, vector<128x64xf32>
    %c0_15 = arith.constant 0 : index
    %c0_16 = arith.constant 0 : index
    %19 = vector.load %arg10[%c0_15, %c0_16] : memref<14x128xf32, #tpu.memory_space<vmem>>, vector<14x128xf32>
    %20 = vector.extract_strided_slice %19 {offsets = [0, 0], sizes = [1, 32], strides = [1, 1]} : vector<14x128xf32> to vector<1x32xf32>
    %21 = vector.extract_strided_slice %19 {offsets = [1, 0], sizes = [1, 32], strides = [1, 1]} : vector<14x128xf32> to vector<1x32xf32>
    %22 = vector.extract_strided_slice %19 {offsets = [2, 0], sizes = [1, 64], strides = [1, 1]} : vector<14x128xf32> to vector<1x64xf32>
    %23 = vector.shape_cast %22 : vector<1x64xf32> to vector<1x64xf32>
    %24 = vector.broadcast %23 : vector<1x64xf32> to vector<8x64xf32>
    %25 = vector.extract_strided_slice %19 {offsets = [3, 0], sizes = [1, 64], strides = [1, 1]} : vector<14x128xf32> to vector<1x64xf32>
    %26 = vector.shape_cast %25 : vector<1x64xf32> to vector<1x64xf32>
    %27 = vector.broadcast %26 : vector<1x64xf32> to vector<8x64xf32>
    %28 = vector.extract_strided_slice %19 {offsets = [4, 0], sizes = [1, 64], strides = [1, 1]} : vector<14x128xf32> to vector<1x64xf32>
    %29 = vector.shape_cast %28 : vector<1x64xf32> to vector<1x64xf32>
    %30 = vector.broadcast %29 : vector<1x64xf32> to vector<8x64xf32>
    %31 = vector.extract_strided_slice %19 {offsets = [5, 0], sizes = [1, 64], strides = [1, 1]} : vector<14x128xf32> to vector<1x64xf32>
    %32 = vector.shape_cast %31 : vector<1x64xf32> to vector<1x64xf32>
    %33 = vector.broadcast %32 : vector<1x64xf32> to vector<8x64xf32>
    %34 = vector.extract_strided_slice %19 {offsets = [6, 0], sizes = [1, 64], strides = [1, 1]} : vector<14x128xf32> to vector<1x64xf32>
    %35 = vector.shape_cast %34 : vector<1x64xf32> to vector<1x64xf32>
    %36 = vector.broadcast %35 : vector<1x64xf32> to vector<8x64xf32>
    %37 = vector.extract_strided_slice %19 {offsets = [7, 0], sizes = [1, 64], strides = [1, 1]} : vector<14x128xf32> to vector<1x64xf32>
    %38 = vector.shape_cast %37 : vector<1x64xf32> to vector<1x64xf32>
    %39 = vector.broadcast %38 : vector<1x64xf32> to vector<8x64xf32>
    %40 = vector.extract_strided_slice %19 {offsets = [8, 0], sizes = [1, 64], strides = [1, 1]} : vector<14x128xf32> to vector<1x64xf32>
    %41 = vector.shape_cast %40 : vector<1x64xf32> to vector<1x64xf32>
    %42 = vector.broadcast %41 : vector<1x64xf32> to vector<8x64xf32>
    %43 = vector.extract_strided_slice %19 {offsets = [9, 0], sizes = [1, 64], strides = [1, 1]} : vector<14x128xf32> to vector<1x64xf32>
    %44 = vector.shape_cast %43 : vector<1x64xf32> to vector<1x64xf32>
    %45 = vector.broadcast %44 : vector<1x64xf32> to vector<8x64xf32>
    %46 = vector.extract_strided_slice %19 {offsets = [10, 0], sizes = [1, 64], strides = [1, 1]} : vector<14x128xf32> to vector<1x64xf32>
    %47 = vector.shape_cast %46 : vector<1x64xf32> to vector<1x64xf32>
    %48 = vector.broadcast %47 : vector<1x64xf32> to vector<8x64xf32>
    %49 = vector.extract_strided_slice %19 {offsets = [11, 0], sizes = [1, 64], strides = [1, 1]} : vector<14x128xf32> to vector<1x64xf32>
    %50 = vector.shape_cast %49 : vector<1x64xf32> to vector<1x64xf32>
    %51 = vector.broadcast %50 : vector<1x64xf32> to vector<8x64xf32>
    %52 = vector.extract_strided_slice %19 {offsets = [12, 0], sizes = [1, 128], strides = [1, 1]} : vector<14x128xf32> to vector<1x128xf32>
    %53 = vector.shape_cast %52 : vector<1x128xf32> to vector<1x128xf32>
    %54 = vector.broadcast %53 : vector<1x128xf32> to vector<8x128xf32>
    %55 = vector.extract_strided_slice %19 {offsets = [13, 0], sizes = [1, 64], strides = [1, 1]} : vector<14x128xf32> to vector<1x64xf32>
    %56 = vector.shape_cast %55 : vector<1x64xf32> to vector<1x64xf32>
    %57 = vector.broadcast %56 : vector<1x64xf32> to vector<8x64xf32>
    %c0_17 = arith.constant 0 : index
    %c0_18 = arith.constant 0 : index
    %c0_19 = arith.constant 0 : index
    %58 = vector.load %arg1[%c0_17, %c0_18, %c0_19] : memref<2x16x32xf32, #tpu.memory_space<vmem>>, vector<2x16x32xf32>
    %59 = vector.shape_cast %58 : vector<2x16x32xf32> to vector<32x32xf32>
    %cst = arith.constant dense<0.000000e+00> : vector<32xf32>
    %60 = vector.multi_reduction <add>, %59, %cst [1] : vector<32x32xf32> to vector<32xf32>
    %61 = vector.shape_cast %60 : vector<32xf32> to vector<32x1xf32>
    %cst_20 = arith.constant 3.200000e+01 : f32
    %62 = vector.broadcast %cst_20 : f32 to vector<32x1xf32>
    %63 = arith.divf %61, %62 : vector<32x1xf32>
    %64 = vector.broadcast %63 : vector<32x1xf32> to vector<32x32xf32>
    %65 = arith.subf %59, %64 : vector<32x32xf32>
    %66 = arith.mulf %65, %65 : vector<32x32xf32>
    %cst_21 = arith.constant dense<0.000000e+00> : vector<32xf32>
    %67 = vector.multi_reduction <add>, %66, %cst_21 [1] : vector<32x32xf32> to vector<32xf32>
    %68 = vector.shape_cast %67 : vector<32xf32> to vector<32x1xf32>
    %cst_22 = arith.constant 3.200000e+01 : f32
    %69 = vector.broadcast %cst_22 : f32 to vector<32x1xf32>
    %70 = arith.divf %68, %69 : vector<32x1xf32>
    %71 = vector.broadcast %63 : vector<32x1xf32> to vector<32x32xf32>
    %72 = arith.subf %59, %71 : vector<32x32xf32>
    %cst_23 = arith.constant 9.99999974E-6 : f32
    %73 = vector.broadcast %cst_23 : f32 to vector<32x1xf32>
    %74 = arith.addf %70, %73 : vector<32x1xf32>
    %75 = math.rsqrt %74 : vector<32x1xf32>
    %76 = vector.broadcast %75 : vector<32x1xf32> to vector<32x32xf32>
    %77 = arith.mulf %72, %76 : vector<32x32xf32>
    %78 = vector.broadcast %20 : vector<1x32xf32> to vector<32x32xf32>
    %79 = arith.mulf %77, %78 : vector<32x32xf32>
    %80 = vector.broadcast %21 : vector<1x32xf32> to vector<32x32xf32>
    %81 = arith.addf %79, %80 : vector<32x32xf32>
    %cst_24 = arith.constant dense<0.000000e+00> : vector<32x64xf32>
    %82 = tpu.matmul %81, %0, %cst_24 {dimension_numbers = #tpu.dot_dimension_numbers<[1], [0], [0], [1], [0, 0, 1, 1], [], []>} : vector<32x32xf32>, vector<32x64xf32>, vector<32x64xf32> -> vector<32x64xf32>
    %83 = vector.shape_cast %82 : vector<32x64xf32> to vector<2x16x64xf32>
    %cst_25 = arith.constant dense<0.000000e+00> : vector<32x64xf32>
    %84 = tpu.matmul %81, %1, %cst_25 {dimension_numbers = #tpu.dot_dimension_numbers<[1], [0], [0], [1], [0, 0, 1, 1], [], []>} : vector<32x32xf32>, vector<32x64xf32>, vector<32x64xf32> -> vector<32x64xf32>
    %85 = vector.shape_cast %84 : vector<32x64xf32> to vector<2x16x64xf32>
    %c0_26 = arith.constant 0 : index
    %c0_27 = arith.constant 0 : index
    %c0_28 = arith.constant 0 : index
    %86 = vector.load %arg2[%c0_26, %c0_27, %c0_28] : memref<2x4x64xf32, #tpu.memory_space<vmem>>, vector<2x4x64xf32>
    %87 = vector.shape_cast %86 : vector<2x4x64xf32> to vector<8x64xf32>
    %cst_29 = arith.constant dense<0.000000e+00> : vector<8xf32>
    %88 = vector.multi_reduction <add>, %87, %cst_29 [1] : vector<8x64xf32> to vector<8xf32>
    %89 = vector.shape_cast %88 : vector<8xf32> to vector<8x1xf32>
    %cst_30 = arith.constant 6.400000e+01 : f32
    %90 = vector.broadcast %cst_30 : f32 to vector<8x1xf32>
    %91 = arith.divf %89, %90 : vector<8x1xf32>
    %92 = vector.broadcast %91 : vector<8x1xf32> to vector<8x64xf32>
    %93 = arith.subf %87, %92 : vector<8x64xf32>
    %94 = arith.mulf %93, %93 : vector<8x64xf32>
    %cst_31 = arith.constant dense<0.000000e+00> : vector<8xf32>
    %95 = vector.multi_reduction <add>, %94, %cst_31 [1] : vector<8x64xf32> to vector<8xf32>
    %96 = vector.shape_cast %95 : vector<8xf32> to vector<8x1xf32>
    %cst_32 = arith.constant 6.400000e+01 : f32
    %97 = vector.broadcast %cst_32 : f32 to vector<8x1xf32>
    %98 = arith.divf %96, %97 : vector<8x1xf32>
    %99 = vector.broadcast %91 : vector<8x1xf32> to vector<8x64xf32>
    %100 = arith.subf %87, %99 : vector<8x64xf32>
    %cst_33 = arith.constant 9.99999974E-6 : f32
    %101 = vector.broadcast %cst_33 : f32 to vector<8x1xf32>
    %102 = arith.addf %98, %101 : vector<8x1xf32>
    %103 = math.rsqrt %102 : vector<8x1xf32>
    %104 = vector.broadcast %103 : vector<8x1xf32> to vector<8x64xf32>
    %105 = arith.mulf %100, %104 : vector<8x64xf32>
    %106 = arith.mulf %105, %24 : vector<8x64xf32>
    %107 = arith.addf %106, %27 : vector<8x64xf32>
    %cst_34 = arith.constant dense<0.000000e+00> : vector<8x64xf32>
    %108 = tpu.matmul %107, %2, %cst_34 {dimension_numbers = #tpu.dot_dimension_numbers<[1], [0], [0], [1], [0, 0, 1, 1], [], []>} : vector<8x64xf32>, vector<64x64xf32>, vector<8x64xf32> -> vector<8x64xf32>
    %cst_35 = arith.constant 1.250000e-01 : f32
    %109 = vector.broadcast %cst_35 : f32 to vector<8x64xf32>
    %110 = arith.mulf %108, %109 : vector<8x64xf32>
    %111 = vector.shape_cast %110 : vector<8x64xf32> to vector<2x4x64xf32>
    "tpu.trace_start"() <{level = 10 : i32, message = "bsd,bnd->bsn"}> : () -> ()
    %cst_36 = arith.constant dense<0.000000e+00> : vector<2x4x16xf32>
    %112 = tpu.matmul %111, %83, %cst_36 {dimension_numbers = #tpu.dot_dimension_numbers<[2], [2], [1], [1], [0, 0, 0, 1, 1, 1], [0], [0]>} : vector<2x4x64xf32>, vector<2x16x64xf32>, vector<2x4x16xf32> -> vector<2x4x16xf32>
    "tpu.trace_stop"() : () -> ()
    %cst_37 = arith.constant dense<0xFF800000> : vector<2x16xf32>
    %113 = vector.multi_reduction <maximumf>, %112, %cst_37 [1] : vector<2x4x16xf32> to vector<2x16xf32>
    %114 = vector.shape_cast %113 : vector<2x16xf32> to vector<2x1x16xf32>
    %115 = vector.broadcast %114 : vector<2x1x16xf32> to vector<2x4x16xf32>
    %116 = arith.subf %112, %115 : vector<2x4x16xf32>
    %117 = math.exp %116 : vector<2x4x16xf32>
    %cst_38 = arith.constant dense<0.000000e+00> : vector<2x16xf32>
    %118 = vector.multi_reduction <add>, %117, %cst_38 [1] : vector<2x4x16xf32> to vector<2x16xf32>
    %119 = vector.shape_cast %118 : vector<2x16xf32> to vector<2x1x16xf32>
    %120 = tpu.reciprocal %119 : vector<2x1x16xf32> -> vector<2x1x16xf32>
    %121 = vector.broadcast %120 : vector<2x1x16xf32> to vector<2x4x16xf32>
    %122 = arith.mulf %117, %121 : vector<2x4x16xf32>
    %cst_39 = arith.constant 9.99999993E-9 : f32
    %123 = vector.broadcast %cst_39 : f32 to vector<2x4x16xf32>
    %124 = arith.addf %122, %123 : vector<2x4x16xf32>
    %cst_40 = arith.constant dense<0.000000e+00> : vector<2x4xf32>
    %125 = vector.multi_reduction <add>, %124, %cst_40 [2] : vector<2x4x16xf32> to vector<2x4xf32>
    %126 = vector.shape_cast %125 : vector<2x4xf32> to vector<2x4x1xf32>
    %127 = tpu.reciprocal %126 : vector<2x4x1xf32> -> vector<2x4x1xf32>
    %128 = vector.broadcast %127 : vector<2x4x1xf32> to vector<2x4x16xf32>
    %129 = arith.mulf %124, %128 : vector<2x4x16xf32>
    "tpu.trace_start"() <{level = 10 : i32, message = "bsn,bnd->bsd"}> : () -> ()
    %cst_41 = arith.constant dense<0.000000e+00> : vector<2x4x64xf32>
    %130 = tpu.matmul %129, %85, %cst_41 {dimension_numbers = #tpu.dot_dimension_numbers<[2], [1], [1], [2], [0, 0, 0, 1, 1, 2], [0], [0]>} : vector<2x4x16xf32>, vector<2x16x64xf32>, vector<2x4x64xf32> -> vector<2x4x64xf32>
    "tpu.trace_stop"() : () -> ()
    %131 = vector.shape_cast %130 : vector<2x4x64xf32> to vector<8x64xf32>
    %cst_42 = arith.constant dense<0.000000e+00> : vector<8x64xf32>
    %132 = tpu.matmul %131, %6, %cst_42 {dimension_numbers = #tpu.dot_dimension_numbers<[1], [0], [0], [1], [0, 0, 1, 1], [], []>} : vector<8x64xf32>, vector<64x64xf32>, vector<8x64xf32> -> vector<8x64xf32>
    %133 = arith.addf %132, %36 : vector<8x64xf32>
    %cst_43 = arith.constant dense<0.000000e+00> : vector<8x64xf32>
    %134 = tpu.matmul %131, %8, %cst_43 {dimension_numbers = #tpu.dot_dimension_numbers<[1], [0], [0], [1], [0, 0, 1, 1], [], []>} : vector<8x64xf32>, vector<64x64xf32>, vector<8x64xf32> -> vector<8x64xf32>
    %135 = arith.addf %134, %39 : vector<8x64xf32>
    %cst_44 = arith.constant dense<0.000000e+00> : vector<8x64xf32>
    %136 = tpu.matmul %131, %10, %cst_44 {dimension_numbers = #tpu.dot_dimension_numbers<[1], [0], [0], [1], [0, 0, 1, 1], [], []>} : vector<8x64xf32>, vector<64x64xf32>, vector<8x64xf32> -> vector<8x64xf32>
    %137 = arith.addf %136, %42 : vector<8x64xf32>
    %cst_45 = arith.constant dense<0.000000e+00> : vector<8x64xf32>
    %138 = tpu.matmul %87, %12, %cst_45 {dimension_numbers = #tpu.dot_dimension_numbers<[1], [0], [0], [1], [0, 0, 1, 1], [], []>} : vector<8x64xf32>, vector<64x64xf32>, vector<8x64xf32> -> vector<8x64xf32>
    %139 = arith.addf %138, %45 : vector<8x64xf32>
    %cst_46 = arith.constant dense<0.000000e+00> : vector<8x64xf32>
    %140 = tpu.matmul %87, %14, %cst_46 {dimension_numbers = #tpu.dot_dimension_numbers<[1], [0], [0], [1], [0, 0, 1, 1], [], []>} : vector<8x64xf32>, vector<64x64xf32>, vector<8x64xf32> -> vector<8x64xf32>
    %141 = arith.addf %140, %48 : vector<8x64xf32>
    %cst_47 = arith.constant dense<0.000000e+00> : vector<8x64xf32>
    %142 = tpu.matmul %87, %16, %cst_47 {dimension_numbers = #tpu.dot_dimension_numbers<[1], [0], [0], [1], [0, 0, 1, 1], [], []>} : vector<8x64xf32>, vector<64x64xf32>, vector<8x64xf32> -> vector<8x64xf32>
    %143 = arith.addf %142, %51 : vector<8x64xf32>
    %144 = arith.addf %133, %139 : vector<8x64xf32>
    %145 = arith.negf %144 : vector<8x64xf32>
    %146 = math.exp %145 : vector<8x64xf32>
    %cst_48 = arith.constant 1.000000e+00 : f32
    %147 = vector.broadcast %cst_48 : f32 to vector<8x64xf32>
    %148 = arith.addf %147, %146 : vector<8x64xf32>
    %149 = arith.divf %147, %148 : vector<8x64xf32>
    %150 = arith.addf %135, %141 : vector<8x64xf32>
    %151 = arith.negf %150 : vector<8x64xf32>
    %152 = math.exp %151 : vector<8x64xf32>
    %cst_49 = arith.constant 1.000000e+00 : f32
    %153 = vector.broadcast %cst_49 : f32 to vector<8x64xf32>
    %154 = arith.addf %153, %152 : vector<8x64xf32>
    %155 = arith.divf %153, %154 : vector<8x64xf32>
    %156 = arith.mulf %149, %143 : vector<8x64xf32>
    %157 = arith.addf %137, %156 : vector<8x64xf32>
    %158 = math.tanh %157 : vector<8x64xf32>
    %cst_50 = arith.constant 1.000000e+00 : f32
    %159 = vector.broadcast %cst_50 : f32 to vector<8x64xf32>
    %160 = arith.subf %159, %155 : vector<8x64xf32>
    %161 = arith.mulf %160, %158 : vector<8x64xf32>
    %162 = arith.mulf %155, %87 : vector<8x64xf32>
    %163 = arith.addf %161, %162 : vector<8x64xf32>
    %cst_51 = arith.constant dense<0.000000e+00> : vector<8xf32>
    %164 = vector.multi_reduction <add>, %163, %cst_51 [1] : vector<8x64xf32> to vector<8xf32>
    %165 = vector.shape_cast %164 : vector<8xf32> to vector<8x1xf32>
    %cst_52 = arith.constant 6.400000e+01 : f32
    %166 = vector.broadcast %cst_52 : f32 to vector<8x1xf32>
    %167 = arith.divf %165, %166 : vector<8x1xf32>
    %168 = vector.broadcast %167 : vector<8x1xf32> to vector<8x64xf32>
    %169 = arith.subf %163, %168 : vector<8x64xf32>
    %170 = arith.mulf %169, %169 : vector<8x64xf32>
    %cst_53 = arith.constant dense<0.000000e+00> : vector<8xf32>
    %171 = vector.multi_reduction <add>, %170, %cst_53 [1] : vector<8x64xf32> to vector<8xf32>
    %172 = vector.shape_cast %171 : vector<8xf32> to vector<8x1xf32>
    %cst_54 = arith.constant 6.400000e+01 : f32
    %173 = vector.broadcast %cst_54 : f32 to vector<8x1xf32>
    %174 = arith.divf %172, %173 : vector<8x1xf32>
    %175 = vector.broadcast %167 : vector<8x1xf32> to vector<8x64xf32>
    %176 = arith.subf %163, %175 : vector<8x64xf32>
    %cst_55 = arith.constant 9.99999974E-6 : f32
    %177 = vector.broadcast %cst_55 : f32 to vector<8x1xf32>
    %178 = arith.addf %174, %177 : vector<8x1xf32>
    %179 = math.rsqrt %178 : vector<8x1xf32>
    %180 = vector.broadcast %179 : vector<8x1xf32> to vector<8x64xf32>
    %181 = arith.mulf %176, %180 : vector<8x64xf32>
    %182 = arith.mulf %181, %30 : vector<8x64xf32>
    %183 = arith.addf %182, %33 : vector<8x64xf32>
    %cst_56 = arith.constant dense<0.000000e+00> : vector<8x128xf32>
    %184 = tpu.matmul %183, %17, %cst_56 {dimension_numbers = #tpu.dot_dimension_numbers<[1], [0], [0], [1], [0, 0, 1, 1], [], []>} : vector<8x64xf32>, vector<64x128xf32>, vector<8x128xf32> -> vector<8x128xf32>
    %185 = arith.addf %184, %54 : vector<8x128xf32>
    %cst_57 = arith.constant 0.000000e+00 : f32
    %186 = vector.broadcast %cst_57 : f32 to vector<8x128xf32>
    %187 = arith.maximumf %185, %186 : vector<8x128xf32>
    %cst_58 = arith.constant dense<0.000000e+00> : vector<8x64xf32>
    %188 = tpu.matmul %187, %18, %cst_58 {dimension_numbers = #tpu.dot_dimension_numbers<[1], [0], [0], [1], [0, 0, 1, 1], [], []>} : vector<8x128xf32>, vector<128x64xf32>, vector<8x64xf32> -> vector<8x64xf32>
    %189 = arith.addf %163, %188 : vector<8x64xf32>
    %190 = arith.addf %189, %57 : vector<8x64xf32>
    %cst_59 = arith.constant dense<0.000000e+00> : vector<8xf32>
    %191 = vector.multi_reduction <add>, %190, %cst_59 [1] : vector<8x64xf32> to vector<8xf32>
    %192 = vector.shape_cast %191 : vector<8xf32> to vector<8x1xf32>
    %cst_60 = arith.constant 6.400000e+01 : f32
    %193 = vector.broadcast %cst_60 : f32 to vector<8x1xf32>
    %194 = arith.divf %192, %193 : vector<8x1xf32>
    %195 = vector.broadcast %194 : vector<8x1xf32> to vector<8x64xf32>
    %196 = arith.subf %190, %195 : vector<8x64xf32>
    %197 = arith.mulf %196, %196 : vector<8x64xf32>
    %cst_61 = arith.constant dense<0.000000e+00> : vector<8xf32>
    %198 = vector.multi_reduction <add>, %197, %cst_61 [1] : vector<8x64xf32> to vector<8xf32>
    %199 = vector.shape_cast %198 : vector<8xf32> to vector<8x1xf32>
    %cst_62 = arith.constant 6.400000e+01 : f32
    %200 = vector.broadcast %cst_62 : f32 to vector<8x1xf32>
    %201 = arith.divf %199, %200 : vector<8x1xf32>
    %202 = vector.broadcast %194 : vector<8x1xf32> to vector<8x64xf32>
    %203 = arith.subf %190, %202 : vector<8x64xf32>
    %cst_63 = arith.constant 9.99999974E-6 : f32
    %204 = vector.broadcast %cst_63 : f32 to vector<8x1xf32>
    %205 = arith.addf %201, %204 : vector<8x1xf32>
    %206 = math.rsqrt %205 : vector<8x1xf32>
    %207 = vector.broadcast %206 : vector<8x1xf32> to vector<8x64xf32>
    %208 = arith.mulf %203, %207 : vector<8x64xf32>
    %209 = arith.mulf %208, %24 : vector<8x64xf32>
    %210 = arith.addf %209, %27 : vector<8x64xf32>
    %cst_64 = arith.constant dense<0.000000e+00> : vector<8x64xf32>
    %211 = tpu.matmul %210, %2, %cst_64 {dimension_numbers = #tpu.dot_dimension_numbers<[1], [0], [0], [1], [0, 0, 1, 1], [], []>} : vector<8x64xf32>, vector<64x64xf32>, vector<8x64xf32> -> vector<8x64xf32>
    %cst_65 = arith.constant 1.250000e-01 : f32
    %212 = vector.broadcast %cst_65 : f32 to vector<8x64xf32>
    %213 = arith.mulf %211, %212 : vector<8x64xf32>
    %214 = vector.shape_cast %213 : vector<8x64xf32> to vector<2x4x64xf32>
    "tpu.trace_start"() <{level = 10 : i32, message = "bsd,bnd->bsn"}> : () -> ()
    %cst_66 = arith.constant dense<0.000000e+00> : vector<2x4x16xf32>
    %215 = tpu.matmul %214, %83, %cst_66 {dimension_numbers = #tpu.dot_dimension_numbers<[2], [2], [1], [1], [0, 0, 0, 1, 1, 1], [0], [0]>} : vector<2x4x64xf32>, vector<2x16x64xf32>, vector<2x4x16xf32> -> vector<2x4x16xf32>
    "tpu.trace_stop"() : () -> ()
    %cst_67 = arith.constant dense<0xFF800000> : vector<2x16xf32>
    %216 = vector.multi_reduction <maximumf>, %215, %cst_67 [1] : vector<2x4x16xf32> to vector<2x16xf32>
    %217 = vector.shape_cast %216 : vector<2x16xf32> to vector<2x1x16xf32>
    %218 = vector.broadcast %217 : vector<2x1x16xf32> to vector<2x4x16xf32>
    %219 = arith.subf %215, %218 : vector<2x4x16xf32>
    %220 = math.exp %219 : vector<2x4x16xf32>
    %cst_68 = arith.constant dense<0.000000e+00> : vector<2x16xf32>
    %221 = vector.multi_reduction <add>, %220, %cst_68 [1] : vector<2x4x16xf32> to vector<2x16xf32>
    %222 = vector.shape_cast %221 : vector<2x16xf32> to vector<2x1x16xf32>
    %223 = tpu.reciprocal %222 : vector<2x1x16xf32> -> vector<2x1x16xf32>
    %224 = vector.broadcast %223 : vector<2x1x16xf32> to vector<2x4x16xf32>
    %225 = arith.mulf %220, %224 : vector<2x4x16xf32>
    %cst_69 = arith.constant 9.99999993E-9 : f32
    %226 = vector.broadcast %cst_69 : f32 to vector<2x4x16xf32>
    %227 = arith.addf %225, %226 : vector<2x4x16xf32>
    %cst_70 = arith.constant dense<0.000000e+00> : vector<2x4xf32>
    %228 = vector.multi_reduction <add>, %227, %cst_70 [2] : vector<2x4x16xf32> to vector<2x4xf32>
    %229 = vector.shape_cast %228 : vector<2x4xf32> to vector<2x4x1xf32>
    %230 = tpu.reciprocal %229 : vector<2x4x1xf32> -> vector<2x4x1xf32>
    %231 = vector.broadcast %230 : vector<2x4x1xf32> to vector<2x4x16xf32>
    %232 = arith.mulf %227, %231 : vector<2x4x16xf32>
    "tpu.trace_start"() <{level = 10 : i32, message = "bsn,bnd->bsd"}> : () -> ()
    %cst_71 = arith.constant dense<0.000000e+00> : vector<2x4x64xf32>
    %233 = tpu.matmul %232, %85, %cst_71 {dimension_numbers = #tpu.dot_dimension_numbers<[2], [1], [1], [2], [0, 0, 0, 1, 1, 2], [0], [0]>} : vector<2x4x16xf32>, vector<2x16x64xf32>, vector<2x4x64xf32> -> vector<2x4x64xf32>
    "tpu.trace_stop"() : () -> ()
    %234 = vector.shape_cast %233 : vector<2x4x64xf32> to vector<8x64xf32>
    %cst_72 = arith.constant dense<0.000000e+00> : vector<8x64xf32>
    %235 = tpu.matmul %234, %6, %cst_72 {dimension_numbers = #tpu.dot_dimension_numbers<[1], [0], [0], [1], [0, 0, 1, 1], [], []>} : vector<8x64xf32>, vector<64x64xf32>, vector<8x64xf32> -> vector<8x64xf32>
    %236 = arith.addf %235, %36 : vector<8x64xf32>
    %cst_73 = arith.constant dense<0.000000e+00> : vector<8x64xf32>
    %237 = tpu.matmul %234, %8, %cst_73 {dimension_numbers = #tpu.dot_dimension_numbers<[1], [0], [0], [1], [0, 0, 1, 1], [], []>} : vector<8x64xf32>, vector<64x64xf32>, vector<8x64xf32> -> vector<8x64xf32>
    %238 = arith.addf %237, %39 : vector<8x64xf32>
    %cst_74 = arith.constant dense<0.000000e+00> : vector<8x64xf32>
    %239 = tpu.matmul %234, %10, %cst_74 {dimension_numbers = #tpu.dot_dimension_numbers<[1], [0], [0], [1], [0, 0, 1, 1], [], []>} : vector<8x64xf32>, vector<64x64xf32>, vector<8x64xf32> -> vector<8x64xf32>
    %240 = arith.addf %239, %42 : vector<8x64xf32>
    %cst_75 = arith.constant dense<0.000000e+00> : vector<8x64xf32>
    %241 = tpu.matmul %190, %12, %cst_75 {dimension_numbers = #tpu.dot_dimension_numbers<[1], [0], [0], [1], [0, 0, 1, 1], [], []>} : vector<8x64xf32>, vector<64x64xf32>, vector<8x64xf32> -> vector<8x64xf32>
    %242 = arith.addf %241, %45 : vector<8x64xf32>
    %cst_76 = arith.constant dense<0.000000e+00> : vector<8x64xf32>
    %243 = tpu.matmul %190, %14, %cst_76 {dimension_numbers = #tpu.dot_dimension_numbers<[1], [0], [0], [1], [0, 0, 1, 1], [], []>} : vector<8x64xf32>, vector<64x64xf32>, vector<8x64xf32> -> vector<8x64xf32>
    %244 = arith.addf %243, %48 : vector<8x64xf32>
    %cst_77 = arith.constant dense<0.000000e+00> : vector<8x64xf32>
    %245 = tpu.matmul %190, %16, %cst_77 {dimension_numbers = #tpu.dot_dimension_numbers<[1], [0], [0], [1], [0, 0, 1, 1], [], []>} : vector<8x64xf32>, vector<64x64xf32>, vector<8x64xf32> -> vector<8x64xf32>
    %246 = arith.addf %245, %51 : vector<8x64xf32>
    %247 = arith.addf %236, %242 : vector<8x64xf32>
    %248 = arith.negf %247 : vector<8x64xf32>
    %249 = math.exp %248 : vector<8x64xf32>
    %cst_78 = arith.constant 1.000000e+00 : f32
    %250 = vector.broadcast %cst_78 : f32 to vector<8x64xf32>
    %251 = arith.addf %250, %249 : vector<8x64xf32>
    %252 = arith.divf %250, %251 : vector<8x64xf32>
    %253 = arith.addf %238, %244 : vector<8x64xf32>
    %254 = arith.negf %253 : vector<8x64xf32>
    %255 = math.exp %254 : vector<8x64xf32>
    %cst_79 = arith.constant 1.000000e+00 : f32
    %256 = vector.broadcast %cst_79 : f32 to vector<8x64xf32>
    %257 = arith.addf %256, %255 : vector<8x64xf32>
    %258 = arith.divf %256, %257 : vector<8x64xf32>
    %259 = arith.mulf %252, %246 : vector<8x64xf32>
    %260 = arith.addf %240, %259 : vector<8x64xf32>
    %261 = math.tanh %260 : vector<8x64xf32>
    %cst_80 = arith.constant 1.000000e+00 : f32
    %262 = vector.broadcast %cst_80 : f32 to vector<8x64xf32>
    %263 = arith.subf %262, %258 : vector<8x64xf32>
    %264 = arith.mulf %263, %261 : vector<8x64xf32>
    %265 = arith.mulf %258, %190 : vector<8x64xf32>
    %266 = arith.addf %264, %265 : vector<8x64xf32>
    %cst_81 = arith.constant dense<0.000000e+00> : vector<8xf32>
    %267 = vector.multi_reduction <add>, %266, %cst_81 [1] : vector<8x64xf32> to vector<8xf32>
    %268 = vector.shape_cast %267 : vector<8xf32> to vector<8x1xf32>
    %cst_82 = arith.constant 6.400000e+01 : f32
    %269 = vector.broadcast %cst_82 : f32 to vector<8x1xf32>
    %270 = arith.divf %268, %269 : vector<8x1xf32>
    %271 = vector.broadcast %270 : vector<8x1xf32> to vector<8x64xf32>
    %272 = arith.subf %266, %271 : vector<8x64xf32>
    %273 = arith.mulf %272, %272 : vector<8x64xf32>
    %cst_83 = arith.constant dense<0.000000e+00> : vector<8xf32>
    %274 = vector.multi_reduction <add>, %273, %cst_83 [1] : vector<8x64xf32> to vector<8xf32>
    %275 = vector.shape_cast %274 : vector<8xf32> to vector<8x1xf32>
    %cst_84 = arith.constant 6.400000e+01 : f32
    %276 = vector.broadcast %cst_84 : f32 to vector<8x1xf32>
    %277 = arith.divf %275, %276 : vector<8x1xf32>
    %278 = vector.broadcast %270 : vector<8x1xf32> to vector<8x64xf32>
    %279 = arith.subf %266, %278 : vector<8x64xf32>
    %cst_85 = arith.constant 9.99999974E-6 : f32
    %280 = vector.broadcast %cst_85 : f32 to vector<8x1xf32>
    %281 = arith.addf %277, %280 : vector<8x1xf32>
    %282 = math.rsqrt %281 : vector<8x1xf32>
    %283 = vector.broadcast %282 : vector<8x1xf32> to vector<8x64xf32>
    %284 = arith.mulf %279, %283 : vector<8x64xf32>
    %285 = arith.mulf %284, %30 : vector<8x64xf32>
    %286 = arith.addf %285, %33 : vector<8x64xf32>
    %cst_86 = arith.constant dense<0.000000e+00> : vector<8x128xf32>
    %287 = tpu.matmul %286, %17, %cst_86 {dimension_numbers = #tpu.dot_dimension_numbers<[1], [0], [0], [1], [0, 0, 1, 1], [], []>} : vector<8x64xf32>, vector<64x128xf32>, vector<8x128xf32> -> vector<8x128xf32>
    %288 = arith.addf %287, %54 : vector<8x128xf32>
    %cst_87 = arith.constant 0.000000e+00 : f32
    %289 = vector.broadcast %cst_87 : f32 to vector<8x128xf32>
    %290 = arith.maximumf %288, %289 : vector<8x128xf32>
    %cst_88 = arith.constant dense<0.000000e+00> : vector<8x64xf32>
    %291 = tpu.matmul %290, %18, %cst_88 {dimension_numbers = #tpu.dot_dimension_numbers<[1], [0], [0], [1], [0, 0, 1, 1], [], []>} : vector<8x128xf32>, vector<128x64xf32>, vector<8x64xf32> -> vector<8x64xf32>
    %292 = arith.addf %266, %291 : vector<8x64xf32>
    %293 = arith.addf %292, %57 : vector<8x64xf32>
    %cst_89 = arith.constant dense<0.000000e+00> : vector<8xf32>
    %294 = vector.multi_reduction <add>, %293, %cst_89 [1] : vector<8x64xf32> to vector<8xf32>
    %295 = vector.shape_cast %294 : vector<8xf32> to vector<8x1xf32>
    %cst_90 = arith.constant 6.400000e+01 : f32
    %296 = vector.broadcast %cst_90 : f32 to vector<8x1xf32>
    %297 = arith.divf %295, %296 : vector<8x1xf32>
    %298 = vector.broadcast %297 : vector<8x1xf32> to vector<8x64xf32>
    %299 = arith.subf %293, %298 : vector<8x64xf32>
    %300 = arith.mulf %299, %299 : vector<8x64xf32>
    %cst_91 = arith.constant dense<0.000000e+00> : vector<8xf32>
    %301 = vector.multi_reduction <add>, %300, %cst_91 [1] : vector<8x64xf32> to vector<8xf32>
    %302 = vector.shape_cast %301 : vector<8xf32> to vector<8x1xf32>
    %cst_92 = arith.constant 6.400000e+01 : f32
    %303 = vector.broadcast %cst_92 : f32 to vector<8x1xf32>
    %304 = arith.divf %302, %303 : vector<8x1xf32>
    %305 = vector.broadcast %297 : vector<8x1xf32> to vector<8x64xf32>
    %306 = arith.subf %293, %305 : vector<8x64xf32>
    %cst_93 = arith.constant 9.99999974E-6 : f32
    %307 = vector.broadcast %cst_93 : f32 to vector<8x1xf32>
    %308 = arith.addf %304, %307 : vector<8x1xf32>
    %309 = math.rsqrt %308 : vector<8x1xf32>
    %310 = vector.broadcast %309 : vector<8x1xf32> to vector<8x64xf32>
    %311 = arith.mulf %306, %310 : vector<8x64xf32>
    %312 = arith.mulf %311, %24 : vector<8x64xf32>
    %313 = arith.addf %312, %27 : vector<8x64xf32>
    %cst_94 = arith.constant dense<0.000000e+00> : vector<8x64xf32>
    %314 = tpu.matmul %313, %2, %cst_94 {dimension_numbers = #tpu.dot_dimension_numbers<[1], [0], [0], [1], [0, 0, 1, 1], [], []>} : vector<8x64xf32>, vector<64x64xf32>, vector<8x64xf32> -> vector<8x64xf32>
    %cst_95 = arith.constant 1.250000e-01 : f32
    %315 = vector.broadcast %cst_95 : f32 to vector<8x64xf32>
    %316 = arith.mulf %314, %315 : vector<8x64xf32>
    %317 = vector.shape_cast %316 : vector<8x64xf32> to vector<2x4x64xf32>
    "tpu.trace_start"() <{level = 10 : i32, message = "bsd,bnd->bsn"}> : () -> ()
    %cst_96 = arith.constant dense<0.000000e+00> : vector<2x4x16xf32>
    %318 = tpu.matmul %317, %83, %cst_96 {dimension_numbers = #tpu.dot_dimension_numbers<[2], [2], [1], [1], [0, 0, 0, 1, 1, 1], [0], [0]>} : vector<2x4x64xf32>, vector<2x16x64xf32>, vector<2x4x16xf32> -> vector<2x4x16xf32>
    "tpu.trace_stop"() : () -> ()
    %cst_97 = arith.constant dense<0xFF800000> : vector<2x16xf32>
    %319 = vector.multi_reduction <maximumf>, %318, %cst_97 [1] : vector<2x4x16xf32> to vector<2x16xf32>
    %320 = vector.shape_cast %319 : vector<2x16xf32> to vector<2x1x16xf32>
    %321 = vector.broadcast %320 : vector<2x1x16xf32> to vector<2x4x16xf32>
    %322 = arith.subf %318, %321 : vector<2x4x16xf32>
    %323 = math.exp %322 : vector<2x4x16xf32>
    %cst_98 = arith.constant dense<0.000000e+00> : vector<2x16xf32>
    %324 = vector.multi_reduction <add>, %323, %cst_98 [1] : vector<2x4x16xf32> to vector<2x16xf32>
    %325 = vector.shape_cast %324 : vector<2x16xf32> to vector<2x1x16xf32>
    %326 = tpu.reciprocal %325 : vector<2x1x16xf32> -> vector<2x1x16xf32>
    %327 = vector.broadcast %326 : vector<2x1x16xf32> to vector<2x4x16xf32>
    %328 = arith.mulf %323, %327 : vector<2x4x16xf32>
    %cst_99 = arith.constant 9.99999993E-9 : f32
    %329 = vector.broadcast %cst_99 : f32 to vector<2x4x16xf32>
    %330 = arith.addf %328, %329 : vector<2x4x16xf32>
    %cst_100 = arith.constant dense<0.000000e+00> : vector<2x4xf32>
    %331 = vector.multi_reduction <add>, %330, %cst_100 [2] : vector<2x4x16xf32> to vector<2x4xf32>
    %332 = vector.shape_cast %331 : vector<2x4xf32> to vector<2x4x1xf32>
    %333 = tpu.reciprocal %332 : vector<2x4x1xf32> -> vector<2x4x1xf32>
    %334 = vector.broadcast %333 : vector<2x4x1xf32> to vector<2x4x16xf32>
    %335 = arith.mulf %330, %334 : vector<2x4x16xf32>
    "tpu.trace_start"() <{level = 10 : i32, message = "bsn,bnd->bsd"}> : () -> ()
    %cst_101 = arith.constant dense<0.000000e+00> : vector<2x4x64xf32>
    %336 = tpu.matmul %335, %85, %cst_101 {dimension_numbers = #tpu.dot_dimension_numbers<[2], [1], [1], [2], [0, 0, 0, 1, 1, 2], [0], [0]>} : vector<2x4x16xf32>, vector<2x16x64xf32>, vector<2x4x64xf32> -> vector<2x4x64xf32>
    "tpu.trace_stop"() : () -> ()
    %337 = vector.shape_cast %336 : vector<2x4x64xf32> to vector<8x64xf32>
    %cst_102 = arith.constant dense<0.000000e+00> : vector<8x64xf32>
    %338 = tpu.matmul %337, %6, %cst_102 {dimension_numbers = #tpu.dot_dimension_numbers<[1], [0], [0], [1], [0, 0, 1, 1], [], []>} : vector<8x64xf32>, vector<64x64xf32>, vector<8x64xf32> -> vector<8x64xf32>
    %339 = arith.addf %338, %36 : vector<8x64xf32>
    %cst_103 = arith.constant dense<0.000000e+00> : vector<8x64xf32>
    %340 = tpu.matmul %337, %8, %cst_103 {dimension_numbers = #tpu.dot_dimension_numbers<[1], [0], [0], [1], [0, 0, 1, 1], [], []>} : vector<8x64xf32>, vector<64x64xf32>, vector<8x64xf32> -> vector<8x64xf32>
    %341 = arith.addf %340, %39 : vector<8x64xf32>
    %cst_104 = arith.constant dense<0.000000e+00> : vector<8x64xf32>
    %342 = tpu.matmul %337, %10, %cst_104 {dimension_numbers = #tpu.dot_dimension_numbers<[1], [0], [0], [1], [0, 0, 1, 1], [], []>} : vector<8x64xf32>, vector<64x64xf32>, vector<8x64xf32> -> vector<8x64xf32>
    %343 = arith.addf %342, %42 : vector<8x64xf32>
    %cst_105 = arith.constant dense<0.000000e+00> : vector<8x64xf32>
    %344 = tpu.matmul %293, %12, %cst_105 {dimension_numbers = #tpu.dot_dimension_numbers<[1], [0], [0], [1], [0, 0, 1, 1], [], []>} : vector<8x64xf32>, vector<64x64xf32>, vector<8x64xf32> -> vector<8x64xf32>
    %345 = arith.addf %344, %45 : vector<8x64xf32>
    %cst_106 = arith.constant dense<0.000000e+00> : vector<8x64xf32>
    %346 = tpu.matmul %293, %14, %cst_106 {dimension_numbers = #tpu.dot_dimension_numbers<[1], [0], [0], [1], [0, 0, 1, 1], [], []>} : vector<8x64xf32>, vector<64x64xf32>, vector<8x64xf32> -> vector<8x64xf32>
    %347 = arith.addf %346, %48 : vector<8x64xf32>
    %cst_107 = arith.constant dense<0.000000e+00> : vector<8x64xf32>
    %348 = tpu.matmul %293, %16, %cst_107 {dimension_numbers = #tpu.dot_dimension_numbers<[1], [0], [0], [1], [0, 0, 1, 1], [], []>} : vector<8x64xf32>, vector<64x64xf32>, vector<8x64xf32> -> vector<8x64xf32>
    %349 = arith.addf %348, %51 : vector<8x64xf32>
    %350 = arith.addf %339, %345 : vector<8x64xf32>
    %351 = arith.negf %350 : vector<8x64xf32>
    %352 = math.exp %351 : vector<8x64xf32>
    %cst_108 = arith.constant 1.000000e+00 : f32
    %353 = vector.broadcast %cst_108 : f32 to vector<8x64xf32>
    %354 = arith.addf %353, %352 : vector<8x64xf32>
    %355 = arith.divf %353, %354 : vector<8x64xf32>
    %356 = arith.addf %341, %347 : vector<8x64xf32>
    %357 = arith.negf %356 : vector<8x64xf32>
    %358 = math.exp %357 : vector<8x64xf32>
    %cst_109 = arith.constant 1.000000e+00 : f32
    %359 = vector.broadcast %cst_109 : f32 to vector<8x64xf32>
    %360 = arith.addf %359, %358 : vector<8x64xf32>
    %361 = arith.divf %359, %360 : vector<8x64xf32>
    %362 = arith.mulf %355, %349 : vector<8x64xf32>
    %363 = arith.addf %343, %362 : vector<8x64xf32>
    %364 = math.tanh %363 : vector<8x64xf32>
    %cst_110 = arith.constant 1.000000e+00 : f32
    %365 = vector.broadcast %cst_110 : f32 to vector<8x64xf32>
    %366 = arith.subf %365, %361 : vector<8x64xf32>
    %367 = arith.mulf %366, %364 : vector<8x64xf32>
    %368 = arith.mulf %361, %293 : vector<8x64xf32>
    %369 = arith.addf %367, %368 : vector<8x64xf32>
    %cst_111 = arith.constant dense<0.000000e+00> : vector<8xf32>
    %370 = vector.multi_reduction <add>, %369, %cst_111 [1] : vector<8x64xf32> to vector<8xf32>
    %371 = vector.shape_cast %370 : vector<8xf32> to vector<8x1xf32>
    %cst_112 = arith.constant 6.400000e+01 : f32
    %372 = vector.broadcast %cst_112 : f32 to vector<8x1xf32>
    %373 = arith.divf %371, %372 : vector<8x1xf32>
    %374 = vector.broadcast %373 : vector<8x1xf32> to vector<8x64xf32>
    %375 = arith.subf %369, %374 : vector<8x64xf32>
    %376 = arith.mulf %375, %375 : vector<8x64xf32>
    %cst_113 = arith.constant dense<0.000000e+00> : vector<8xf32>
    %377 = vector.multi_reduction <add>, %376, %cst_113 [1] : vector<8x64xf32> to vector<8xf32>
    %378 = vector.shape_cast %377 : vector<8xf32> to vector<8x1xf32>
    %cst_114 = arith.constant 6.400000e+01 : f32
    %379 = vector.broadcast %cst_114 : f32 to vector<8x1xf32>
    %380 = arith.divf %378, %379 : vector<8x1xf32>
    %381 = vector.broadcast %373 : vector<8x1xf32> to vector<8x64xf32>
    %382 = arith.subf %369, %381 : vector<8x64xf32>
    %cst_115 = arith.constant 9.99999974E-6 : f32
    %383 = vector.broadcast %cst_115 : f32 to vector<8x1xf32>
    %384 = arith.addf %380, %383 : vector<8x1xf32>
    %385 = math.rsqrt %384 : vector<8x1xf32>
    %386 = vector.broadcast %385 : vector<8x1xf32> to vector<8x64xf32>
    %387 = arith.mulf %382, %386 : vector<8x64xf32>
    %388 = arith.mulf %387, %30 : vector<8x64xf32>
    %389 = arith.addf %388, %33 : vector<8x64xf32>
    %cst_116 = arith.constant dense<0.000000e+00> : vector<8x128xf32>
    %390 = tpu.matmul %389, %17, %cst_116 {dimension_numbers = #tpu.dot_dimension_numbers<[1], [0], [0], [1], [0, 0, 1, 1], [], []>} : vector<8x64xf32>, vector<64x128xf32>, vector<8x128xf32> -> vector<8x128xf32>
    %391 = arith.addf %390, %54 : vector<8x128xf32>
    %cst_117 = arith.constant 0.000000e+00 : f32
    %392 = vector.broadcast %cst_117 : f32 to vector<8x128xf32>
    %393 = arith.maximumf %391, %392 : vector<8x128xf32>
    %cst_118 = arith.constant dense<0.000000e+00> : vector<8x64xf32>
    %394 = tpu.matmul %393, %18, %cst_118 {dimension_numbers = #tpu.dot_dimension_numbers<[1], [0], [0], [1], [0, 0, 1, 1], [], []>} : vector<8x128xf32>, vector<128x64xf32>, vector<8x64xf32> -> vector<8x64xf32>
    %395 = arith.addf %369, %394 : vector<8x64xf32>
    %396 = arith.addf %395, %57 : vector<8x64xf32>
    %397 = vector.shape_cast %396 : vector<8x64xf32> to vector<2x4x64xf32>
    %c0_119 = arith.constant 0 : index
    %c0_120 = arith.constant 0 : index
    %c0_121 = arith.constant 0 : index
    %398 = vector.load %arg11[%c0_119, %c0_120, %c0_121] : memref<2x4x64xf32, #tpu.memory_space<vmem>>, vector<2x4x64xf32>
    tpu.vector_store %arg11[%c0_119, %c0_120, %c0_121], %397 {strides = array<i32>} : memref<2x4x64xf32, #tpu.memory_space<vmem>>, vector<2x4x64xf32>,
    return
  }
  func.func @transform_0(%arg0: i32) -> (i32, i32, i32) {
    %c0_i32 = arith.constant 0 : i32
    %c0_i32_0 = arith.constant 0 : i32
    %c0_i32_1 = arith.constant 0 : i32
    return %arg0, %c0_i32, %c0_i32_0 : i32, i32, i32
  }
  func.func @transform_1(%arg0: i32) -> (i32, i32, i32) {
    %c0_i32 = arith.constant 0 : i32
    %c0_i32_0 = arith.constant 0 : i32
    %c0_i32_1 = arith.constant 0 : i32
    return %arg0, %c0_i32, %c0_i32_0 : i32, i32, i32
  }
  func.func @transform_2(%arg0: i32) -> (i32, i32) {
    %c0_i32 = arith.constant 0 : i32
    %c0_i32_0 = arith.constant 0 : i32
    %c0_i32_1 = arith.constant 0 : i32
    return %c0_i32, %c0_i32_0 : i32, i32
  }
  func.func @transform_3(%arg0: i32) -> (i32, i32) {
    %c0_i32 = arith.constant 0 : i32
    %c0_i32_0 = arith.constant 0 : i32
    %c0_i32_1 = arith.constant 0 : i32
    return %c0_i32, %c0_i32_0 : i32, i32
  }
  func.func @transform_4(%arg0: i32) -> (i32, i32) {
    %c0_i32 = arith.constant 0 : i32
    %c0_i32_0 = arith.constant 0 : i32
    %c0_i32_1 = arith.constant 0 : i32
    return %c0_i32, %c0_i32_0 : i32, i32
  }
  func.func @transform_5(%arg0: i32) -> (i32, i32, i32) {
    %c0_i32 = arith.constant 0 : i32
    %c0_i32_0 = arith.constant 0 : i32
    %c0_i32_1 = arith.constant 0 : i32
    %c0_i32_2 = arith.constant 0 : i32
    return %c0_i32, %c0_i32_0, %c0_i32_1 : i32, i32, i32
  }
  func.func @transform_6(%arg0: i32) -> (i32, i32, i32) {
    %c0_i32 = arith.constant 0 : i32
    %c0_i32_0 = arith.constant 0 : i32
    %c0_i32_1 = arith.constant 0 : i32
    %c0_i32_2 = arith.constant 0 : i32
    return %c0_i32, %c0_i32_0, %c0_i32_1 : i32, i32, i32
  }
  func.func @transform_7(%arg0: i32) -> (i32, i32) {
    %c0_i32 = arith.constant 0 : i32
    %c0_i32_0 = arith.constant 0 : i32
    %c0_i32_1 = arith.constant 0 : i32
    return %c0_i32, %c0_i32_0 : i32, i32
  }
  func.func @transform_8(%arg0: i32) -> (i32, i32) {
    %c0_i32 = arith.constant 0 : i32
    %c0_i32_0 = arith.constant 0 : i32
    %c0_i32_1 = arith.constant 0 : i32
    return %c0_i32, %c0_i32_0 : i32, i32
  }
  func.func @transform_9(%arg0: i32) -> (i32, i32) {
    %c0_i32 = arith.constant 0 : i32
    %c0_i32_0 = arith.constant 0 : i32
    %c0_i32_1 = arith.constant 0 : i32
    return %c0_i32, %c0_i32_0 : i32, i32
  }
  func.func @transform_10(%arg0: i32) -> (i32, i32, i32) {
    %c0_i32 = arith.constant 0 : i32
    %c0_i32_0 = arith.constant 0 : i32
    %c0_i32_1 = arith.constant 0 : i32
    return %arg0, %c0_i32, %c0_i32_0 : i32, i32, i32
  }
}

</mosaic_0001>

<llo_original>
// kernel: tpu_custom_call.1
$region0: #{tpu_custom_call.1}
  #allocation0 [shape = 'u32[]', space=smem, size = 0x4, offset = 0x4, fixed_abs, tag = 'smem constant byte address 0x4 - core index']
  #allocation1 [shape = 'u32[144,128]{1,0:T(1,128)}', space=vmem, size = 0x12000, scoped, tag = 'internal scratch']
  %s0 = inlined_call_operand.hbm [shape: f32[2,16,32], index: 0, kind: input, shape index: {}]
  %s1 = inlined_call_operand.hbm [shape: f32[2,4,64], index: 1, kind: input, shape index: {}]
  %s2 = inlined_call_operand.hbm [shape: f32[32,64], index: 2, kind: input, shape index: {}]
  %s3 = inlined_call_operand.hbm [shape: f32[32,64], index: 3, kind: input, shape index: {}]
  %s4 = inlined_call_operand.hbm [shape: f32[64,64], index: 4, kind: input, shape index: {}]
  %s5 = inlined_call_operand.vmem [shape: f32[3,64,64], index: 5, kind: input, shape index: {}]
  %s6 = inlined_call_operand.hbm [shape: f32[3,64,64], index: 6, kind: input, shape index: {}]
  %s7 = inlined_call_operand.hbm [shape: f32[64,128], index: 7, kind: input, shape index: {}]
  %s8 = inlined_call_operand.vmem [shape: f32[128,64], index: 8, kind: input, shape index: {}]
  %s9 = inlined_call_operand.vmem [shape: f32[14,128], index: 9, kind: input, shape index: {}]
  %s10 = inlined_call_operand.hbm [shape: f32[2,4,64], index: 10, kind: output, shape index: {}]
  %s11 = sld [smem:[#allocation0]]
  $region78: #{tpu_custom_call.1} parent=0
    _
  %s13 = ssub.s32 1, %s11
  %s14 = scalar_select 0, %s13, %s11
  $region1: #{tpu_custom_call.1} parent=0
    #allocation2 [shape = 'u8[16384]{0}', space=vmem, size = 0x4000, scoped, tag = 'input window, operand 0, single buffered']
    #allocation3 [shape = 's32[1]{0}', space=sflag, size = 0x4, scoped, tag = 'scoped memory for tpu_custom_call.1']
    #allocation4 [shape = 's32[1]{0}', space=sflag, size = 0x4, scoped, tag = 'scoped memory for tpu_custom_call.1']
    #allocation5 [shape = 'u8[4096]{0}', space=vmem, size = 0x1000, scoped, tag = 'input window, operand 1, single buffered']
    #allocation6 [shape = 's32[1]{0}', space=sflag, size = 0x4, scoped, tag = 'scoped memory for tpu_custom_call.1']
    #allocation7 [shape = 'u8[16384]{0}', space=vmem, size = 0x4000, scoped, tag = 'input window, operand 2, single buffered']
    #allocation8 [shape = 'u8[16384]{0}', space=vmem, size = 0x4000, scoped, tag = 'input window, operand 3, single buffered']
    #allocation9 [shape = 's32[1]{0}', space=sflag, size = 0x4, scoped, tag = 'scoped memory for tpu_custom_call.1']
    #allocation10 [shape = 'u8[32768]{0}', space=vmem, size = 0x8000, scoped, tag = 'input window, operand 4, single buffered']
    #allocation11 [shape = 'u8[98304]{0}', space=vmem, size = 0x18000, scoped, tag = 'input window, operand 6, single buffered']
    #allocation12 [shape = 's32[1]{0}', space=sflag, size = 0x4, scoped, tag = 'scoped memory for tpu_custom_call.1']
    #allocation13 [shape = 'u8[32768]{0}', space=vmem, size = 0x8000, scoped, tag = 'input window, operand 7, single buffered']
    #allocation14 [shape = 'u8[4096]{0}', space=vmem, size = 0x1000, scoped, tag = 'output window, operand 0, single buffered']
    %15 = vsyncpa [#allocation3], 0
    %16 = vsyncpa [#allocation6], 0
    %17 = vsyncpa [#allocation9], 0
    %18 = vsyncpa [#allocation12], 0
    %19 = vsyncpa [#allocation4], 0
    // Predicated region
    $region2: #{tpu_custom_call.1} parent=1 // pred_check
      _
    $region3: #{tpu_custom_call.1} parent=1 // pred_check_branch
      %21 = sbr.rel (0) target = $region5
    $region4: #{tpu_custom_call.1} parent=1 // pred_region
      %s23 = ssub.s32 512, 512
      %24 = vsyncadd [#allocation3], %s23
      %s25 = sshll.u32 [#allocation2], 4
      %s26 = int_to_ptr.vmem [resolvable:$true] %s25
      %31 = dma.hbm_to_vmem [thread:$0]  %s0, 512, %s26, [#allocation3], 128, 128, 8
    $region5: #{tpu_custom_call.1} parent=1 // pred_fallthru
      _
    // Predicated region
    $region6: #{tpu_custom_call.1} parent=1 // pred_check
      _
    $region7: #{tpu_custom_call.1} parent=1 // pred_check_branch
      %33 = sbr.rel (0) target = $region9
    $region8: #{tpu_custom_call.1} parent=1 // pred_region
      %s35 = ssub.s32 128, 128
      %36 = vsyncadd [#allocation6], %s35
      %s37 = sshll.u32 [#allocation5], 4
      %s38 = int_to_ptr.vmem [resolvable:$true] %s37
      %43 = dma.hbm_to_vmem [thread:$0]  %s1, 128, %s38, [#allocation6], 64, 64, 4
    $region9: #{tpu_custom_call.1} parent=1 // pred_fallthru
      _
    // Predicated region
    $region10: #{tpu_custom_call.1} parent=1 // pred_check
      _
    $region11: #{tpu_custom_call.1} parent=1 // pred_check_branch
      %45 = sbr.rel (0) target = $region13
    $region12: #{tpu_custom_call.1} parent=1 // pred_region
      %s47 = ssub.s32 512, 512
      %48 = vsyncadd [#allocation6], %s47
      %s49 = sshll.u32 [#allocation7], 4
      %s50 = int_to_ptr.vmem [resolvable:$true] %s49
      %55 = dma.hbm_to_vmem [thread:$0]  %s2, 512, %s50, [#allocation6], 128, 128, 8
    $region13: #{tpu_custom_call.1} parent=1 // pred_fallthru
      _
    // Predicated region
    $region14: #{tpu_custom_call.1} parent=1 // pred_check
      _
    $region15: #{tpu_custom_call.1} parent=1 // pred_check_branch
      %57 = sbr.rel (0) target = $region17
    $region16: #{tpu_custom_call.1} parent=1 // pred_region
      %s59 = ssub.s32 512, 512
      %60 = vsyncadd [#allocation9], %s59
      %s61 = sshll.u32 [#allocation8], 4
      %s62 = int_to_ptr.vmem [resolvable:$true] %s61
      %67 = dma.hbm_to_vmem [thread:$0]  %s3, 512, %s62, [#allocation9], 128, 128, 8
    $region17: #{tpu_custom_call.1} parent=1 // pred_fallthru
      _
    // Predicated region
    $region18: #{tpu_custom_call.1} parent=1 // pred_check
      _
    $region19: #{tpu_custom_call.1} parent=1 // pred_check_branch
      %69 = sbr.rel (0) target = $region21
    $region20: #{tpu_custom_call.1} parent=1 // pred_region
      %s71 = ssub.s32 1024, 1024
      %72 = vsyncadd [#allocation9], %s71
      %s73 = sshll.u32 [#allocation10], 4
      %s74 = int_to_ptr.vmem [resolvable:$true] %s73
      %79 = dma.hbm_to_vmem [thread:$0]  %s4, 1024, %s74, [#allocation9], 128, 128, 8
    $region21: #{tpu_custom_call.1} parent=1 // pred_fallthru
      _
    // Predicated region
    $region22: #{tpu_custom_call.1} parent=1 // pred_check
      _
    $region23: #{tpu_custom_call.1} parent=1 // pred_check_branch
      %81 = sbr.rel (0) target = $region25
    $region24: #{tpu_custom_call.1} parent=1 // pred_region
      _
    $region25: #{tpu_custom_call.1} parent=1 // pred_fallthru
      _
    // Predicated region
    $region26: #{tpu_custom_call.1} parent=1 // pred_check
      _
    $region27: #{tpu_custom_call.1} parent=1 // pred_check_branch
      %83 = sbr.rel (0) target = $region29
    $region28: #{tpu_custom_call.1} parent=1 // pred_region
      %s85 = ssub.s32 3072, 3072
      %86 = vsyncadd [#allocation12], %s85
      %s87 = sshll.u32 [#allocation11], 4
      %s88 = int_to_ptr.vmem [resolvable:$true] %s87
      %93 = dma.hbm_to_vmem [thread:$0]  %s6, 3072, %s88, [#allocation12], 128, 128, 8
    $region29: #{tpu_custom_call.1} parent=1 // pred_fallthru
      _
    // Predicated region
    $region30: #{tpu_custom_call.1} parent=1 // pred_check
      _
    $region31: #{tpu_custom_call.1} parent=1 // pred_check_branch
      %95 = sbr.rel (0) target = $region33
    $region32: #{tpu_custom_call.1} parent=1 // pred_region
      %s97 = ssub.s32 1024, 1024
      %98 = vsyncadd [#allocation12], %s97
      %s99 = sshll.u32 [#allocation13], 4
      %s100 = int_to_ptr.vmem [resolvable:$true] %s99
      %105 = dma.hbm_to_vmem [thread:$0]  %s7, 1024, %s100, [#allocation12], 128, 128, 8
    $region33: #{tpu_custom_call.1} parent=1 // pred_fallthru
      _
    // Predicated region
    $region34: #{tpu_custom_call.1} parent=1 // pred_check
      _
    $region35: #{tpu_custom_call.1} parent=1 // pred_check_branch
      %107 = sbr.rel (0) target = $region37
    $region36: #{tpu_custom_call.1} parent=1 // pred_region
      _
    $region37: #{tpu_custom_call.1} parent=1 // pred_fallthru
      _
    // Predicated region
    $region38: #{tpu_custom_call.1} parent=1 // pred_check
      _
    $region39: #{tpu_custom_call.1} parent=1 // pred_check_branch
      %109 = sbr.rel (0) target = $region41
    $region40: #{tpu_custom_call.1} parent=1 // pred_region
      _
    $region41: #{tpu_custom_call.1} parent=1 // pred_fallthru
      _
    // Predicated region
    $region42: #{tpu_custom_call.1} parent=1 // pred_check
      _
    $region43: #{tpu_custom_call.1} parent=1 // pred_check_branch
      %111 = sbr.rel (0) target = $region45
    $region44: #{tpu_custom_call.1} parent=1 // pred_region
      %112 = dma.done [#allocation3], 512
    $region45: #{tpu_custom_call.1} parent=1 // pred_fallthru
      _
    // Predicated region
    $region46: #{tpu_custom_call.1} parent=1 // pred_check
      _
    $region47: #{tpu_custom_call.1} parent=1 // pred_check_branch
      %114 = sbr.rel (0) target = $region49
    $region48: #{tpu_custom_call.1} parent=1 // pred_region
      %115 = dma.done [#allocation6], 128
    $region49: #{tpu_custom_call.1} parent=1 // pred_fallthru
      _
    // Predicated region
    $region50: #{tpu_custom_call.1} parent=1 // pred_check
      _
    $region51: #{tpu_custom_call.1} parent=1 // pred_check_branch
      %117 = sbr.rel (0) target = $region53
    $region52: #{tpu_custom_call.1} parent=1 // pred_region
      %118 = dma.done [#allocation6], 512
    $region53: #{tpu_custom_call.1} parent=1 // pred_fallthru
      _
    // Predicated region
    $region54: #{tpu_custom_call.1} parent=1 // pred_check
      _
    $region55: #{tpu_custom_call.1} parent=1 // pred_check_branch
      %120 = sbr.rel (0) target = $region57
    $region56: #{tpu_custom_call.1} parent=1 // pred_region
      %121 = dma.done [#allocation9], 512
    $region57: #{tpu_custom_call.1} parent=1 // pred_fallthru
      _
    // Predicated region
    $region58: #{tpu_custom_call.1} parent=1 // pred_check
      _
    $region59: #{tpu_custom_call.1} parent=1 // pred_check_branch
      %123 = sbr.rel (0) target = $region61
    $region60: #{tpu_custom_call.1} parent=1 // pred_region
      %124 = dma.done [#allocation9], 1024
    $region61: #{tpu_custom_call.1} parent=1 // pred_fallthru
      _
    // Predicated region
    $region62: #{tpu_custom_call.1} parent=1 // pred_check
      _
    $region63: #{tpu_custom_call.1} parent=1 // pred_check_branch
      %126 = sbr.rel (0) target = $region65
    $region64: #{tpu_custom_call.1} parent=1 // pred_region
      %127 = dma.done [#allocation12], 3072
    $region65: #{tpu_custom_call.1} parent=1 // pred_fallthru
      _
    // Predicated region
    $region66: #{tpu_custom_call.1} parent=1 // pred_check
      _
    $region67: #{tpu_custom_call.1} parent=1 // pred_check_branch
      %129 = sbr.rel (0) target = $region69
    $region68: #{tpu_custom_call.1} parent=1 // pred_region
      %130 = dma.done [#allocation12], 1024
    $region69: #{tpu_custom_call.1} parent=1 // pred_fallthru
      _
    %v131 = vld [vmem:[#allocation7] sm:$0xff]
    %v132 = vld [vmem:[#allocation7 + $0x8] sm:$0xff]
    %v133 = vld [vmem:[#allocation7 + $0x10] sm:$0xff]
    %v134 = vld [vmem:[#allocation7 + $0x18] sm:$0xff]
    %v135 = vld [vmem:[#allocation8] sm:$0xff]
    %v136 = vld [vmem:[#allocation8 + $0x8] sm:$0xff]
    %v137 = vld [vmem:[#allocation8 + $0x10] sm:$0xff]
    %v138 = vld [vmem:[#allocation8 + $0x18] sm:$0xff]
    %v139 = vld [vmem:[#allocation10] sm:$0xff]
    %v140 = vld [vmem:[#allocation10 + $0x8] sm:$0xff]
    %v141 = vld [vmem:[#allocation10 + $0x10] sm:$0xff]
    %v142 = vld [vmem:[#allocation10 + $0x18] sm:$0xff]
    %v143 = vld [vmem:[#allocation10 + $0x20] sm:$0xff]
    %v144 = vld [vmem:[#allocation10 + $0x28] sm:$0xff]
    %v145 = vld [vmem:[#allocation10 + $0x30] sm:$0xff]
    %v146 = vld [vmem:[#allocation10 + $0x38] sm:$0xff]
    %v147 = vld [vmem:[%s5] sm:$0xff]
    %v148 = vld [vmem:[%s5 + $0x8] sm:$0xff]
    %v149 = vld [vmem:[%s5 + $0x10] sm:$0xff]
    %v150 = vld [vmem:[%s5 + $0x18] sm:$0xff]
    %v151 = vld [vmem:[%s5 + $0x20] sm:$0xff]
    %v152 = vld [vmem:[%s5 + $0x28] sm:$0xff]
    %v153 = vld [vmem:[%s5 + $0x30] sm:$0xff]
    %v154 = vld [vmem:[%s5 + $0x38] sm:$0xff]
    %v155 = vld [vmem:[%s5 + $0x40] sm:$0xff]
    %v156 = vld [vmem:[%s5 + $0x48] sm:$0xff]
    %v157 = vld [vmem:[%s5 + $0x50] sm:$0xff]
    %v158 = vld [vmem:[%s5 + $0x58] sm:$0xff]
    %v159 = vld [vmem:[%s5 + $0x60] sm:$0xff]
    %v160 = vld [vmem:[%s5 + $0x68] sm:$0xff]
    %v161 = vld [vmem:[%s5 + $0x70] sm:$0xff]
    %v162 = vld [vmem:[%s5 + $0x78] sm:$0xff]
    %v163 = vld [vmem:[%s5 + $0x80] sm:$0xff]
    %v164 = vld [vmem:[%s5 + $0x88] sm:$0xff]
    %v165 = vld [vmem:[%s5 + $0x90] sm:$0xff]
    %v166 = vld [vmem:[%s5 + $0x98] sm:$0xff]
    %v167 = vld [vmem:[%s5 + $0xa0] sm:$0xff]
    %v168 = vld [vmem:[%s5 + $0xa8] sm:$0xff]
    %v169 = vld [vmem:[%s5 + $0xb0] sm:$0xff]
    %v170 = vld [vmem:[%s5 + $0xb8] sm:$0xff]
    %v171 = vld [vmem:[#allocation11] sm:$0xff]
    %v172 = vld [vmem:[#allocation11 + $0x8] sm:$0xff]
    %v173 = vld [vmem:[#allocation11 + $0x10] sm:$0xff]
    %v174 = vld [vmem:[#allocation11 + $0x18] sm:$0xff]
    %v175 = vld [vmem:[#allocation11 + $0x20] sm:$0xff]
    %v176 = vld [vmem:[#allocation11 + $0x28] sm:$0xff]
    %v177 = vld [vmem:[#allocation11 + $0x30] sm:$0xff]
    %v178 = vld [vmem:[#allocation11 + $0x38] sm:$0xff]
    %v179 = vld [vmem:[#allocation11 + $0x40] sm:$0xff]
    %v180 = vld [vmem:[#allocation11 + $0x48] sm:$0xff]
    %v181 = vld [vmem:[#allocation11 + $0x50] sm:$0xff]
    %v182 = vld [vmem:[#allocation11 + $0x58] sm:$0xff]
    %v183 = vld [vmem:[#allocation11 + $0x60] sm:$0xff]
    %v184 = vld [vmem:[#allocation11 + $0x68] sm:$0xff]
    %v185 = vld [vmem:[#allocation11 + $0x70] sm:$0xff]
    %v186 = vld [vmem:[#allocation11 + $0x78] sm:$0xff]
    %v187 = vld [vmem:[#allocation11 + $0x80] sm:$0xff]
    %v188 = vld [vmem:[#allocation11 + $0x88] sm:$0xff]
    %v189 = vld [vmem:[#allocation11 + $0x90] sm:$0xff]
    %v190 = vld [vmem:[#allocation11 + $0x98] sm:$0xff]
    %v191 = vld [vmem:[#allocation11 + $0xa0] sm:$0xff]
    %v192 = vld [vmem:[#allocation11 + $0xa8] sm:$0xff]
    %v193 = vld [vmem:[#allocation11 + $0xb0] sm:$0xff]
    %v194 = vld [vmem:[#allocation11 + $0xb8] sm:$0xff]
    %v195 = vld [vmem:[#allocation13] sm:$0xff]
    %v196 = vld [vmem:[#allocation13 + $0x8] sm:$0xff]
    %v197 = vld [vmem:[#allocation13 + $0x10] sm:$0xff]
    %v198 = vld [vmem:[#allocation13 + $0x18] sm:$0xff]
    %v199 = vld [vmem:[#allocation13 + $0x20] sm:$0xff]
    %v200 = vld [vmem:[#allocation13 + $0x28] sm:$0xff]
    %v201 = vld [vmem:[#allocation13 + $0x30] sm:$0xff]
    %v202 = vld [vmem:[#allocation13 + $0x38] sm:$0xff]
    %v203 = vld [vmem:[%s8] sm:$0xff]
    %v204 = vld [vmem:[%s8 + $0x8] sm:$0xff]
    %v205 = vld [vmem:[%s8 + $0x10] sm:$0xff]
    %v206 = vld [vmem:[%s8 + $0x18] sm:$0xff]
    %v207 = vld [vmem:[%s8 + $0x20] sm:$0xff]
    %v208 = vld [vmem:[%s8 + $0x28] sm:$0xff]
    %v209 = vld [vmem:[%s8 + $0x30] sm:$0xff]
    %v210 = vld [vmem:[%s8 + $0x38] sm:$0xff]
    %v211 = vld [vmem:[%s8 + $0x40] sm:$0xff]
    %v212 = vld [vmem:[%s8 + $0x48] sm:$0xff]
    %v213 = vld [vmem:[%s8 + $0x50] sm:$0xff]
    %v214 = vld [vmem:[%s8 + $0x58] sm:$0xff]
    %v215 = vld [vmem:[%s8 + $0x60] sm:$0xff]
    %v216 = vld [vmem:[%s8 + $0x68] sm:$0xff]
    %v217 = vld [vmem:[%s8 + $0x70] sm:$0xff]
    %v218 = vld [vmem:[%s8 + $0x78] sm:$0xff]
    %v219 = vld [vmem:[%s9] sm:$0xff]
    %v220 = vld [vmem:[%s9 + $0x8] sm:$0x3f]
    %v221 = vlaneseq
    %v222 = vshrl.u32 %v221, 7
    %v223 = vsub.s32 2, %v222
    %v224 = vrot.slane %v219, %v223
    %v225 = vlaneseq
    %v226 = vshrl.u32 %v225, 7
    %v227 = vsub.s32 3, %v226
    %v228 = vrot.slane %v219, %v227
    %v229 = vlaneseq
    %v230 = vshrl.u32 %v229, 7
    %v231 = vsub.s32 4, %v230
    %v232 = vrot.slane %v219, %v231
    %v233 = vlaneseq
    %v234 = vshrl.u32 %v233, 7
    %v235 = vsub.s32 5, %v234
    %v236 = vrot.slane %v219, %v235
    %v237 = vlaneseq
    %v238 = vshrl.u32 %v237, 7
    %v239 = vsub.s32 6, %v238
    %v240 = vrot.slane %v219, %v239
    %v241 = vlaneseq
    %v242 = vshrl.u32 %v241, 7
    %v243 = vsub.s32 7, %v242
    %v244 = vrot.slane %v219, %v243
    %v245 = vlaneseq
    %v246 = vshrl.u32 %v245, 7
    %v247 = vsub.s32 0, %v246
    %v248 = vrot.slane %v220, %v247
    %v249 = vlaneseq
    %v250 = vshrl.u32 %v249, 7
    %v251 = vsub.s32 1, %v250
    %v252 = vrot.slane %v220, %v251
    %v253 = vlaneseq
    %v254 = vshrl.u32 %v253, 7
    %v255 = vsub.s32 2, %v254
    %v256 = vrot.slane %v220, %v255
    %v257 = vlaneseq
    %v258 = vshrl.u32 %v257, 7
    %v259 = vsub.s32 3, %v258
    %v260 = vrot.slane %v220, %v259
    %v261 = vlaneseq
    %v262 = vshrl.u32 %v261, 7
    %v263 = vsub.s32 4, %v262
    %v264 = vrot.slane %v220, %v263
    %v265 = vlaneseq
    %v266 = vshrl.u32 %v265, 7
    %v267 = vsub.s32 5, %v266
    %v268 = vrot.slane %v220, %v267
    %v269 = vld [vmem:[#allocation2] sm:$0xff]
    %v270 = vld [vmem:[#allocation2 + $0x8] sm:$0xff]
    %v271 = vld [vmem:[#allocation2 + $0x10] sm:$0xff]
    %v272 = vld [vmem:[#allocation2 + $0x18] sm:$0xff]
    %vm273 = vcmask 261120
    %v274 = vsel %vm273, %v269, 0.0
    %275 = vadd.xlane.f32.xlu0 %v274
    %v276 = vpop.xlane.xlu0 %275
    %v277 = vsel %vm273, %v270, 0.0
    %278 = vadd.xlane.f32.xlu0 %v277
    %v279 = vpop.xlane.xlu0 %278
    %v280 = vsel %vm273, %v271, 0.0
    %281 = vadd.xlane.f32.xlu0 %v280
    %v282 = vpop.xlane.xlu0 %281
    %v283 = vsel %vm273, %v272, 0.0
    %284 = vadd.xlane.f32.xlu0 %v283
    %v285 = vpop.xlane.xlu0 %284
    %v286 = vrcp.pop 32.0
    %v287 = vmul.f32 %v276, %v286
    %v288 = vmul.f32 %v279, %v286
    %v289 = vmul.f32 %v282, %v286
    %v290 = vmul.f32 %v285, %v286
    %v291 = vsub.f32 %v269, %v287
    %v292 = vsub.f32 %v270, %v288
    %v293 = vsub.f32 %v271, %v289
    %v294 = vsub.f32 %v272, %v290
    %v295 = vmul.f32 %v291, %v291
    %v296 = vmul.f32 %v292, %v292
    %v297 = vmul.f32 %v293, %v293
    %v298 = vmul.f32 %v294, %v294
    %v299 = vsel %vm273, %v295, 0.0
    %300 = vadd.xlane.f32.xlu0 %v299
    %v301 = vpop.xlane.xlu0 %300
    %v302 = vsel %vm273, %v296, 0.0
    %303 = vadd.xlane.f32.xlu0 %v302
    %v304 = vpop.xlane.xlu0 %303
    %v305 = vsel %vm273, %v297, 0.0
    %306 = vadd.xlane.f32.xlu0 %v305
    %v307 = vpop.xlane.xlu0 %306
    %v308 = vsel %vm273, %v298, 0.0
    %309 = vadd.xlane.f32.xlu0 %v308
    %v310 = vpop.xlane.xlu0 %309
    %v311 = vmul.f32 %v301, %v286
    %v312 = vmul.f32 %v304, %v286
    %v313 = vmul.f32 %v307, %v286
    %v314 = vmul.f32 %v310, %v286
    %v315 = vadd.f32 %v311, 1e-05
    %v316 = vadd.f32 %v312, 1e-05
    %v317 = vadd.f32 %v313, 1e-05
    %v318 = vadd.f32 %v314, 1e-05
    %v319 = vrsqrt.pop %v315
    %v320 = vrsqrt.pop %v316
    %v321 = vrsqrt.pop %v317
    %v322 = vrsqrt.pop %v318
    %v323 = vmul.f32 %v291, %v319
    %v324 = vmul.f32 %v292, %v320
    %v325 = vmul.f32 %v293, %v321
    %v326 = vmul.f32 %v294, %v322
    %v327 = vlaneseq
    %v328 = vshrl.u32 %v327, 7
    %v329 = vsub.s32 0, %v328
    %v330 = vrot.slane %v219, %v329
    %v331 = vmul.f32 %v323, %v330
    %v332 = vmul.f32 %v324, %v330
    %v333 = vmul.f32 %v325, %v330
    %v334 = vmul.f32 %v326, %v330
    %v335 = vlaneseq
    %v336 = vshrl.u32 %v335, 7
    %v337 = vsub.s32 1, %v336
    %v338 = vrot.slane %v219, %v337
    %v339 = vadd.f32 %v331, %v338
    %v340 = vadd.f32 %v332, %v338
    %v341 = vadd.f32 %v333, %v338
    %v342 = vadd.f32 %v334, %v338
    %v344 = vsel %vm273, %v339, 0
    %v347 = vsel %vm273, %v340, 0
    %v350 = vsel %vm273, %v341, 0
    %v353 = vsel %vm273, %v342, 0
    %355 = vmatprep.subr.mxu0 0.0
    %356 = vmatpush1.msra.mxu0 %v131
    %357 = vmatprep.subr.mxu0 0.0
    %358 = vmatpush1.msra.mxu0 %v132
    %359 = vmatprep.subr.mxu0 0.0
    %360 = vmatpush1.msra.mxu0 %v133
    %361 = vmatprep.subr.mxu0 0.0
    %362 = vmatpush1.msra.mxu0 %v134
    %363 = vmatprep.subr.mxu0 0.0
    %364 = vmatpush1.msra.mxu0 0.0
    %365 = vmatprep.subr.mxu0 0.0
    %366 = vmatpush1.msra.mxu0 0.0
    %367 = vmatprep.subr.mxu0 0.0
    %368 = vmatpush1.msra.mxu0 0.0
    %369 = vmatprep.subr.mxu0 0.0
    %370 = vmatpush1.msra.mxu0 0.0
    %371 = vmatprep.subr.mxu0 0.0
    %372 = vmatpush1.msra.mxu0 0.0
    %373 = vmatprep.subr.mxu0 0.0
    %374 = vmatpush1.msra.mxu0 0.0
    %375 = vmatprep.subr.mxu0 0.0
    %376 = vmatpush1.msra.mxu0 0.0
    %377 = vmatprep.subr.mxu0 0.0
    %378 = vmatpush1.msra.mxu0 0.0
    %379 = vmatprep.subr.mxu0 0.0
    %380 = vmatpush1.msra.mxu0 0.0
    %381 = vmatprep.subr.mxu0 0.0
    %382 = vmatpush1.msra.mxu0 0.0
    %383 = vmatprep.subr.mxu0 0.0
    %384 = vmatpush1.msra.mxu0 0.0
    %385 = vmatprep.subr.mxu0 0.0
    %386 = vmatpush1.msra.mxu0 0.0
    %387 = vmatprep.subr.mxu0 0.0
    %388 = vmatpush1.msra.mxu0 0.0
    %389 = vmatprep.subr.mxu0 0.0
    %390 = vmatpush1.msra.mxu0 0.0
    %391 = vmatprep.subr.mxu0 0.0
    %392 = vmatpush1.msra.mxu0 0.0
    %393 = vmatprep.subr.mxu0 0.0
    %394 = vmatpush1.msra.mxu0 0.0
    %395 = vmatprep.subr.mxu0 0.0
    %396 = vmatpush1.msra.mxu0 0.0
    %397 = vmatprep.subr.mxu0 0.0
    %398 = vmatpush1.msra.mxu0 0.0
    %399 = vmatprep.subr.mxu0 0.0
    %400 = vmatpush1.msra.mxu0 0.0
    %401 = vmatprep.subr.mxu0 0.0
    %402 = vmatpush1.msra.mxu0 0.0
    %403 = vmatprep.subr.mxu0 0.0
    %404 = vmatpush1.msra.mxu0 0.0
    %405 = vmatprep.subr.mxu0 0.0
    %406 = vmatpush1.msra.mxu0 0.0
    %407 = vmatprep.subr.mxu0 0.0
    %408 = vmatpush1.msra.mxu0 0.0
    %409 = vmatprep.subr.mxu0 0.0
    %410 = vmatpush1.msra.mxu0 0.0
    %411 = vmatprep.subr.mxu0 0.0
    %412 = vmatpush1.msra.mxu0 0.0
    %413 = vmatprep.subr.mxu0 0.0
    %414 = vmatpush1.msra.mxu0 0.0
    %415 = vmatprep.subr.mxu0 0.0
    %416 = vmatpush1.msra.mxu0 0.0
    %417 = vmatprep.subr.mxu0 0.0
    %418 = vmatpush1.msra.mxu0 0.0
    %419 = vmatprep.mubr.f32.mxu0 0.0
    %420 = vmatmul.mubr.f32.gmra.mrb[0].mxu0 %v344
    %v421 = vpop.f32.mrb[0].mxu0
    %v422 = vadd.f32 0.0, %v421
    %v423 = vpop.f32.mrb[0].mxu0
    %424 = vmatprep.mubr.f32.mxu0 0.0
    %425 = vmatmul.mubr.f32.gmra.mrb[0].mxu0 %v347
    %v426 = vpop.f32.mrb[0].mxu0
    %v427 = vadd.f32 0.0, %v426
    %v428 = vpop.f32.mrb[0].mxu0
    %429 = vmatprep.mubr.f32.mxu0 0.0
    %430 = vmatmul.mubr.f32.gmra.mrb[0].mxu0 %v350
    %v431 = vpop.f32.mrb[0].mxu0
    %v432 = vadd.f32 0.0, %v431
    %v433 = vpop.f32.mrb[0].mxu0
    %434 = vmatprep.mubr.f32.mxu0 0.0
    %435 = vmatmul.mubr.f32.gmra.mrb[0].mxu0 %v353
    %v436 = vpop.f32.mrb[0].mxu0
    %v437 = vadd.f32 0.0, %v436
    %v438 = vpop.f32.mrb[0].mxu0
    %439 = vdwg.mxu0
    %440 = vmatprep.subr.mxu0 0.0
    %441 = vmatpush1.msra.mxu0 %v135
    %442 = vmatprep.subr.mxu0 0.0
    %443 = vmatpush1.msra.mxu0 %v136
    %444 = vmatprep.subr.mxu0 0.0
    %445 = vmatpush1.msra.mxu0 %v137
    %446 = vmatprep.subr.mxu0 0.0
    %447 = vmatpush1.msra.mxu0 %v138
    %448 = vmatprep.subr.mxu0 0.0
    %449 = vmatpush1.msra.mxu0 0.0
    %450 = vmatprep.subr.mxu0 0.0
    %451 = vmatpush1.msra.mxu0 0.0
    %452 = vmatprep.subr.mxu0 0.0
    %453 = vmatpush1.msra.mxu0 0.0
    %454 = vmatprep.subr.mxu0 0.0
    %455 = vmatpush1.msra.mxu0 0.0
    %456 = vmatprep.subr.mxu0 0.0
    %457 = vmatpush1.msra.mxu0 0.0
    %458 = vmatprep.subr.mxu0 0.0
    %459 = vmatpush1.msra.mxu0 0.0
    %460 = vmatprep.subr.mxu0 0.0
    %461 = vmatpush1.msra.mxu0 0.0
    %462 = vmatprep.subr.mxu0 0.0
    %463 = vmatpush1.msra.mxu0 0.0
    %464 = vmatprep.subr.mxu0 0.0
    %465 = vmatpush1.msra.mxu0 0.0
    %466 = vmatprep.subr.mxu0 0.0
    %467 = vmatpush1.msra.mxu0 0.0
    %468 = vmatprep.subr.mxu0 0.0
    %469 = vmatpush1.msra.mxu0 0.0
    %470 = vmatprep.subr.mxu0 0.0
    %471 = vmatpush1.msra.mxu0 0.0
    %472 = vmatprep.subr.mxu0 0.0
    %473 = vmatpush1.msra.mxu0 0.0
    %474 = vmatprep.subr.mxu0 0.0
    %475 = vmatpush1.msra.mxu0 0.0
    %476 = vmatprep.subr.mxu0 0.0
    %477 = vmatpush1.msra.mxu0 0.0
    %478 = vmatprep.subr.mxu0 0.0
    %479 = vmatpush1.msra.mxu0 0.0
    %480 = vmatprep.subr.mxu0 0.0
    %481 = vmatpush1.msra.mxu0 0.0
    %482 = vmatprep.subr.mxu0 0.0
    %483 = vmatpush1.msra.mxu0 0.0
    %484 = vmatprep.subr.mxu0 0.0
    %485 = vmatpush1.msra.mxu0 0.0
    %486 = vmatprep.subr.mxu0 0.0
    %487 = vmatpush1.msra.mxu0 0.0
    %488 = vmatprep.subr.mxu0 0.0
    %489 = vmatpush1.msra.mxu0 0.0
    %490 = vmatprep.subr.mxu0 0.0
    %491 = vmatpush1.msra.mxu0 0.0
    %492 = vmatprep.subr.mxu0 0.0
    %493 = vmatpush1.msra.mxu0 0.0
    %494 = vmatprep.subr.mxu0 0.0
    %495 = vmatpush1.msra.mxu0 0.0
    %496 = vmatprep.subr.mxu0 0.0
    %497 = vmatpush1.msra.mxu0 0.0
    %498 = vmatprep.subr.mxu0 0.0
    %499 = vmatpush1.msra.mxu0 0.0
    %500 = vmatprep.subr.mxu0 0.0
    %501 = vmatpush1.msra.mxu0 0.0
    %502 = vmatprep.subr.mxu0 0.0
    %503 = vmatpush1.msra.mxu0 0.0
    %504 = vmatprep.mubr.f32.mxu0 0.0
    %505 = vmatmul.mubr.f32.gmra.mrb[0].mxu0 %v344
    %v506 = vpop.f32.mrb[0].mxu0
    %v507 = vadd.f32 0.0, %v506
    %v508 = vpop.f32.mrb[0].mxu0
    %509 = vmatprep.mubr.f32.mxu0 0.0
    %510 = vmatmul.mubr.f32.gmra.mrb[0].mxu0 %v347
    %v511 = vpop.f32.mrb[0].mxu0
    %v512 = vadd.f32 0.0, %v511
    %v513 = vpop.f32.mrb[0].mxu0
    %514 = vmatprep.mubr.f32.mxu0 0.0
    %515 = vmatmul.mubr.f32.gmra.mrb[0].mxu0 %v350
    %v516 = vpop.f32.mrb[0].mxu0
    %v517 = vadd.f32 0.0, %v516
    %v518 = vpop.f32.mrb[0].mxu0
    %519 = vmatprep.mubr.f32.mxu0 0.0
    %520 = vmatmul.mubr.f32.gmra.mrb[0].mxu0 %v353
    %v521 = vpop.f32.mrb[0].mxu0
    %v522 = vadd.f32 0.0, %v521
    %v523 = vpop.f32.mrb[0].mxu0
    %524 = vdwg.mxu0
    %v525 = vld [vmem:[#allocation5] sm:$0xf]
    %v526 = vld [vmem:[#allocation5 + $0x4] sm:$0xf]
    %v529 = vcombine.low %v525, %v526
    %vm531 = vcmask 523264
    %v532 = vsel %vm531, %v529, 0.0
    %533 = vadd.xlane.f32.xlu0 %v532
    %v534 = vpop.xlane.xlu0 %533
    %v535 = vrcp.pop 64.0
    %v536 = vmul.f32 %v534, %v535
    %v539 = vunpack.c.l.s4 839922192
    %v540 = vunpack.c.0.s8 %v539
    %v541 = vlaneseq
    %v542 = vshrl.u32 %v541, 7
    %v543 = vsub.s32 %v540, %v542
    %v544 = vrot.slane %v536, %v543
    %v546 = vunpack.c.l.s4 1985246804
    %v547 = vunpack.c.0.s8 %v546
    %v548 = vlaneseq
    %v549 = vshrl.u32 %v548, 7
    %v550 = vsub.s32 %v547, %v549
    %v551 = vrot.slane %v536, %v550
    %v554 = vsub.f32 %v525, %v544
    %v555 = vsub.f32 %v526, %v551
    %v556 = vmul.f32 %v554, %v554
    %v557 = vmul.f32 %v555, %v555
    %v560 = vcombine.low %v556, %v557
    %v562 = vsel %vm531, %v560, 0.0
    %563 = vadd.xlane.f32.xlu0 %v562
    %v564 = vpop.xlane.xlu0 %563
    %v565 = vmul.f32 %v564, %v535
    %v566 = vadd.f32 %v565, 1e-05
    %v567 = vrsqrt.pop %v566
    %v570 = vunpack.c.l.s4 839922192
    %v571 = vunpack.c.0.s8 %v570
    %v572 = vlaneseq
    %v573 = vshrl.u32 %v572, 7
    %v574 = vsub.s32 %v571, %v573
    %v575 = vrot.slane %v567, %v574
    %v577 = vunpack.c.l.s4 1985246804
    %v578 = vunpack.c.0.s8 %v577
    %v579 = vlaneseq
    %v580 = vshrl.u32 %v579, 7
    %v581 = vsub.s32 %v578, %v580
    %v582 = vrot.slane %v567, %v581
    %v585 = vmul.f32 %v554, %v575
    %v586 = vmul.f32 %v555, %v582
    %v588 = vcombine.high %v224, %v224
    %v590 = vmul.f32 %v585, %v224
    %v591 = vmul.f32 %v586, %v588
    %v593 = vcombine.high %v228, %v228
    %v595 = vadd.f32 %v590, %v228
    %v596 = vadd.f32 %v591, %v593
    %v599 = vcombine.low %v595, %v596
    %v600 = vsel %vm531, %v599, 0
    %602 = vmatprep.subr.mxu0 0.0
    %603 = vmatpush1.msra.mxu0 %v139
    %604 = vmatprep.subr.mxu0 0.0
    %605 = vmatpush1.msra.mxu0 %v140
    %606 = vmatprep.subr.mxu0 0.0
    %607 = vmatpush1.msra.mxu0 %v141
    %608 = vmatprep.subr.mxu0 0.0
    %609 = vmatpush1.msra.mxu0 %v142
    %610 = vmatprep.subr.mxu0 0.0
    %611 = vmatpush1.msra.mxu0 %v143
    %612 = vmatprep.subr.mxu0 0.0
    %613 = vmatpush1.msra.mxu0 %v144
    %614 = vmatprep.subr.mxu0 0.0
    %615 = vmatpush1.msra.mxu0 %v145
    %616 = vmatprep.subr.mxu0 0.0
    %617 = vmatpush1.msra.mxu0 %v146
    %618 = vmatprep.subr.mxu0 0.0
    %619 = vmatpush1.msra.mxu0 0.0
    %620 = vmatprep.subr.mxu0 0.0
    %621 = vmatpush1.msra.mxu0 0.0
    %622 = vmatprep.subr.mxu0 0.0
    %623 = vmatpush1.msra.mxu0 0.0
    %624 = vmatprep.subr.mxu0 0.0
    %625 = vmatpush1.msra.mxu0 0.0
    %626 = vmatprep.subr.mxu0 0.0
    %627 = vmatpush1.msra.mxu0 0.0
    %628 = vmatprep.subr.mxu0 0.0
    %629 = vmatpush1.msra.mxu0 0.0
    %630 = vmatprep.subr.mxu0 0.0
    %631 = vmatpush1.msra.mxu0 0.0
    %632 = vmatprep.subr.mxu0 0.0
    %633 = vmatpush1.msra.mxu0 0.0
    %634 = vmatprep.subr.mxu0 0.0
    %635 = vmatpush1.msra.mxu0 0.0
    %636 = vmatprep.subr.mxu0 0.0
    %637 = vmatpush1.msra.mxu0 0.0
    %638 = vmatprep.subr.mxu0 0.0
    %639 = vmatpush1.msra.mxu0 0.0
    %640 = vmatprep.subr.mxu0 0.0
    %641 = vmatpush1.msra.mxu0 0.0
    %642 = vmatprep.subr.mxu0 0.0
    %643 = vmatpush1.msra.mxu0 0.0
    %644 = vmatprep.subr.mxu0 0.0
    %645 = vmatpush1.msra.mxu0 0.0
    %646 = vmatprep.subr.mxu0 0.0
    %647 = vmatpush1.msra.mxu0 0.0
    %648 = vmatprep.subr.mxu0 0.0
    %649 = vmatpush1.msra.mxu0 0.0
    %650 = vmatprep.subr.mxu0 0.0
    %651 = vmatpush1.msra.mxu0 0.0
    %652 = vmatprep.subr.mxu0 0.0
    %653 = vmatpush1.msra.mxu0 0.0
    %654 = vmatprep.subr.mxu0 0.0
    %655 = vmatpush1.msra.mxu0 0.0
    %656 = vmatprep.subr.mxu0 0.0
    %657 = vmatpush1.msra.mxu0 0.0
    %658 = vmatprep.subr.mxu0 0.0
    %659 = vmatpush1.msra.mxu0 0.0
    %660 = vmatprep.subr.mxu0 0.0
    %661 = vmatpush1.msra.mxu0 0.0
    %662 = vmatprep.subr.mxu0 0.0
    %663 = vmatpush1.msra.mxu0 0.0
    %664 = vmatprep.subr.mxu0 0.0
    %665 = vmatpush1.msra.mxu0 0.0
    %666 = vmatprep.mubr.f32.mxu0 0.0
    %667 = vmatmul.mubr.f32.gmra.mrb[0].mxu0 %v600
    %v668 = vpop.f32.mrb[0].mxu0
    %v669 = vadd.f32 0.0, %v668
    %v670 = vpop.f32.mrb[0].mxu0
    %671 = vdwg.mxu0
    %v672 = vmul.f32 %v669, 0.125
    %v674 = vcombine.high %v672, %v672
    %v675 = vsel %vm531, %v672, 0
    %v678 = vsel %vm531, %v422, 0
    %v681 = vsel %vm531, %v427, 0
    %683 = vmatprep.subr.mxu0 0.0
    %684 = vmatpush1.xpose.msra.mxu0 %v678
    %685 = vmatprep.subr.mxu0 0.0
    %686 = vmatpush1.xpose.msra.mxu0 %v681
    %687 = vmatprep.subr.mxu0 0.0
    %688 = vmatpush1.xpose.msra.mxu0 0.0
    %689 = vmatprep.subr.mxu0 0.0
    %690 = vmatpush1.xpose.msra.mxu0 0.0
    %691 = vmatprep.subr.mxu0 0.0
    %692 = vmatpush1.xpose.msra.mxu0 0.0
    %693 = vmatprep.subr.mxu0 0.0
    %694 = vmatpush1.xpose.msra.mxu0 0.0
    %695 = vmatprep.subr.mxu0 0.0
    %696 = vmatpush1.xpose.msra.mxu0 0.0
    %697 = vmatprep.subr.mxu0 0.0
    %698 = vmatpush1.xpose.msra.mxu0 0.0
    %699 = vmatprep.subr.mxu0 0.0
    %700 = vmatpush1.xpose.msra.mxu0 0.0
    %701 = vmatprep.subr.mxu0 0.0
    %702 = vmatpush1.xpose.msra.mxu0 0.0
    %703 = vmatprep.subr.mxu0 0.0
    %704 = vmatpush1.xpose.msra.mxu0 0.0
    %705 = vmatprep.subr.mxu0 0.0
    %706 = vmatpush1.xpose.msra.mxu0 0.0
    %707 = vmatprep.subr.mxu0 0.0
    %708 = vmatpush1.xpose.msra.mxu0 0.0
    %709 = vmatprep.subr.mxu0 0.0
    %710 = vmatpush1.xpose.msra.mxu0 0.0
    %711 = vmatprep.subr.mxu0 0.0
    %712 = vmatpush1.xpose.msra.mxu0 0.0
    %713 = vmatprep.subr.mxu0 0.0
    %714 = vmatpush1.xpose.msra.mxu0 0.0
    %715 = vmatprep.subr.mxu0 0.0
    %716 = vmatpush1.xpose.msra.mxu0 0.0
    %717 = vmatprep.subr.mxu0 0.0
    %718 = vmatpush1.xpose.msra.mxu0 0.0
    %719 = vmatprep.subr.mxu0 0.0
    %720 = vmatpush1.xpose.msra.mxu0 0.0
    %721 = vmatprep.subr.mxu0 0.0
    %722 = vmatpush1.xpose.msra.mxu0 0.0
    %723 = vmatprep.subr.mxu0 0.0
    %724 = vmatpush1.xpose.msra.mxu0 0.0
    %725 = vmatprep.subr.mxu0 0.0
    %726 = vmatpush1.xpose.msra.mxu0 0.0
    %727 = vmatprep.subr.mxu0 0.0
    %728 = vmatpush1.xpose.msra.mxu0 0.0
    %729 = vmatprep.subr.mxu0 0.0
    %730 = vmatpush1.xpose.msra.mxu0 0.0
    %731 = vmatprep.subr.mxu0 0.0
    %732 = vmatpush1.xpose.msra.mxu0 0.0
    %733 = vmatprep.subr.mxu0 0.0
    %734 = vmatpush1.xpose.msra.mxu0 0.0
    %735 = vmatprep.subr.mxu0 0.0
    %736 = vmatpush1.xpose.msra.mxu0 0.0
    %737 = vmatprep.subr.mxu0 0.0
    %738 = vmatpush1.xpose.msra.mxu0 0.0
    %739 = vmatprep.subr.mxu0 0.0
    %740 = vmatpush1.xpose.msra.mxu0 0.0
    %741 = vmatprep.subr.mxu0 0.0
    %742 = vmatpush1.xpose.msra.mxu0 0.0
    %743 = vmatprep.subr.mxu0 0.0
    %744 = vmatpush1.xpose.msra.mxu0 0.0
    %745 = vmatprep.subr.mxu0 0.0
    %746 = vmatpush1.xpose.msra.mxu0 0.0
    %747 = vmatprep.mubr.f32.mxu0 0.0
    %748 = vmatmul.mubr.f32.gmra.mrb[0].mxu0 %v675
    %v749 = vpop.f32.mrb[0].mxu0
    %v750 = vadd.f32 0.0, %v749
    %v751 = vpop.f32.mrb[0].mxu0
    %752 = vdwg.mxu0
    %v753 = vsel %vm531, %v674, 0
    %v756 = vsel %vm531, %v432, 0
    %v759 = vsel %vm531, %v437, 0
    %761 = vmatprep.subr.mxu0 0.0
    %762 = vmatpush1.xpose.msra.mxu0 %v756
    %763 = vmatprep.subr.mxu0 0.0
    %764 = vmatpush1.xpose.msra.mxu0 %v759
    %765 = vmatprep.subr.mxu0 0.0
    %766 = vmatpush1.xpose.msra.mxu0 0.0
    %767 = vmatprep.subr.mxu0 0.0
    %768 = vmatpush1.xpose.msra.mxu0 0.0
    %769 = vmatprep.subr.mxu0 0.0
    %770 = vmatpush1.xpose.msra.mxu0 0.0
    %771 = vmatprep.subr.mxu0 0.0
    %772 = vmatpush1.xpose.msra.mxu0 0.0
    %773 = vmatprep.subr.mxu0 0.0
    %774 = vmatpush1.xpose.msra.mxu0 0.0
    %775 = vmatprep.subr.mxu0 0.0
    %776 = vmatpush1.xpose.msra.mxu0 0.0
    %777 = vmatprep.subr.mxu0 0.0
    %778 = vmatpush1.xpose.msra.mxu0 0.0
    %779 = vmatprep.subr.mxu0 0.0
    %780 = vmatpush1.xpose.msra.mxu0 0.0
    %781 = vmatprep.subr.mxu0 0.0
    %782 = vmatpush1.xpose.msra.mxu0 0.0
    %783 = vmatprep.subr.mxu0 0.0
    %784 = vmatpush1.xpose.msra.mxu0 0.0
    %785 = vmatprep.subr.mxu0 0.0
    %786 = vmatpush1.xpose.msra.mxu0 0.0
    %787 = vmatprep.subr.mxu0 0.0
    %788 = vmatpush1.xpose.msra.mxu0 0.0
    %789 = vmatprep.subr.mxu0 0.0
    %790 = vmatpush1.xpose.msra.mxu0 0.0
    %791 = vmatprep.subr.mxu0 0.0
    %792 = vmatpush1.xpose.msra.mxu0 0.0
    %793 = vmatprep.subr.mxu0 0.0
    %794 = vmatpush1.xpose.msra.mxu0 0.0
    %795 = vmatprep.subr.mxu0 0.0
    %796 = vmatpush1.xpose.msra.mxu0 0.0
    %797 = vmatprep.subr.mxu0 0.0
    %798 = vmatpush1.xpose.msra.mxu0 0.0
    %799 = vmatprep.subr.mxu0 0.0
    %800 = vmatpush1.xpose.msra.mxu0 0.0
    %801 = vmatprep.subr.mxu0 0.0
    %802 = vmatpush1.xpose.msra.mxu0 0.0
    %803 = vmatprep.subr.mxu0 0.0
    %804 = vmatpush1.xpose.msra.mxu0 0.0
    %805 = vmatprep.subr.mxu0 0.0
    %806 = vmatpush1.xpose.msra.mxu0 0.0
    %807 = vmatprep.subr.mxu0 0.0
    %808 = vmatpush1.xpose.msra.mxu0 0.0
    %809 = vmatprep.subr.mxu0 0.0
    %810 = vmatpush1.xpose.msra.mxu0 0.0
    %811 = vmatprep.subr.mxu0 0.0
    %812 = vmatpush1.xpose.msra.mxu0 0.0
    %813 = vmatprep.subr.mxu0 0.0
    %814 = vmatpush1.xpose.msra.mxu0 0.0
    %815 = vmatprep.subr.mxu0 0.0
    %816 = vmatpush1.xpose.msra.mxu0 0.0
    %817 = vmatprep.subr.mxu0 0.0
    %818 = vmatpush1.xpose.msra.mxu0 0.0
    %819 = vmatprep.subr.mxu0 0.0
    %820 = vmatpush1.xpose.msra.mxu0 0.0
    %821 = vmatprep.subr.mxu0 0.0
    %822 = vmatpush1.xpose.msra.mxu0 0.0
    %823 = vmatprep.subr.mxu0 0.0
    %824 = vmatpush1.xpose.msra.mxu0 0.0
    %825 = vmatprep.mubr.f32.mxu0 0.0
    %826 = vmatmul.mubr.f32.gmra.mrb[0].mxu0 %v753
    %v827 = vpop.f32.mrb[0].mxu0
    %v828 = vadd.f32 0.0, %v827
    %v829 = vpop.f32.mrb[0].mxu0
    %830 = vdwg.mxu0
    %vm831 = vcmask 125952
    %v832 = vsel %vm831, %v750, -inf
    %v833 = vrot.slane %v832, 4
    %v834 = vmax.f32 %v832, %v833
    %v835 = vrot.slane %v834, 2
    %v836 = vmax.f32 %v834, %v835
    %v837 = vrot.slane %v836, 1
    %v838 = vmax.f32 %v836, %v837
    %v839 = vsel %vm831, %v828, -inf
    %v840 = vrot.slane %v839, 4
    %v841 = vmax.f32 %v839, %v840
    %v842 = vrot.slane %v841, 2
    %v843 = vmax.f32 %v841, %v842
    %v844 = vrot.slane %v843, 1
    %v845 = vmax.f32 %v843, %v844
    %v846 = vsub.f32 %v750, %v838
    %v847 = vsub.f32 %v828, %v845
    %v848 = vmul.f32 %v846, 1.442695
    %v849 = vpow.pop %v848
    %v850 = vmul.f32 %v847, 1.442695
    %v851 = vpow.pop %v850
    %v852 = vsel %vm831, %v849, 0.0
    %v853 = vrot.slane %v852, 4
    %v854 = vadd.f32 %v852, %v853
    %v855 = vrot.slane %v854, 2
    %v856 = vadd.f32 %v854, %v855
    %v857 = vrot.slane %v856, 1
    %v858 = vadd.f32 %v856, %v857
    %v859 = vsel %vm831, %v851, 0.0
    %v860 = vrot.slane %v859, 4
    %v861 = vadd.f32 %v859, %v860
    %v862 = vrot.slane %v861, 2
    %v863 = vadd.f32 %v861, %v862
    %v864 = vrot.slane %v863, 1
    %v865 = vadd.f32 %v863, %v864
    %v866 = vrcp.pop %v858
    %v867 = vrcp.pop %v865
    %v868 = vmul.f32 %v849, %v866
    %v869 = vmul.f32 %v851, %v867
    %v870 = vadd.f32 %v868, 1e-08
    %v871 = vadd.f32 %v869, 1e-08
    %v872 = vsel %vm831, %v870, 0.0
    %873 = vadd.xlane.f32.xlu0 %v872
    %v874 = vpop.xlane.xlu0 %873
    %v875 = vsel %vm831, %v871, 0.0
    %876 = vadd.xlane.f32.xlu0 %v875
    %v877 = vpop.xlane.xlu0 %876
    %v878 = vrcp.pop %v874
    %v879 = vrcp.pop %v877
    %v880 = vmul.f32 %v870, %v878
    %v881 = vmul.f32 %v871, %v879
    %vm882 = vcmask 130048
    %v884 = vsel %vm882, %v880, 0
    %886 = vmatprep.subr.mxu0 0.0
    %887 = vmatpush1.msra.mxu0 %v507
    %888 = vmatprep.subr.mxu0 0.0
    %889 = vmatpush1.msra.mxu0 %v512
    %890 = vmatprep.subr.mxu0 0.0
    %891 = vmatpush1.msra.mxu0 0.0
    %892 = vmatprep.subr.mxu0 0.0
    %893 = vmatpush1.msra.mxu0 0.0
    %894 = vmatprep.subr.mxu0 0.0
    %895 = vmatpush1.msra.mxu0 0.0
    %896 = vmatprep.subr.mxu0 0.0
    %897 = vmatpush1.msra.mxu0 0.0
    %898 = vmatprep.subr.mxu0 0.0
    %899 = vmatpush1.msra.mxu0 0.0
    %900 = vmatprep.subr.mxu0 0.0
    %901 = vmatpush1.msra.mxu0 0.0
    %902 = vmatprep.subr.mxu0 0.0
    %903 = vmatpush1.msra.mxu0 0.0
    %904 = vmatprep.subr.mxu0 0.0
    %905 = vmatpush1.msra.mxu0 0.0
    %906 = vmatprep.subr.mxu0 0.0
    %907 = vmatpush1.msra.mxu0 0.0
    %908 = vmatprep.subr.mxu0 0.0
    %909 = vmatpush1.msra.mxu0 0.0
    %910 = vmatprep.subr.mxu0 0.0
    %911 = vmatpush1.msra.mxu0 0.0
    %912 = vmatprep.subr.mxu0 0.0
    %913 = vmatpush1.msra.mxu0 0.0
    %914 = vmatprep.subr.mxu0 0.0
    %915 = vmatpush1.msra.mxu0 0.0
    %916 = vmatprep.subr.mxu0 0.0
    %917 = vmatpush1.msra.mxu0 0.0
    %918 = vmatprep.subr.mxu0 0.0
    %919 = vmatpush1.msra.mxu0 0.0
    %920 = vmatprep.subr.mxu0 0.0
    %921 = vmatpush1.msra.mxu0 0.0
    %922 = vmatprep.subr.mxu0 0.0
    %923 = vmatpush1.msra.mxu0 0.0
    %924 = vmatprep.subr.mxu0 0.0
    %925 = vmatpush1.msra.mxu0 0.0
    %926 = vmatprep.subr.mxu0 0.0
    %927 = vmatpush1.msra.mxu0 0.0
    %928 = vmatprep.subr.mxu0 0.0
    %929 = vmatpush1.msra.mxu0 0.0
    %930 = vmatprep.subr.mxu0 0.0
    %931 = vmatpush1.msra.mxu0 0.0
    %932 = vmatprep.subr.mxu0 0.0
    %933 = vmatpush1.msra.mxu0 0.0
    %934 = vmatprep.subr.mxu0 0.0
    %935 = vmatpush1.msra.mxu0 0.0
    %936 = vmatprep.subr.mxu0 0.0
    %937 = vmatpush1.msra.mxu0 0.0
    %938 = vmatprep.subr.mxu0 0.0
    %939 = vmatpush1.msra.mxu0 0.0
    %940 = vmatprep.subr.mxu0 0.0
    %941 = vmatpush1.msra.mxu0 0.0
    %942 = vmatprep.subr.mxu0 0.0
    %943 = vmatpush1.msra.mxu0 0.0
    %944 = vmatprep.subr.mxu0 0.0
    %945 = vmatpush1.msra.mxu0 0.0
    %946 = vmatprep.subr.mxu0 0.0
    %947 = vmatpush1.msra.mxu0 0.0
    %948 = vmatprep.subr.mxu0 0.0
    %949 = vmatpush1.msra.mxu0 0.0
    %950 = vmatprep.mubr.f32.mxu0 0.0
    %951 = vmatmul.mubr.f32.gmra.mrb[0].mxu0 %v884
    %v952 = vpop.f32.mrb[0].mxu0
    %v953 = vadd.f32 0.0, %v952
    %v954 = vpop.f32.mrb[0].mxu0
    %955 = vdwg.mxu0
    %v957 = vsel %vm882, %v881, 0
    %959 = vmatprep.subr.mxu0 0.0
    %960 = vmatpush1.msra.mxu0 %v517
    %961 = vmatprep.subr.mxu0 0.0
    %962 = vmatpush1.msra.mxu0 %v522
    %963 = vmatprep.subr.mxu0 0.0
    %964 = vmatpush1.msra.mxu0 0.0
    %965 = vmatprep.subr.mxu0 0.0
    %966 = vmatpush1.msra.mxu0 0.0
    %967 = vmatprep.subr.mxu0 0.0
    %968 = vmatpush1.msra.mxu0 0.0
    %969 = vmatprep.subr.mxu0 0.0
    %970 = vmatpush1.msra.mxu0 0.0
    %971 = vmatprep.subr.mxu0 0.0
    %972 = vmatpush1.msra.mxu0 0.0
    %973 = vmatprep.subr.mxu0 0.0
    %974 = vmatpush1.msra.mxu0 0.0
    %975 = vmatprep.subr.mxu0 0.0
    %976 = vmatpush1.msra.mxu0 0.0
    %977 = vmatprep.subr.mxu0 0.0
    %978 = vmatpush1.msra.mxu0 0.0
    %979 = vmatprep.subr.mxu0 0.0
    %980 = vmatpush1.msra.mxu0 0.0
    %981 = vmatprep.subr.mxu0 0.0
    %982 = vmatpush1.msra.mxu0 0.0
    %983 = vmatprep.subr.mxu0 0.0
    %984 = vmatpush1.msra.mxu0 0.0
    %985 = vmatprep.subr.mxu0 0.0
    %986 = vmatpush1.msra.mxu0 0.0
    %987 = vmatprep.subr.mxu0 0.0
    %988 = vmatpush1.msra.mxu0 0.0
    %989 = vmatprep.subr.mxu0 0.0
    %990 = vmatpush1.msra.mxu0 0.0
    %991 = vmatprep.subr.mxu0 0.0
    %992 = vmatpush1.msra.mxu0 0.0
    %993 = vmatprep.subr.mxu0 0.0
    %994 = vmatpush1.msra.mxu0 0.0
    %995 = vmatprep.subr.mxu0 0.0
    %996 = vmatpush1.msra.mxu0 0.0
    %997 = vmatprep.subr.mxu0 0.0
    %998 = vmatpush1.msra.mxu0 0.0
    %999 = vmatprep.subr.mxu0 0.0
    %1000 = vmatpush1.msra.mxu0 0.0
    %1001 = vmatprep.subr.mxu0 0.0
    %1002 = vmatpush1.msra.mxu0 0.0
    %1003 = vmatprep.subr.mxu0 0.0
    %1004 = vmatpush1.msra.mxu0 0.0
    %1005 = vmatprep.subr.mxu0 0.0
    %1006 = vmatpush1.msra.mxu0 0.0
    %1007 = vmatprep.subr.mxu0 0.0
    %1008 = vmatpush1.msra.mxu0 0.0
    %1009 = vmatprep.subr.mxu0 0.0
    %1010 = vmatpush1.msra.mxu0 0.0
    %1011 = vmatprep.subr.mxu0 0.0
    %1012 = vmatpush1.msra.mxu0 0.0
    %1013 = vmatprep.subr.mxu0 0.0
    %1014 = vmatpush1.msra.mxu0 0.0
    %1015 = vmatprep.subr.mxu0 0.0
    %1016 = vmatpush1.msra.mxu0 0.0
    %1017 = vmatprep.subr.mxu0 0.0
    %1018 = vmatpush1.msra.mxu0 0.0
    %1019 = vmatprep.subr.mxu0 0.0
    %1020 = vmatpush1.msra.mxu0 0.0
    %1021 = vmatprep.subr.mxu0 0.0
    %1022 = vmatpush1.msra.mxu0 0.0
    %1023 = vmatprep.mubr.f32.mxu0 0.0
    %1024 = vmatmul.mubr.f32.gmra.mrb[0].mxu0 %v957
    %v1025 = vpop.f32.mrb[0].mxu0
    %v1026 = vadd.f32 0.0, %v1025
    %v1027 = vpop.f32.mrb[0].mxu0
    %1028 = vdwg.mxu0
    %v1031 = vcombine.low %v953, %v1026
    %v1032 = vsel %vm531, %v1031, 0
    %1034 = vmatprep.subr.mxu0 0.0
    %1035 = vmatpush1.msra.mxu0 %v147
    %1036 = vmatprep.subr.mxu0 0.0
    %1037 = vmatpush1.msra.mxu0 %v148
    %1038 = vmatprep.subr.mxu0 0.0
    %1039 = vmatpush1.msra.mxu0 %v149
    %1040 = vmatprep.subr.mxu0 0.0
    %1041 = vmatpush1.msra.mxu0 %v150
    %1042 = vmatprep.subr.mxu0 0.0
    %1043 = vmatpush1.msra.mxu0 %v151
    %1044 = vmatprep.subr.mxu0 0.0
    %1045 = vmatpush1.msra.mxu0 %v152
    %1046 = vmatprep.subr.mxu0 0.0
    %1047 = vmatpush1.msra.mxu0 %v153
    %1048 = vmatprep.subr.mxu0 0.0
    %1049 = vmatpush1.msra.mxu0 %v154
    %1050 = vmatprep.subr.mxu0 0.0
    %1051 = vmatpush1.msra.mxu0 0.0
    %1052 = vmatprep.subr.mxu0 0.0
    %1053 = vmatpush1.msra.mxu0 0.0
    %1054 = vmatprep.subr.mxu0 0.0
    %1055 = vmatpush1.msra.mxu0 0.0
    %1056 = vmatprep.subr.mxu0 0.0
    %1057 = vmatpush1.msra.mxu0 0.0
    %1058 = vmatprep.subr.mxu0 0.0
    %1059 = vmatpush1.msra.mxu0 0.0
    %1060 = vmatprep.subr.mxu0 0.0
    %1061 = vmatpush1.msra.mxu0 0.0
    %1062 = vmatprep.subr.mxu0 0.0
    %1063 = vmatpush1.msra.mxu0 0.0
    %1064 = vmatprep.subr.mxu0 0.0
    %1065 = vmatpush1.msra.mxu0 0.0
    %1066 = vmatprep.subr.mxu0 0.0
    %1067 = vmatpush1.msra.mxu0 0.0
    %1068 = vmatprep.subr.mxu0 0.0
    %1069 = vmatpush1.msra.mxu0 0.0
    %1070 = vmatprep.subr.mxu0 0.0
    %1071 = vmatpush1.msra.mxu0 0.0
    %1072 = vmatprep.subr.mxu0 0.0
    %1073 = vmatpush1.msra.mxu0 0.0
    %1074 = vmatprep.subr.mxu0 0.0
    %1075 = vmatpush1.msra.mxu0 0.0
    %1076 = vmatprep.subr.mxu0 0.0
    %1077 = vmatpush1.msra.mxu0 0.0
    %1078 = vmatprep.subr.mxu0 0.0
    %1079 = vmatpush1.msra.mxu0 0.0
    %1080 = vmatprep.subr.mxu0 0.0
    %1081 = vmatpush1.msra.mxu0 0.0
    %1082 = vmatprep.subr.mxu0 0.0
    %1083 = vmatpush1.msra.mxu0 0.0
    %1084 = vmatprep.subr.mxu0 0.0
    %1085 = vmatpush1.msra.mxu0 0.0
    %1086 = vmatprep.subr.mxu0 0.0
    %1087 = vmatpush1.msra.mxu0 0.0
    %1088 = vmatprep.subr.mxu0 0.0
    %1089 = vmatpush1.msra.mxu0 0.0
    %1090 = vmatprep.subr.mxu0 0.0
    %1091 = vmatpush1.msra.mxu0 0.0
    %1092 = vmatprep.subr.mxu0 0.0
    %1093 = vmatpush1.msra.mxu0 0.0
    %1094 = vmatprep.subr.mxu0 0.0
    %1095 = vmatpush1.msra.mxu0 0.0
    %1096 = vmatprep.subr.mxu0 0.0
    %1097 = vmatpush1.msra.mxu0 0.0
    %1098 = vmatprep.mubr.f32.mxu0 0.0
    %1099 = vmatmul.mubr.f32.gmra.mrb[0].mxu0 %v1032
    %v1100 = vpop.f32.mrb[0].mxu0
    %v1101 = vadd.f32 %v240, %v1100
    %v1102 = vpop.f32.mrb[0].mxu0
    %1103 = vdwg.mxu0
    %1104 = vmatprep.subr.mxu0 0.0
    %1105 = vmatpush1.msra.mxu0 %v155
    %1106 = vmatprep.subr.mxu0 0.0
    %1107 = vmatpush1.msra.mxu0 %v156
    %1108 = vmatprep.subr.mxu0 0.0
    %1109 = vmatpush1.msra.mxu0 %v157
    %1110 = vmatprep.subr.mxu0 0.0
    %1111 = vmatpush1.msra.mxu0 %v158
    %1112 = vmatprep.subr.mxu0 0.0
    %1113 = vmatpush1.msra.mxu0 %v159
    %1114 = vmatprep.subr.mxu0 0.0
    %1115 = vmatpush1.msra.mxu0 %v160
    %1116 = vmatprep.subr.mxu0 0.0
    %1117 = vmatpush1.msra.mxu0 %v161
    %1118 = vmatprep.subr.mxu0 0.0
    %1119 = vmatpush1.msra.mxu0 %v162
    %1120 = vmatprep.subr.mxu0 0.0
    %1121 = vmatpush1.msra.mxu0 0.0
    %1122 = vmatprep.subr.mxu0 0.0
    %1123 = vmatpush1.msra.mxu0 0.0
    %1124 = vmatprep.subr.mxu0 0.0
    %1125 = vmatpush1.msra.mxu0 0.0
    %1126 = vmatprep.subr.mxu0 0.0
    %1127 = vmatpush1.msra.mxu0 0.0
    %1128 = vmatprep.subr.mxu0 0.0
    %1129 = vmatpush1.msra.mxu0 0.0
    %1130 = vmatprep.subr.mxu0 0.0
    %1131 = vmatpush1.msra.mxu0 0.0
    %1132 = vmatprep.subr.mxu0 0.0
    %1133 = vmatpush1.msra.mxu0 0.0
    %1134 = vmatprep.subr.mxu0 0.0
    %1135 = vmatpush1.msra.mxu0 0.0
    %1136 = vmatprep.subr.mxu0 0.0
    %1137 = vmatpush1.msra.mxu0 0.0
    %1138 = vmatprep.subr.mxu0 0.0
    %1139 = vmatpush1.msra.mxu0 0.0
    %1140 = vmatprep.subr.mxu0 0.0
    %1141 = vmatpush1.msra.mxu0 0.0
    %1142 = vmatprep.subr.mxu0 0.0
    %1143 = vmatpush1.msra.mxu0 0.0
    %1144 = vmatprep.subr.mxu0 0.0
    %1145 = vmatpush1.msra.mxu0 0.0
    %1146 = vmatprep.subr.mxu0 0.0
    %1147 = vmatpush1.msra.mxu0 0.0
    %1148 = vmatprep.subr.mxu0 0.0
    %1149 = vmatpush1.msra.mxu0 0.0
    %1150 = vmatprep.subr.mxu0 0.0
    %1151 = vmatpush1.msra.mxu0 0.0
    %1152 = vmatprep.subr.mxu0 0.0
    %1153 = vmatpush1.msra.mxu0 0.0
    %1154 = vmatprep.subr.mxu0 0.0
    %1155 = vmatpush1.msra.mxu0 0.0
    %1156 = vmatprep.subr.mxu0 0.0
    %1157 = vmatpush1.msra.mxu0 0.0
    %1158 = vmatprep.subr.mxu0 0.0
    %1159 = vmatpush1.msra.mxu0 0.0
    %1160 = vmatprep.subr.mxu0 0.0
    %1161 = vmatpush1.msra.mxu0 0.0
    %1162 = vmatprep.subr.mxu0 0.0
    %1163 = vmatpush1.msra.mxu0 0.0
    %1164 = vmatprep.subr.mxu0 0.0
    %1165 = vmatpush1.msra.mxu0 0.0
    %1166 = vmatprep.subr.mxu0 0.0
    %1167 = vmatpush1.msra.mxu0 0.0
    %1168 = vmatprep.mubr.f32.mxu0 0.0
    %1169 = vmatmul.mubr.f32.gmra.mrb[0].mxu0 %v1032
    %v1170 = vpop.f32.mrb[0].mxu0
    %v1171 = vadd.f32 %v244, %v1170
    %v1172 = vpop.f32.mrb[0].mxu0
    %1173 = vdwg.mxu0
    %1174 = vmatprep.subr.mxu0 0.0
    %1175 = vmatpush1.msra.mxu0 %v163
    %1176 = vmatprep.subr.mxu0 0.0
    %1177 = vmatpush1.msra.mxu0 %v164
    %1178 = vmatprep.subr.mxu0 0.0
    %1179 = vmatpush1.msra.mxu0 %v165
    %1180 = vmatprep.subr.mxu0 0.0
    %1181 = vmatpush1.msra.mxu0 %v166
    %1182 = vmatprep.subr.mxu0 0.0
    %1183 = vmatpush1.msra.mxu0 %v167
    %1184 = vmatprep.subr.mxu0 0.0
    %1185 = vmatpush1.msra.mxu0 %v168
    %1186 = vmatprep.subr.mxu0 0.0
    %1187 = vmatpush1.msra.mxu0 %v169
    %1188 = vmatprep.subr.mxu0 0.0
    %1189 = vmatpush1.msra.mxu0 %v170
    %1190 = vmatprep.subr.mxu0 0.0
    %1191 = vmatpush1.msra.mxu0 0.0
    %1192 = vmatprep.subr.mxu0 0.0
    %1193 = vmatpush1.msra.mxu0 0.0
    %1194 = vmatprep.subr.mxu0 0.0
    %1195 = vmatpush1.msra.mxu0 0.0
    %1196 = vmatprep.subr.mxu0 0.0
    %1197 = vmatpush1.msra.mxu0 0.0
    %1198 = vmatprep.subr.mxu0 0.0
    %1199 = vmatpush1.msra.mxu0 0.0
    %1200 = vmatprep.subr.mxu0 0.0
    %1201 = vmatpush1.msra.mxu0 0.0
    %1202 = vmatprep.subr.mxu0 0.0
    %1203 = vmatpush1.msra.mxu0 0.0
    %1204 = vmatprep.subr.mxu0 0.0
    %1205 = vmatpush1.msra.mxu0 0.0
    %1206 = vmatprep.subr.mxu0 0.0
    %1207 = vmatpush1.msra.mxu0 0.0
    %1208 = vmatprep.subr.mxu0 0.0
    %1209 = vmatpush1.msra.mxu0 0.0
    %1210 = vmatprep.subr.mxu0 0.0
    %1211 = vmatpush1.msra.mxu0 0.0
    %1212 = vmatprep.subr.mxu0 0.0
    %1213 = vmatpush1.msra.mxu0 0.0
    %1214 = vmatprep.subr.mxu0 0.0
    %1215 = vmatpush1.msra.mxu0 0.0
    %1216 = vmatprep.subr.mxu0 0.0
    %1217 = vmatpush1.msra.mxu0 0.0
    %1218 = vmatprep.subr.mxu0 0.0
    %1219 = vmatpush1.msra.mxu0 0.0
    %1220 = vmatprep.subr.mxu0 0.0
    %1221 = vmatpush1.msra.mxu0 0.0
    %1222 = vmatprep.subr.mxu0 0.0
    %1223 = vmatpush1.msra.mxu0 0.0
    %1224 = vmatprep.subr.mxu0 0.0
    %1225 = vmatpush1.msra.mxu0 0.0
    %1226 = vmatprep.subr.mxu0 0.0
    %1227 = vmatpush1.msra.mxu0 0.0
    %1228 = vmatprep.subr.mxu0 0.0
    %1229 = vmatpush1.msra.mxu0 0.0
    %1230 = vmatprep.subr.mxu0 0.0
    %1231 = vmatpush1.msra.mxu0 0.0
    %1232 = vmatprep.subr.mxu0 0.0
    %1233 = vmatpush1.msra.mxu0 0.0
    %1234 = vmatprep.subr.mxu0 0.0
    %1235 = vmatpush1.msra.mxu0 0.0
    %1236 = vmatprep.subr.mxu0 0.0
    %1237 = vmatpush1.msra.mxu0 0.0
    %1238 = vmatprep.mubr.f32.mxu0 0.0
    %1239 = vmatmul.mubr.f32.gmra.mrb[0].mxu0 %v1032
    %v1240 = vpop.f32.mrb[0].mxu0
    %v1241 = vadd.f32 %v248, %v1240
    %v1242 = vpop.f32.mrb[0].mxu0
    %1243 = vdwg.mxu0
    %v1244 = vsel %vm531, %v529, 0
    %1246 = vmatprep.subr.mxu0 0.0
    %1247 = vmatpush1.msra.mxu0 %v171
    %1248 = vmatprep.subr.mxu0 0.0
    %1249 = vmatpush1.msra.mxu0 %v172
    %1250 = vmatprep.subr.mxu0 0.0
    %1251 = vmatpush1.msra.mxu0 %v173
    %1252 = vmatprep.subr.mxu0 0.0
    %1253 = vmatpush1.msra.mxu0 %v174
    %1254 = vmatprep.subr.mxu0 0.0
    %1255 = vmatpush1.msra.mxu0 %v175
    %1256 = vmatprep.subr.mxu0 0.0
    %1257 = vmatpush1.msra.mxu0 %v176
    %1258 = vmatprep.subr.mxu0 0.0
    %1259 = vmatpush1.msra.mxu0 %v177
    %1260 = vmatprep.subr.mxu0 0.0
    %1261 = vmatpush1.msra.mxu0 %v178
    %1262 = vmatprep.subr.mxu0 0.0
    %1263 = vmatpush1.msra.mxu0 0.0
    %1264 = vmatprep.subr.mxu0 0.0
    %1265 = vmatpush1.msra.mxu0 0.0
    %1266 = vmatprep.subr.mxu0 0.0
    %1267 = vmatpush1.msra.mxu0 0.0
    %1268 = vmatprep.subr.mxu0 0.0
    %1269 = vmatpush1.msra.mxu0 0.0
    %1270 = vmatprep.subr.mxu0 0.0
    %1271 = vmatpush1.msra.mxu0 0.0
    %1272 = vmatprep.subr.mxu0 0.0
    %1273 = vmatpush1.msra.mxu0 0.0
    %1274 = vmatprep.subr.mxu0 0.0
    %1275 = vmatpush1.msra.mxu0 0.0
    %1276 = vmatprep.subr.mxu0 0.0
    %1277 = vmatpush1.msra.mxu0 0.0
    %1278 = vmatprep.subr.mxu0 0.0
    %1279 = vmatpush1.msra.mxu0 0.0
    %1280 = vmatprep.subr.mxu0 0.0
    %1281 = vmatpush1.msra.mxu0 0.0
    %1282 = vmatprep.subr.mxu0 0.0
    %1283 = vmatpush1.msra.mxu0 0.0
    %1284 = vmatprep.subr.mxu0 0.0
    %1285 = vmatpush1.msra.mxu0 0.0
    %1286 = vmatprep.subr.mxu0 0.0
    %1287 = vmatpush1.msra.mxu0 0.0
    %1288 = vmatprep.subr.mxu0 0.0
    %1289 = vmatpush1.msra.mxu0 0.0
    %1290 = vmatprep.subr.mxu0 0.0
    %1291 = vmatpush1.msra.mxu0 0.0
    %1292 = vmatprep.subr.mxu0 0.0
    %1293 = vmatpush1.msra.mxu0 0.0
    %1294 = vmatprep.subr.mxu0 0.0
    %1295 = vmatpush1.msra.mxu0 0.0
    %1296 = vmatprep.subr.mxu0 0.0
    %1297 = vmatpush1.msra.mxu0 0.0
    %1298 = vmatprep.subr.mxu0 0.0
    %1299 = vmatpush1.msra.mxu0 0.0
    %1300 = vmatprep.subr.mxu0 0.0
    %1301 = vmatpush1.msra.mxu0 0.0
    %1302 = vmatprep.subr.mxu0 0.0
    %1303 = vmatpush1.msra.mxu0 0.0
    %1304 = vmatprep.subr.mxu0 0.0
    %1305 = vmatpush1.msra.mxu0 0.0
    %1306 = vmatprep.subr.mxu0 0.0
    %1307 = vmatpush1.msra.mxu0 0.0
    %1308 = vmatprep.subr.mxu0 0.0
    %1309 = vmatpush1.msra.mxu0 0.0
    %1310 = vmatprep.mubr.f32.mxu0 0.0
    %1311 = vmatmul.mubr.f32.gmra.mrb[0].mxu0 %v1244
    %v1312 = vpop.f32.mrb[0].mxu0
    %v1313 = vadd.f32 %v252, %v1312
    %v1314 = vpop.f32.mrb[0].mxu0
    %1315 = vdwg.mxu0
    %1316 = vmatprep.subr.mxu0 0.0
    %1317 = vmatpush1.msra.mxu0 %v179
    %1318 = vmatprep.subr.mxu0 0.0
    %1319 = vmatpush1.msra.mxu0 %v180
    %1320 = vmatprep.subr.mxu0 0.0
    %1321 = vmatpush1.msra.mxu0 %v181
    %1322 = vmatprep.subr.mxu0 0.0
    %1323 = vmatpush1.msra.mxu0 %v182
    %1324 = vmatprep.subr.mxu0 0.0
    %1325 = vmatpush1.msra.mxu0 %v183
    %1326 = vmatprep.subr.mxu0 0.0
    %1327 = vmatpush1.msra.mxu0 %v184
    %1328 = vmatprep.subr.mxu0 0.0
    %1329 = vmatpush1.msra.mxu0 %v185
    %1330 = vmatprep.subr.mxu0 0.0
    %1331 = vmatpush1.msra.mxu0 %v186
    %1332 = vmatprep.subr.mxu0 0.0
    %1333 = vmatpush1.msra.mxu0 0.0
    %1334 = vmatprep.subr.mxu0 0.0
    %1335 = vmatpush1.msra.mxu0 0.0
    %1336 = vmatprep.subr.mxu0 0.0
    %1337 = vmatpush1.msra.mxu0 0.0
    %1338 = vmatprep.subr.mxu0 0.0
    %1339 = vmatpush1.msra.mxu0 0.0
    %1340 = vmatprep.subr.mxu0 0.0
    %1341 = vmatpush1.msra.mxu0 0.0
    %1342 = vmatprep.subr.mxu0 0.0
    %1343 = vmatpush1.msra.mxu0 0.0
    %1344 = vmatprep.subr.mxu0 0.0
    %1345 = vmatpush1.msra.mxu0 0.0
    %1346 = vmatprep.subr.mxu0 0.0
    %1347 = vmatpush1.msra.mxu0 0.0
    %1348 = vmatprep.subr.mxu0 0.0
    %1349 = vmatpush1.msra.mxu0 0.0
    %1350 = vmatprep.subr.mxu0 0.0
    %1351 = vmatpush1.msra.mxu0 0.0
    %1352 = vmatprep.subr.mxu0 0.0
    %1353 = vmatpush1.msra.mxu0 0.0
    %1354 = vmatprep.subr.mxu0 0.0
    %1355 = vmatpush1.msra.mxu0 0.0
    %1356 = vmatprep.subr.mxu0 0.0
    %1357 = vmatpush1.msra.mxu0 0.0
    %1358 = vmatprep.subr.mxu0 0.0
    %1359 = vmatpush1.msra.mxu0 0.0
    %1360 = vmatprep.subr.mxu0 0.0
    %1361 = vmatpush1.msra.mxu0 0.0
    %1362 = vmatprep.subr.mxu0 0.0
    %1363 = vmatpush1.msra.mxu0 0.0
    %1364 = vmatprep.subr.mxu0 0.0
    %1365 = vmatpush1.msra.mxu0 0.0
    %1366 = vmatprep.subr.mxu0 0.0
    %1367 = vmatpush1.msra.mxu0 0.0
    %1368 = vmatprep.subr.mxu0 0.0
    %1369 = vmatpush1.msra.mxu0 0.0
    %1370 = vmatprep.subr.mxu0 0.0
    %1371 = vmatpush1.msra.mxu0 0.0
    %1372 = vmatprep.subr.mxu0 0.0
    %1373 = vmatpush1.msra.mxu0 0.0
    %1374 = vmatprep.subr.mxu0 0.0
    %1375 = vmatpush1.msra.mxu0 0.0
    %1376 = vmatprep.subr.mxu0 0.0
    %1377 = vmatpush1.msra.mxu0 0.0
    %1378 = vmatprep.subr.mxu0 0.0
    %1379 = vmatpush1.msra.mxu0 0.0
    %1380 = vmatprep.mubr.f32.mxu0 0.0
    %1381 = vmatmul.mubr.f32.gmra.mrb[0].mxu0 %v1244
    %v1382 = vpop.f32.mrb[0].mxu0
    %v1383 = vadd.f32 %v256, %v1382
    %v1384 = vpop.f32.mrb[0].mxu0
    %1385 = vdwg.mxu0
    %1386 = vmatprep.subr.mxu0 0.0
    %1387 = vmatpush1.msra.mxu0 %v187
    %1388 = vmatprep.subr.mxu0 0.0
    %1389 = vmatpush1.msra.mxu0 %v188
    %1390 = vmatprep.subr.mxu0 0.0
    %1391 = vmatpush1.msra.mxu0 %v189
    %1392 = vmatprep.subr.mxu0 0.0
    %1393 = vmatpush1.msra.mxu0 %v190
    %1394 = vmatprep.subr.mxu0 0.0
    %1395 = vmatpush1.msra.mxu0 %v191
    %1396 = vmatprep.subr.mxu0 0.0
    %1397 = vmatpush1.msra.mxu0 %v192
    %1398 = vmatprep.subr.mxu0 0.0
    %1399 = vmatpush1.msra.mxu0 %v193
    %1400 = vmatprep.subr.mxu0 0.0
    %1401 = vmatpush1.msra.mxu0 %v194
    %1402 = vmatprep.subr.mxu0 0.0
    %1403 = vmatpush1.msra.mxu0 0.0
    %1404 = vmatprep.subr.mxu0 0.0
    %1405 = vmatpush1.msra.mxu0 0.0
    %1406 = vmatprep.subr.mxu0 0.0
    %1407 = vmatpush1.msra.mxu0 0.0
    %1408 = vmatprep.subr.mxu0 0.0
    %1409 = vmatpush1.msra.mxu0 0.0
    %1410 = vmatprep.subr.mxu0 0.0
    %1411 = vmatpush1.msra.mxu0 0.0
    %1412 = vmatprep.subr.mxu0 0.0
    %1413 = vmatpush1.msra.mxu0 0.0
    %1414 = vmatprep.subr.mxu0 0.0
    %1415 = vmatpush1.msra.mxu0 0.0
    %1416 = vmatprep.subr.mxu0 0.0
    %1417 = vmatpush1.msra.mxu0 0.0
    %1418 = vmatprep.subr.mxu0 0.0
    %1419 = vmatpush1.msra.mxu0 0.0
    %1420 = vmatprep.subr.mxu0 0.0
    %1421 = vmatpush1.msra.mxu0 0.0
    %1422 = vmatprep.subr.mxu0 0.0
    %1423 = vmatpush1.msra.mxu0 0.0
    %1424 = vmatprep.subr.mxu0 0.0
    %1425 = vmatpush1.msra.mxu0 0.0
    %1426 = vmatprep.subr.mxu0 0.0
    %1427 = vmatpush1.msra.mxu0 0.0
    %1428 = vmatprep.subr.mxu0 0.0
    %1429 = vmatpush1.msra.mxu0 0.0
    %1430 = vmatprep.subr.mxu0 0.0
    %1431 = vmatpush1.msra.mxu0 0.0
    %1432 = vmatprep.subr.mxu0 0.0
    %1433 = vmatpush1.msra.mxu0 0.0
    %1434 = vmatprep.subr.mxu0 0.0
    %1435 = vmatpush1.msra.mxu0 0.0
    %1436 = vmatprep.subr.mxu0 0.0
    %1437 = vmatpush1.msra.mxu0 0.0
    %1438 = vmatprep.subr.mxu0 0.0
    %1439 = vmatpush1.msra.mxu0 0.0
    %1440 = vmatprep.subr.mxu0 0.0
    %1441 = vmatpush1.msra.mxu0 0.0
    %1442 = vmatprep.subr.mxu0 0.0
    %1443 = vmatpush1.msra.mxu0 0.0
    %1444 = vmatprep.subr.mxu0 0.0
    %1445 = vmatpush1.msra.mxu0 0.0
    %1446 = vmatprep.subr.mxu0 0.0
    %1447 = vmatpush1.msra.mxu0 0.0
    %1448 = vmatprep.subr.mxu0 0.0
    %1449 = vmatpush1.msra.mxu0 0.0
    %1450 = vmatprep.mubr.f32.mxu0 0.0
    %1451 = vmatmul.mubr.f32.gmra.mrb[0].mxu0 %v1244
    %v1452 = vpop.f32.mrb[0].mxu0
    %v1453 = vadd.f32 %v260, %v1452
    %v1454 = vpop.f32.mrb[0].mxu0
    %1455 = vdwg.mxu0
    %v1456 = vadd.f32 %v1101, %v1313
    %v1457 = vxor.u32 %v1456, 2147483648
    %v1458 = vmul.f32 %v1457, 1.442695
    %v1459 = vpow.pop %v1458
    %v1460 = vadd.f32 %v1459, 1.0
    %v1461 = vrcp.pop %v1460
    %v1462 = vmul.f32 1.0, %v1461
    %v1463 = vadd.f32 %v1171, %v1383
    %v1464 = vxor.u32 %v1463, 2147483648
    %v1465 = vmul.f32 %v1464, 1.442695
    %v1466 = vpow.pop %v1465
    %v1467 = vadd.f32 %v1466, 1.0
    %v1468 = vrcp.pop %v1467
    %v1469 = vmul.f32 1.0, %v1468
    %v1470 = vmul.f32 %v1462, %v1453
    %v1471 = vadd.f32 %v1241, %v1470
    %v1472 = vtanh.pop %v1471
    %v1473 = vsub.f32 1.0, %v1469
    %v1474 = vmul.f32 %v1473, %v1472
    %v1475 = vmul.f32 %v1469, %v529
    %v1476 = vadd.f32 %v1474, %v1475
    %v1477 = vsel %vm531, %v1476, 0.0
    %1478 = vadd.xlane.f32.xlu0 %v1477
    %v1479 = vpop.xlane.xlu0 %1478
    %v1480 = vmul.f32 %v1479, %v535
    %v1481 = vsub.f32 %v1476, %v1480
    %v1482 = vmul.f32 %v1481, %v1481
    %v1483 = vsel %vm531, %v1482, 0.0
    %1484 = vadd.xlane.f32.xlu0 %v1483
    %v1485 = vpop.xlane.xlu0 %1484
    %v1486 = vmul.f32 %v1485, %v535
    %v1487 = vadd.f32 %v1486, 1e-05
    %v1488 = vrsqrt.pop %v1487
    %v1489 = vmul.f32 %v1481, %v1488
    %v1490 = vmul.f32 %v1489, %v232
    %v1491 = vadd.f32 %v1490, %v236
    %v1493 = vsel %vm531, %v1491, 0
    %1495 = vmatprep.subr.mxu0 0.0
    %1496 = vmatpush1.msra.mxu0 %v195
    %1497 = vmatprep.subr.mxu0 0.0
    %1498 = vmatpush1.msra.mxu0 %v196
    %1499 = vmatprep.subr.mxu0 0.0
    %1500 = vmatpush1.msra.mxu0 %v197
    %1501 = vmatprep.subr.mxu0 0.0
    %1502 = vmatpush1.msra.mxu0 %v198
    %1503 = vmatprep.subr.mxu0 0.0
    %1504 = vmatpush1.msra.mxu0 %v199
    %1505 = vmatprep.subr.mxu0 0.0
    %1506 = vmatpush1.msra.mxu0 %v200
    %1507 = vmatprep.subr.mxu0 0.0
    %1508 = vmatpush1.msra.mxu0 %v201
    %1509 = vmatprep.subr.mxu0 0.0
    %1510 = vmatpush1.msra.mxu0 %v202
    %1511 = vmatprep.subr.mxu0 0.0
    %1512 = vmatpush1.msra.mxu0 0.0
    %1513 = vmatprep.subr.mxu0 0.0
    %1514 = vmatpush1.msra.mxu0 0.0
    %1515 = vmatprep.subr.mxu0 0.0
    %1516 = vmatpush1.msra.mxu0 0.0
    %1517 = vmatprep.subr.mxu0 0.0
    %1518 = vmatpush1.msra.mxu0 0.0
    %1519 = vmatprep.subr.mxu0 0.0
    %1520 = vmatpush1.msra.mxu0 0.0
    %1521 = vmatprep.subr.mxu0 0.0
    %1522 = vmatpush1.msra.mxu0 0.0
    %1523 = vmatprep.subr.mxu0 0.0
    %1524 = vmatpush1.msra.mxu0 0.0
    %1525 = vmatprep.subr.mxu0 0.0
    %1526 = vmatpush1.msra.mxu0 0.0
    %1527 = vmatprep.subr.mxu0 0.0
    %1528 = vmatpush1.msra.mxu0 0.0
    %1529 = vmatprep.subr.mxu0 0.0
    %1530 = vmatpush1.msra.mxu0 0.0
    %1531 = vmatprep.subr.mxu0 0.0
    %1532 = vmatpush1.msra.mxu0 0.0
    %1533 = vmatprep.subr.mxu0 0.0
    %1534 = vmatpush1.msra.mxu0 0.0
    %1535 = vmatprep.subr.mxu0 0.0
    %1536 = vmatpush1.msra.mxu0 0.0
    %1537 = vmatprep.subr.mxu0 0.0
    %1538 = vmatpush1.msra.mxu0 0.0
    %1539 = vmatprep.subr.mxu0 0.0
    %1540 = vmatpush1.msra.mxu0 0.0
    %1541 = vmatprep.subr.mxu0 0.0
    %1542 = vmatpush1.msra.mxu0 0.0
    %1543 = vmatprep.subr.mxu0 0.0
    %1544 = vmatpush1.msra.mxu0 0.0
    %1545 = vmatprep.subr.mxu0 0.0
    %1546 = vmatpush1.msra.mxu0 0.0
    %1547 = vmatprep.subr.mxu0 0.0
    %1548 = vmatpush1.msra.mxu0 0.0
    %1549 = vmatprep.subr.mxu0 0.0
    %1550 = vmatpush1.msra.mxu0 0.0
    %1551 = vmatprep.subr.mxu0 0.0
    %1552 = vmatpush1.msra.mxu0 0.0
    %1553 = vmatprep.subr.mxu0 0.0
    %1554 = vmatpush1.msra.mxu0 0.0
    %1555 = vmatprep.subr.mxu0 0.0
    %1556 = vmatpush1.msra.mxu0 0.0
    %1557 = vmatprep.subr.mxu0 0.0
    %1558 = vmatpush1.msra.mxu0 0.0
    %1559 = vmatprep.mubr.f32.mxu0 0.0
    %1560 = vmatmul.mubr.f32.gmra.mrb[0].mxu0 %v1493
    %v1561 = vpop.f32.mrb[0].mxu0
    %v1562 = vadd.f32 %v264, %v1561
    %v1563 = vpop.f32.mrb[0].mxu0
    %1564 = vdwg.mxu0
    %v1565 = vmax.f32 %v1562, 0.0
    %1566 = vmatprep.subr.mxu0 0.0
    %1567 = vmatpush1.msra.mxu0 %v203
    %1568 = vmatprep.subr.mxu0 0.0
    %1569 = vmatpush1.msra.mxu0 %v204
    %1570 = vmatprep.subr.mxu0 0.0
    %1571 = vmatpush1.msra.mxu0 %v205
    %1572 = vmatprep.subr.mxu0 0.0
    %1573 = vmatpush1.msra.mxu0 %v206
    %1574 = vmatprep.subr.mxu0 0.0
    %1575 = vmatpush1.msra.mxu0 %v207
    %1576 = vmatprep.subr.mxu0 0.0
    %1577 = vmatpush1.msra.mxu0 %v208
    %1578 = vmatprep.subr.mxu0 0.0
    %1579 = vmatpush1.msra.mxu0 %v209
    %1580 = vmatprep.subr.mxu0 0.0
    %1581 = vmatpush1.msra.mxu0 %v210
    %1582 = vmatprep.subr.mxu0 0.0
    %1583 = vmatpush1.msra.mxu0 %v211
    %1584 = vmatprep.subr.mxu0 0.0
    %1585 = vmatpush1.msra.mxu0 %v212
    %1586 = vmatprep.subr.mxu0 0.0
    %1587 = vmatpush1.msra.mxu0 %v213
    %1588 = vmatprep.subr.mxu0 0.0
    %1589 = vmatpush1.msra.mxu0 %v214
    %1590 = vmatprep.subr.mxu0 0.0
    %1591 = vmatpush1.msra.mxu0 %v215
    %1592 = vmatprep.subr.mxu0 0.0
    %1593 = vmatpush1.msra.mxu0 %v216
    %1594 = vmatprep.subr.mxu0 0.0
    %1595 = vmatpush1.msra.mxu0 %v217
    %1596 = vmatprep.subr.mxu0 0.0
    %1597 = vmatpush1.msra.mxu0 %v218
    %1598 = vmatprep.subr.mxu0 0.0
    %1599 = vmatpush1.msra.mxu0 0.0
    %1600 = vmatprep.subr.mxu0 0.0
    %1601 = vmatpush1.msra.mxu0 0.0
    %1602 = vmatprep.subr.mxu0 0.0
    %1603 = vmatpush1.msra.mxu0 0.0
    %1604 = vmatprep.subr.mxu0 0.0
    %1605 = vmatpush1.msra.mxu0 0.0
    %1606 = vmatprep.subr.mxu0 0.0
    %1607 = vmatpush1.msra.mxu0 0.0
    %1608 = vmatprep.subr.mxu0 0.0
    %1609 = vmatpush1.msra.mxu0 0.0
    %1610 = vmatprep.subr.mxu0 0.0
    %1611 = vmatpush1.msra.mxu0 0.0
    %1612 = vmatprep.subr.mxu0 0.0
    %1613 = vmatpush1.msra.mxu0 0.0
    %1614 = vmatprep.subr.mxu0 0.0
    %1615 = vmatpush1.msra.mxu0 0.0
    %1616 = vmatprep.subr.mxu0 0.0
    %1617 = vmatpush1.msra.mxu0 0.0
    %1618 = vmatprep.subr.mxu0 0.0
    %1619 = vmatpush1.msra.mxu0 0.0
    %1620 = vmatprep.subr.mxu0 0.0
    %1621 = vmatpush1.msra.mxu0 0.0
    %1622 = vmatprep.subr.mxu0 0.0
    %1623 = vmatpush1.msra.mxu0 0.0
    %1624 = vmatprep.subr.mxu0 0.0
    %1625 = vmatpush1.msra.mxu0 0.0
    %1626 = vmatprep.subr.mxu0 0.0
    %1627 = vmatpush1.msra.mxu0 0.0
    %1628 = vmatprep.subr.mxu0 0.0
    %1629 = vmatpush1.msra.mxu0 0.0
    %1630 = vmatprep.mubr.f32.mxu0 0.0
    %1631 = vmatmul.mubr.f32.gmra.mrb[0].mxu0 %v1565
    %v1632 = vpop.f32.mrb[0].mxu0
    %v1633 = vadd.f32 0.0, %v1632
    %v1634 = vpop.f32.mrb[0].mxu0
    %1635 = vdwg.mxu0
    %v1636 = vadd.f32 %v1476, %v1633
    %v1637 = vadd.f32 %v1636, %v268
    %v1638 = vsel %vm531, %v1637, 0.0
    %1639 = vadd.xlane.f32.xlu0 %v1638
    %v1640 = vpop.xlane.xlu0 %1639
    %v1641 = vmul.f32 %v1640, %v535
    %v1642 = vsub.f32 %v1637, %v1641
    %v1643 = vmul.f32 %v1642, %v1642
    %v1644 = vsel %vm531, %v1643, 0.0
    %1645 = vadd.xlane.f32.xlu0 %v1644
    %v1646 = vpop.xlane.xlu0 %1645
    %v1647 = vmul.f32 %v1646, %v535
    %v1648 = vadd.f32 %v1647, 1e-05
    %v1649 = vrsqrt.pop %v1648
    %v1650 = vmul.f32 %v1642, %v1649
    %v1651 = vmul.f32 %v1650, %v224
    %v1652 = vadd.f32 %v1651, %v228
    %v1654 = vsel %vm531, %v1652, 0
    %1656 = vmatprep.subr.mxu0 0.0
    %1657 = vmatpush1.msra.mxu0 %v139
    %1658 = vmatprep.subr.mxu0 0.0
    %1659 = vmatpush1.msra.mxu0 %v140
    %1660 = vmatprep.subr.mxu0 0.0
    %1661 = vmatpush1.msra.mxu0 %v141
    %1662 = vmatprep.subr.mxu0 0.0
    %1663 = vmatpush1.msra.mxu0 %v142
    %1664 = vmatprep.subr.mxu0 0.0
    %1665 = vmatpush1.msra.mxu0 %v143
    %1666 = vmatprep.subr.mxu0 0.0
    %1667 = vmatpush1.msra.mxu0 %v144
    %1668 = vmatprep.subr.mxu0 0.0
    %1669 = vmatpush1.msra.mxu0 %v145
    %1670 = vmatprep.subr.mxu0 0.0
    %1671 = vmatpush1.msra.mxu0 %v146
    %1672 = vmatprep.subr.mxu0 0.0
    %1673 = vmatpush1.msra.mxu0 0.0
    %1674 = vmatprep.subr.mxu0 0.0
    %1675 = vmatpush1.msra.mxu0 0.0
    %1676 = vmatprep.subr.mxu0 0.0
    %1677 = vmatpush1.msra.mxu0 0.0
    %1678 = vmatprep.subr.mxu0 0.0
    %1679 = vmatpush1.msra.mxu0 0.0
    %1680 = vmatprep.subr.mxu0 0.0
    %1681 = vmatpush1.msra.mxu0 0.0
    %1682 = vmatprep.subr.mxu0 0.0
    %1683 = vmatpush1.msra.mxu0 0.0
    %1684 = vmatprep.subr.mxu0 0.0
    %1685 = vmatpush1.msra.mxu0 0.0
    %1686 = vmatprep.subr.mxu0 0.0
    %1687 = vmatpush1.msra.mxu0 0.0
    %1688 = vmatprep.subr.mxu0 0.0
    %1689 = vmatpush1.msra.mxu0 0.0
    %1690 = vmatprep.subr.mxu0 0.0
    %1691 = vmatpush1.msra.mxu0 0.0
    %1692 = vmatprep.subr.mxu0 0.0
    %1693 = vmatpush1.msra.mxu0 0.0
    %1694 = vmatprep.subr.mxu0 0.0
    %1695 = vmatpush1.msra.mxu0 0.0
    %1696 = vmatprep.subr.mxu0 0.0
    %1697 = vmatpush1.msra.mxu0 0.0
    %1698 = vmatprep.subr.mxu0 0.0
    %1699 = vmatpush1.msra.mxu0 0.0
    %1700 = vmatprep.subr.mxu0 0.0
    %1701 = vmatpush1.msra.mxu0 0.0
    %1702 = vmatprep.subr.mxu0 0.0
    %1703 = vmatpush1.msra.mxu0 0.0
    %1704 = vmatprep.subr.mxu0 0.0
    %1705 = vmatpush1.msra.mxu0 0.0
    %1706 = vmatprep.subr.mxu0 0.0
    %1707 = vmatpush1.msra.mxu0 0.0
    %1708 = vmatprep.subr.mxu0 0.0
    %1709 = vmatpush1.msra.mxu0 0.0
    %1710 = vmatprep.subr.mxu0 0.0
    %1711 = vmatpush1.msra.mxu0 0.0
    %1712 = vmatprep.subr.mxu0 0.0
    %1713 = vmatpush1.msra.mxu0 0.0
    %1714 = vmatprep.subr.mxu0 0.0
    %1715 = vmatpush1.msra.mxu0 0.0
    %1716 = vmatprep.subr.mxu0 0.0
    %1717 = vmatpush1.msra.mxu0 0.0
    %1718 = vmatprep.subr.mxu0 0.0
    %1719 = vmatpush1.msra.mxu0 0.0
    %1720 = vmatprep.mubr.f32.mxu0 0.0
    %1721 = vmatmul.mubr.f32.gmra.mrb[0].mxu0 %v1654
    %v1722 = vpop.f32.mrb[0].mxu0
    %v1723 = vadd.f32 0.0, %v1722
    %v1724 = vpop.f32.mrb[0].mxu0
    %1725 = vdwg.mxu0
    %v1726 = vmul.f32 %v1723, 0.125
    %v1728 = vcombine.high %v1726, %v1726
    %v1729 = vsel %vm531, %v1726, 0
    %1731 = vmatprep.subr.mxu0 0.0
    %1732 = vmatpush1.xpose.msra.mxu0 %v678
    %1733 = vmatprep.subr.mxu0 0.0
    %1734 = vmatpush1.xpose.msra.mxu0 %v681
    %1735 = vmatprep.subr.mxu0 0.0
    %1736 = vmatpush1.xpose.msra.mxu0 0.0
    %1737 = vmatprep.subr.mxu0 0.0
    %1738 = vmatpush1.xpose.msra.mxu0 0.0
    %1739 = vmatprep.subr.mxu0 0.0
    %1740 = vmatpush1.xpose.msra.mxu0 0.0
    %1741 = vmatprep.subr.mxu0 0.0
    %1742 = vmatpush1.xpose.msra.mxu0 0.0
    %1743 = vmatprep.subr.mxu0 0.0
    %1744 = vmatpush1.xpose.msra.mxu0 0.0
    %1745 = vmatprep.subr.mxu0 0.0
    %1746 = vmatpush1.xpose.msra.mxu0 0.0
    %1747 = vmatprep.subr.mxu0 0.0
    %1748 = vmatpush1.xpose.msra.mxu0 0.0
    %1749 = vmatprep.subr.mxu0 0.0
    %1750 = vmatpush1.xpose.msra.mxu0 0.0
    %1751 = vmatprep.subr.mxu0 0.0
    %1752 = vmatpush1.xpose.msra.mxu0 0.0
    %1753 = vmatprep.subr.mxu0 0.0
    %1754 = vmatpush1.xpose.msra.mxu0 0.0
    %1755 = vmatprep.subr.mxu0 0.0
    %1756 = vmatpush1.xpose.msra.mxu0 0.0
    %1757 = vmatprep.subr.mxu0 0.0
    %1758 = vmatpush1.xpose.msra.mxu0 0.0
    %1759 = vmatprep.subr.mxu0 0.0
    %1760 = vmatpush1.xpose.msra.mxu0 0.0
    %1761 = vmatprep.subr.mxu0 0.0
    %1762 = vmatpush1.xpose.msra.mxu0 0.0
    %1763 = vmatprep.subr.mxu0 0.0
    %1764 = vmatpush1.xpose.msra.mxu0 0.0
    %1765 = vmatprep.subr.mxu0 0.0
    %1766 = vmatpush1.xpose.msra.mxu0 0.0
    %1767 = vmatprep.subr.mxu0 0.0
    %1768 = vmatpush1.xpose.msra.mxu0 0.0
    %1769 = vmatprep.subr.mxu0 0.0
    %1770 = vmatpush1.xpose.msra.mxu0 0.0
    %1771 = vmatprep.subr.mxu0 0.0
    %1772 = vmatpush1.xpose.msra.mxu0 0.0
    %1773 = vmatprep.subr.mxu0 0.0
    %1774 = vmatpush1.xpose.msra.mxu0 0.0
    %1775 = vmatprep.subr.mxu0 0.0
    %1776 = vmatpush1.xpose.msra.mxu0 0.0
    %1777 = vmatprep.subr.mxu0 0.0
    %1778 = vmatpush1.xpose.msra.mxu0 0.0
    %1779 = vmatprep.subr.mxu0 0.0
    %1780 = vmatpush1.xpose.msra.mxu0 0.0
    %1781 = vmatprep.subr.mxu0 0.0
    %1782 = vmatpush1.xpose.msra.mxu0 0.0
    %1783 = vmatprep.subr.mxu0 0.0
    %1784 = vmatpush1.xpose.msra.mxu0 0.0
    %1785 = vmatprep.subr.mxu0 0.0
    %1786 = vmatpush1.xpose.msra.mxu0 0.0
    %1787 = vmatprep.subr.mxu0 0.0
    %1788 = vmatpush1.xpose.msra.mxu0 0.0
    %1789 = vmatprep.subr.mxu0 0.0
    %1790 = vmatpush1.xpose.msra.mxu0 0.0
    %1791 = vmatprep.subr.mxu0 0.0
    %1792 = vmatpush1.xpose.msra.mxu0 0.0
    %1793 = vmatprep.subr.mxu0 0.0
    %1794 = vmatpush1.xpose.msra.mxu0 0.0
    %1795 = vmatprep.mubr.f32.mxu0 0.0
    %1796 = vmatmul.mubr.f32.gmra.mrb[0].mxu0 %v1729
    %v1797 = vpop.f32.mrb[0].mxu0
    %v1798 = vadd.f32 0.0, %v1797
    %v1799 = vpop.f32.mrb[0].mxu0
    %1800 = vdwg.mxu0
    %v1801 = vsel %vm531, %v1728, 0
    %1803 = vmatprep.subr.mxu0 0.0
    %1804 = vmatpush1.xpose.msra.mxu0 %v756
    %1805 = vmatprep.subr.mxu0 0.0
    %1806 = vmatpush1.xpose.msra.mxu0 %v759
    %1807 = vmatprep.subr.mxu0 0.0
    %1808 = vmatpush1.xpose.msra.mxu0 0.0
    %1809 = vmatprep.subr.mxu0 0.0
    %1810 = vmatpush1.xpose.msra.mxu0 0.0
    %1811 = vmatprep.subr.mxu0 0.0
    %1812 = vmatpush1.xpose.msra.mxu0 0.0
    %1813 = vmatprep.subr.mxu0 0.0
    %1814 = vmatpush1.xpose.msra.mxu0 0.0
    %1815 = vmatprep.subr.mxu0 0.0
    %1816 = vmatpush1.xpose.msra.mxu0 0.0
    %1817 = vmatprep.subr.mxu0 0.0
    %1818 = vmatpush1.xpose.msra.mxu0 0.0
    %1819 = vmatprep.subr.mxu0 0.0
    %1820 = vmatpush1.xpose.msra.mxu0 0.0
    %1821 = vmatprep.subr.mxu0 0.0
    %1822 = vmatpush1.xpose.msra.mxu0 0.0
    %1823 = vmatprep.subr.mxu0 0.0
    %1824 = vmatpush1.xpose.msra.mxu0 0.0
    %1825 = vmatprep.subr.mxu0 0.0
    %1826 = vmatpush1.xpose.msra.mxu0 0.0
    %1827 = vmatprep.subr.mxu0 0.0
    %1828 = vmatpush1.xpose.msra.mxu0 0.0
    %1829 = vmatprep.subr.mxu0 0.0
    %1830 = vmatpush1.xpose.msra.mxu0 0.0
    %1831 = vmatprep.subr.mxu0 0.0
    %1832 = vmatpush1.xpose.msra.mxu0 0.0
    %1833 = vmatprep.subr.mxu0 0.0
    %1834 = vmatpush1.xpose.msra.mxu0 0.0
    %1835 = vmatprep.subr.mxu0 0.0
    %1836 = vmatpush1.xpose.msra.mxu0 0.0
    %1837 = vmatprep.subr.mxu0 0.0
    %1838 = vmatpush1.xpose.msra.mxu0 0.0
    %1839 = vmatprep.subr.mxu0 0.0
    %1840 = vmatpush1.xpose.msra.mxu0 0.0
    %1841 = vmatprep.subr.mxu0 0.0
    %1842 = vmatpush1.xpose.msra.mxu0 0.0
    %1843 = vmatprep.subr.mxu0 0.0
    %1844 = vmatpush1.xpose.msra.mxu0 0.0
    %1845 = vmatprep.subr.mxu0 0.0
    %1846 = vmatpush1.xpose.msra.mxu0 0.0
    %1847 = vmatprep.subr.mxu0 0.0
    %1848 = vmatpush1.xpose.msra.mxu0 0.0
    %1849 = vmatprep.subr.mxu0 0.0
    %1850 = vmatpush1.xpose.msra.mxu0 0.0
    %1851 = vmatprep.subr.mxu0 0.0
    %1852 = vmatpush1.xpose.msra.mxu0 0.0
    %1853 = vmatprep.subr.mxu0 0.0
    %1854 = vmatpush1.xpose.msra.mxu0 0.0
    %1855 = vmatprep.subr.mxu0 0.0
    %1856 = vmatpush1.xpose.msra.mxu0 0.0
    %1857 = vmatprep.subr.mxu0 0.0
    %1858 = vmatpush1.xpose.msra.mxu0 0.0
    %1859 = vmatprep.subr.mxu0 0.0
    %1860 = vmatpush1.xpose.msra.mxu0 0.0
    %1861 = vmatprep.subr.mxu0 0.0
    %1862 = vmatpush1.xpose.msra.mxu0 0.0
    %1863 = vmatprep.subr.mxu0 0.0
    %1864 = vmatpush1.xpose.msra.mxu0 0.0
    %1865 = vmatprep.subr.mxu0 0.0
    %1866 = vmatpush1.xpose.msra.mxu0 0.0
    %1867 = vmatprep.mubr.f32.mxu0 0.0
    %1868 = vmatmul.mubr.f32.gmra.mrb[0].mxu0 %v1801
    %v1869 = vpop.f32.mrb[0].mxu0
    %v1870 = vadd.f32 0.0, %v1869
    %v1871 = vpop.f32.mrb[0].mxu0
    %1872 = vdwg.mxu0
    %v1873 = vsel %vm831, %v1798, -inf
    %v1874 = vrot.slane %v1873, 4
    %v1875 = vmax.f32 %v1873, %v1874
    %v1876 = vrot.slane %v1875, 2
    %v1877 = vmax.f32 %v1875, %v1876
    %v1878 = vrot.slane %v1877, 1
    %v1879 = vmax.f32 %v1877, %v1878
    %v1880 = vsel %vm831, %v1870, -inf
    %v1881 = vrot.slane %v1880, 4
    %v1882 = vmax.f32 %v1880, %v1881
    %v1883 = vrot.slane %v1882, 2
    %v1884 = vmax.f32 %v1882, %v1883
    %v1885 = vrot.slane %v1884, 1
    %v1886 = vmax.f32 %v1884, %v1885
    %v1887 = vsub.f32 %v1798, %v1879
    %v1888 = vsub.f32 %v1870, %v1886
    %v1889 = vmul.f32 %v1887, 1.442695
    %v1890 = vpow.pop %v1889
    %v1891 = vmul.f32 %v1888, 1.442695
    %v1892 = vpow.pop %v1891
    %v1893 = vsel %vm831, %v1890, 0.0
    %v1894 = vrot.slane %v1893, 4
    %v1895 = vadd.f32 %v1893, %v1894
    %v1896 = vrot.slane %v1895, 2
    %v1897 = vadd.f32 %v1895, %v1896
    %v1898 = vrot.slane %v1897, 1
    %v1899 = vadd.f32 %v1897, %v1898
    %v1900 = vsel %vm831, %v1892, 0.0
    %v1901 = vrot.slane %v1900, 4
    %v1902 = vadd.f32 %v1900, %v1901
    %v1903 = vrot.slane %v1902, 2
    %v1904 = vadd.f32 %v1902, %v1903
    %v1905 = vrot.slane %v1904, 1
    %v1906 = vadd.f32 %v1904, %v1905
    %v1907 = vrcp.pop %v1899
    %v1908 = vrcp.pop %v1906
    %v1909 = vmul.f32 %v1890, %v1907
    %v1910 = vmul.f32 %v1892, %v1908
    %v1911 = vadd.f32 %v1909, 1e-08
    %v1912 = vadd.f32 %v1910, 1e-08
    %v1913 = vsel %vm831, %v1911, 0.0
    %1914 = vadd.xlane.f32.xlu0 %v1913
    %v1915 = vpop.xlane.xlu0 %1914
    %v1916 = vsel %vm831, %v1912, 0.0
    %1917 = vadd.xlane.f32.xlu0 %v1916
    %v1918 = vpop.xlane.xlu0 %1917
    %v1919 = vrcp.pop %v1915
    %v1920 = vrcp.pop %v1918
    %v1921 = vmul.f32 %v1911, %v1919
    %v1922 = vmul.f32 %v1912, %v1920
    %v1924 = vsel %vm882, %v1921, 0
    %1926 = vmatprep.subr.mxu0 0.0
    %1927 = vmatpush1.msra.mxu0 %v507
    %1928 = vmatprep.subr.mxu0 0.0
    %1929 = vmatpush1.msra.mxu0 %v512
    %1930 = vmatprep.subr.mxu0 0.0
    %1931 = vmatpush1.msra.mxu0 0.0
    %1932 = vmatprep.subr.mxu0 0.0
    %1933 = vmatpush1.msra.mxu0 0.0
    %1934 = vmatprep.subr.mxu0 0.0
    %1935 = vmatpush1.msra.mxu0 0.0
    %1936 = vmatprep.subr.mxu0 0.0
    %1937 = vmatpush1.msra.mxu0 0.0
    %1938 = vmatprep.subr.mxu0 0.0
    %1939 = vmatpush1.msra.mxu0 0.0
    %1940 = vmatprep.subr.mxu0 0.0
    %1941 = vmatpush1.msra.mxu0 0.0
    %1942 = vmatprep.subr.mxu0 0.0
    %1943 = vmatpush1.msra.mxu0 0.0
    %1944 = vmatprep.subr.mxu0 0.0
    %1945 = vmatpush1.msra.mxu0 0.0
    %1946 = vmatprep.subr.mxu0 0.0
    %1947 = vmatpush1.msra.mxu0 0.0
    %1948 = vmatprep.subr.mxu0 0.0
    %1949 = vmatpush1.msra.mxu0 0.0
    %1950 = vmatprep.subr.mxu0 0.0
    %1951 = vmatpush1.msra.mxu0 0.0
    %1952 = vmatprep.subr.mxu0 0.0
    %1953 = vmatpush1.msra.mxu0 0.0
    %1954 = vmatprep.subr.mxu0 0.0
    %1955 = vmatpush1.msra.mxu0 0.0
    %1956 = vmatprep.subr.mxu0 0.0
    %1957 = vmatpush1.msra.mxu0 0.0
    %1958 = vmatprep.subr.mxu0 0.0
    %1959 = vmatpush1.msra.mxu0 0.0
    %1960 = vmatprep.subr.mxu0 0.0
    %1961 = vmatpush1.msra.mxu0 0.0
    %1962 = vmatprep.subr.mxu0 0.0
    %1963 = vmatpush1.msra.mxu0 0.0
    %1964 = vmatprep.subr.mxu0 0.0
    %1965 = vmatpush1.msra.mxu0 0.0
    %1966 = vmatprep.subr.mxu0 0.0
    %1967 = vmatpush1.msra.mxu0 0.0
    %1968 = vmatprep.subr.mxu0 0.0
    %1969 = vmatpush1.msra.mxu0 0.0
    %1970 = vmatprep.subr.mxu0 0.0
    %1971 = vmatpush1.msra.mxu0 0.0
    %1972 = vmatprep.subr.mxu0 0.0
    %1973 = vmatpush1.msra.mxu0 0.0
    %1974 = vmatprep.subr.mxu0 0.0
    %1975 = vmatpush1.msra.mxu0 0.0
    %1976 = vmatprep.subr.mxu0 0.0
    %1977 = vmatpush1.msra.mxu0 0.0
    %1978 = vmatprep.subr.mxu0 0.0
    %1979 = vmatpush1.msra.mxu0 0.0
    %1980 = vmatprep.subr.mxu0 0.0
    %1981 = vmatpush1.msra.mxu0 0.0
    %1982 = vmatprep.subr.mxu0 0.0
    %1983 = vmatpush1.msra.mxu0 0.0
    %1984 = vmatprep.subr.mxu0 0.0
    %1985 = vmatpush1.msra.mxu0 0.0
    %1986 = vmatprep.subr.mxu0 0.0
    %1987 = vmatpush1.msra.mxu0 0.0
    %1988 = vmatprep.subr.mxu0 0.0
    %1989 = vmatpush1.msra.mxu0 0.0
    %1990 = vmatprep.mubr.f32.mxu0 0.0
    %1991 = vmatmul.mubr.f32.gmra.mrb[0].mxu0 %v1924
    %v1992 = vpop.f32.mrb[0].mxu0
    %v1993 = vadd.f32 0.0, %v1992
    %v1994 = vpop.f32.mrb[0].mxu0
    %1995 = vdwg.mxu0
    %v1997 = vsel %vm882, %v1922, 0
    %1999 = vmatprep.subr.mxu0 0.0
    %2000 = vmatpush1.msra.mxu0 %v517
    %2001 = vmatprep.subr.mxu0 0.0
    %2002 = vmatpush1.msra.mxu0 %v522
    %2003 = vmatprep.subr.mxu0 0.0
    %2004 = vmatpush1.msra.mxu0 0.0
    %2005 = vmatprep.subr.mxu0 0.0
    %2006 = vmatpush1.msra.mxu0 0.0
    %2007 = vmatprep.subr.mxu0 0.0
    %2008 = vmatpush1.msra.mxu0 0.0
    %2009 = vmatprep.subr.mxu0 0.0
    %2010 = vmatpush1.msra.mxu0 0.0
    %2011 = vmatprep.subr.mxu0 0.0
    %2012 = vmatpush1.msra.mxu0 0.0
    %2013 = vmatprep.subr.mxu0 0.0
    %2014 = vmatpush1.msra.mxu0 0.0
    %2015 = vmatprep.subr.mxu0 0.0
    %2016 = vmatpush1.msra.mxu0 0.0
    %2017 = vmatprep.subr.mxu0 0.0
    %2018 = vmatpush1.msra.mxu0 0.0
    %2019 = vmatprep.subr.mxu0 0.0
    %2020 = vmatpush1.msra.mxu0 0.0
    %2021 = vmatprep.subr.mxu0 0.0
    %2022 = vmatpush1.msra.mxu0 0.0
    %2023 = vmatprep.subr.mxu0 0.0
    %2024 = vmatpush1.msra.mxu0 0.0
    %2025 = vmatprep.subr.mxu0 0.0
    %2026 = vmatpush1.msra.mxu0 0.0
    %2027 = vmatprep.subr.mxu0 0.0
    %2028 = vmatpush1.msra.mxu0 0.0
    %2029 = vmatprep.subr.mxu0 0.0
    %2030 = vmatpush1.msra.mxu0 0.0
    %2031 = vmatprep.subr.mxu0 0.0
    %2032 = vmatpush1.msra.mxu0 0.0
    %2033 = vmatprep.subr.mxu0 0.0
    %2034 = vmatpush1.msra.mxu0 0.0
    %2035 = vmatprep.subr.mxu0 0.0
    %2036 = vmatpush1.msra.mxu0 0.0
    %2037 = vmatprep.subr.mxu0 0.0
    %2038 = vmatpush1.msra.mxu0 0.0
    %2039 = vmatprep.subr.mxu0 0.0
    %2040 = vmatpush1.msra.mxu0 0.0
    %2041 = vmatprep.subr.mxu0 0.0
    %2042 = vmatpush1.msra.mxu0 0.0
    %2043 = vmatprep.subr.mxu0 0.0
    %2044 = vmatpush1.msra.mxu0 0.0
    %2045 = vmatprep.subr.mxu0 0.0
    %2046 = vmatpush1.msra.mxu0 0.0
    %2047 = vmatprep.subr.mxu0 0.0
    %2048 = vmatpush1.msra.mxu0 0.0
    %2049 = vmatprep.subr.mxu0 0.0
    %2050 = vmatpush1.msra.mxu0 0.0
    %2051 = vmatprep.subr.mxu0 0.0
    %2052 = vmatpush1.msra.mxu0 0.0
    %2053 = vmatprep.subr.mxu0 0.0
    %2054 = vmatpush1.msra.mxu0 0.0
    %2055 = vmatprep.subr.mxu0 0.0
    %2056 = vmatpush1.msra.mxu0 0.0
    %2057 = vmatprep.subr.mxu0 0.0
    %2058 = vmatpush1.msra.mxu0 0.0
    %2059 = vmatprep.subr.mxu0 0.0
    %2060 = vmatpush1.msra.mxu0 0.0
    %2061 = vmatprep.subr.mxu0 0.0
    %2062 = vmatpush1.msra.mxu0 0.0
    %2063 = vmatprep.mubr.f32.mxu0 0.0
    %2064 = vmatmul.mubr.f32.gmra.mrb[0].mxu0 %v1997
    %v2065 = vpop.f32.mrb[0].mxu0
    %v2066 = vadd.f32 0.0, %v2065
    %v2067 = vpop.f32.mrb[0].mxu0
    %2068 = vdwg.mxu0
    %v2071 = vcombine.low %v1993, %v2066
    %v2072 = vsel %vm531, %v2071, 0
    %2074 = vmatprep.subr.mxu0 0.0
    %2075 = vmatpush1.msra.mxu0 %v147
    %2076 = vmatprep.subr.mxu0 0.0
    %2077 = vmatpush1.msra.mxu0 %v148
    %2078 = vmatprep.subr.mxu0 0.0
    %2079 = vmatpush1.msra.mxu0 %v149
    %2080 = vmatprep.subr.mxu0 0.0
    %2081 = vmatpush1.msra.mxu0 %v150
    %2082 = vmatprep.subr.mxu0 0.0
    %2083 = vmatpush1.msra.mxu0 %v151
    %2084 = vmatprep.subr.mxu0 0.0
    %2085 = vmatpush1.msra.mxu0 %v152
    %2086 = vmatprep.subr.mxu0 0.0
    %2087 = vmatpush1.msra.mxu0 %v153
    %2088 = vmatprep.subr.mxu0 0.0
    %2089 = vmatpush1.msra.mxu0 %v154
    %2090 = vmatprep.subr.mxu0 0.0
    %2091 = vmatpush1.msra.mxu0 0.0
    %2092 = vmatprep.subr.mxu0 0.0
    %2093 = vmatpush1.msra.mxu0 0.0
    %2094 = vmatprep.subr.mxu0 0.0
    %2095 = vmatpush1.msra.mxu0 0.0
    %2096 = vmatprep.subr.mxu0 0.0
    %2097 = vmatpush1.msra.mxu0 0.0
    %2098 = vmatprep.subr.mxu0 0.0
    %2099 = vmatpush1.msra.mxu0 0.0
    %2100 = vmatprep.subr.mxu0 0.0
    %2101 = vmatpush1.msra.mxu0 0.0
    %2102 = vmatprep.subr.mxu0 0.0
    %2103 = vmatpush1.msra.mxu0 0.0
    %2104 = vmatprep.subr.mxu0 0.0
    %2105 = vmatpush1.msra.mxu0 0.0
    %2106 = vmatprep.subr.mxu0 0.0
    %2107 = vmatpush1.msra.mxu0 0.0
    %2108 = vmatprep.subr.mxu0 0.0
    %2109 = vmatpush1.msra.mxu0 0.0
    %2110 = vmatprep.subr.mxu0 0.0
    %2111 = vmatpush1.msra.mxu0 0.0
    %2112 = vmatprep.subr.mxu0 0.0
    %2113 = vmatpush1.msra.mxu0 0.0
    %2114 = vmatprep.subr.mxu0 0.0
    %2115 = vmatpush1.msra.mxu0 0.0
    %2116 = vmatprep.subr.mxu0 0.0
    %2117 = vmatpush1.msra.mxu0 0.0
    %2118 = vmatprep.subr.mxu0 0.0
    %2119 = vmatpush1.msra.mxu0 0.0
    %2120 = vmatprep.subr.mxu0 0.0
    %2121 = vmatpush1.msra.mxu0 0.0
    %2122 = vmatprep.subr.mxu0 0.0
    %2123 = vmatpush1.msra.mxu0 0.0
    %2124 = vmatprep.subr.mxu0 0.0
    %2125 = vmatpush1.msra.mxu0 0.0
    %2126 = vmatprep.subr.mxu0 0.0
    %2127 = vmatpush1.msra.mxu0 0.0
    %2128 = vmatprep.subr.mxu0 0.0
    %2129 = vmatpush1.msra.mxu0 0.0
    %2130 = vmatprep.subr.mxu0 0.0
    %2131 = vmatpush1.msra.mxu0 0.0
    %2132 = vmatprep.subr.mxu0 0.0
    %2133 = vmatpush1.msra.mxu0 0.0
    %2134 = vmatprep.subr.mxu0 0.0
    %2135 = vmatpush1.msra.mxu0 0.0
    %2136 = vmatprep.subr.mxu0 0.0
    %2137 = vmatpush1.msra.mxu0 0.0
    %2138 = vmatprep.mubr.f32.mxu0 0.0
    %2139 = vmatmul.mubr.f32.gmra.mrb[0].mxu0 %v2072
    %v2140 = vpop.f32.mrb[0].mxu0
    %v2141 = vadd.f32 %v240, %v2140
    %v2142 = vpop.f32.mrb[0].mxu0
    %2143 = vdwg.mxu0
    %2144 = vmatprep.subr.mxu0 0.0
    %2145 = vmatpush1.msra.mxu0 %v155
    %2146 = vmatprep.subr.mxu0 0.0
    %2147 = vmatpush1.msra.mxu0 %v156
    %2148 = vmatprep.subr.mxu0 0.0
    %2149 = vmatpush1.msra.mxu0 %v157
    %2150 = vmatprep.subr.mxu0 0.0
    %2151 = vmatpush1.msra.mxu0 %v158
    %2152 = vmatprep.subr.mxu0 0.0
    %2153 = vmatpush1.msra.mxu0 %v159
    %2154 = vmatprep.subr.mxu0 0.0
    %2155 = vmatpush1.msra.mxu0 %v160
    %2156 = vmatprep.subr.mxu0 0.0
    %2157 = vmatpush1.msra.mxu0 %v161
    %2158 = vmatprep.subr.mxu0 0.0
    %2159 = vmatpush1.msra.mxu0 %v162
    %2160 = vmatprep.subr.mxu0 0.0
    %2161 = vmatpush1.msra.mxu0 0.0
    %2162 = vmatprep.subr.mxu0 0.0
    %2163 = vmatpush1.msra.mxu0 0.0
    %2164 = vmatprep.subr.mxu0 0.0
    %2165 = vmatpush1.msra.mxu0 0.0
    %2166 = vmatprep.subr.mxu0 0.0
    %2167 = vmatpush1.msra.mxu0 0.0
    %2168 = vmatprep.subr.mxu0 0.0
    %2169 = vmatpush1.msra.mxu0 0.0
    %2170 = vmatprep.subr.mxu0 0.0
    %2171 = vmatpush1.msra.mxu0 0.0
    %2172 = vmatprep.subr.mxu0 0.0
    %2173 = vmatpush1.msra.mxu0 0.0
    %2174 = vmatprep.subr.mxu0 0.0
    %2175 = vmatpush1.msra.mxu0 0.0
    %2176 = vmatprep.subr.mxu0 0.0
    %2177 = vmatpush1.msra.mxu0 0.0
    %2178 = vmatprep.subr.mxu0 0.0
    %2179 = vmatpush1.msra.mxu0 0.0
    %2180 = vmatprep.subr.mxu0 0.0
    %2181 = vmatpush1.msra.mxu0 0.0
    %2182 = vmatprep.subr.mxu0 0.0
    %2183 = vmatpush1.msra.mxu0 0.0
    %2184 = vmatprep.subr.mxu0 0.0
    %2185 = vmatpush1.msra.mxu0 0.0
    %2186 = vmatprep.subr.mxu0 0.0
    %2187 = vmatpush1.msra.mxu0 0.0
    %2188 = vmatprep.subr.mxu0 0.0
    %2189 = vmatpush1.msra.mxu0 0.0
    %2190 = vmatprep.subr.mxu0 0.0
    %2191 = vmatpush1.msra.mxu0 0.0
    %2192 = vmatprep.subr.mxu0 0.0
    %2193 = vmatpush1.msra.mxu0 0.0
    %2194 = vmatprep.subr.mxu0 0.0
    %2195 = vmatpush1.msra.mxu0 0.0
    %2196 = vmatprep.subr.mxu0 0.0
    %2197 = vmatpush1.msra.mxu0 0.0
    %2198 = vmatprep.subr.mxu0 0.0
    %2199 = vmatpush1.msra.mxu0 0.0
    %2200 = vmatprep.subr.mxu0 0.0
    %2201 = vmatpush1.msra.mxu0 0.0
    %2202 = vmatprep.subr.mxu0 0.0
    %2203 = vmatpush1.msra.mxu0 0.0
    %2204 = vmatprep.subr.mxu0 0.0
    %2205 = vmatpush1.msra.mxu0 0.0
    %2206 = vmatprep.subr.mxu0 0.0
    %2207 = vmatpush1.msra.mxu0 0.0
    %2208 = vmatprep.mubr.f32.mxu0 0.0
    %2209 = vmatmul.mubr.f32.gmra.mrb[0].mxu0 %v2072
    %v2210 = vpop.f32.mrb[0].mxu0
    %v2211 = vadd.f32 %v244, %v2210
    %v2212 = vpop.f32.mrb[0].mxu0
    %2213 = vdwg.mxu0
    %2214 = vmatprep.subr.mxu0 0.0
    %2215 = vmatpush1.msra.mxu0 %v163
    %2216 = vmatprep.subr.mxu0 0.0
    %2217 = vmatpush1.msra.mxu0 %v164
    %2218 = vmatprep.subr.mxu0 0.0
    %2219 = vmatpush1.msra.mxu0 %v165
    %2220 = vmatprep.subr.mxu0 0.0
    %2221 = vmatpush1.msra.mxu0 %v166
    %2222 = vmatprep.subr.mxu0 0.0
    %2223 = vmatpush1.msra.mxu0 %v167
    %2224 = vmatprep.subr.mxu0 0.0
    %2225 = vmatpush1.msra.mxu0 %v168
    %2226 = vmatprep.subr.mxu0 0.0
    %2227 = vmatpush1.msra.mxu0 %v169
    %2228 = vmatprep.subr.mxu0 0.0
    %2229 = vmatpush1.msra.mxu0 %v170
    %2230 = vmatprep.subr.mxu0 0.0
    %2231 = vmatpush1.msra.mxu0 0.0
    %2232 = vmatprep.subr.mxu0 0.0
    %2233 = vmatpush1.msra.mxu0 0.0
    %2234 = vmatprep.subr.mxu0 0.0
    %2235 = vmatpush1.msra.mxu0 0.0
    %2236 = vmatprep.subr.mxu0 0.0
    %2237 = vmatpush1.msra.mxu0 0.0
    %2238 = vmatprep.subr.mxu0 0.0
    %2239 = vmatpush1.msra.mxu0 0.0
    %2240 = vmatprep.subr.mxu0 0.0
    %2241 = vmatpush1.msra.mxu0 0.0
    %2242 = vmatprep.subr.mxu0 0.0
    %2243 = vmatpush1.msra.mxu0 0.0
    %2244 = vmatprep.subr.mxu0 0.0
    %2245 = vmatpush1.msra.mxu0 0.0
    %2246 = vmatprep.subr.mxu0 0.0
    %2247 = vmatpush1.msra.mxu0 0.0
    %2248 = vmatprep.subr.mxu0 0.0
    %2249 = vmatpush1.msra.mxu0 0.0
    %2250 = vmatprep.subr.mxu0 0.0
    %2251 = vmatpush1.msra.mxu0 0.0
    %2252 = vmatprep.subr.mxu0 0.0
    %2253 = vmatpush1.msra.mxu0 0.0
    %2254 = vmatprep.subr.mxu0 0.0
    %2255 = vmatpush1.msra.mxu0 0.0
    %2256 = vmatprep.subr.mxu0 0.0
    %2257 = vmatpush1.msra.mxu0 0.0
    %2258 = vmatprep.subr.mxu0 0.0
    %2259 = vmatpush1.msra.mxu0 0.0
    %2260 = vmatprep.subr.mxu0 0.0
    %2261 = vmatpush1.msra.mxu0 0.0
    %2262 = vmatprep.subr.mxu0 0.0
    %2263 = vmatpush1.msra.mxu0 0.0
    %2264 = vmatprep.subr.mxu0 0.0
    %2265 = vmatpush1.msra.mxu0 0.0
    %2266 = vmatprep.subr.mxu0 0.0
    %2267 = vmatpush1.msra.mxu0 0.0
    %2268 = vmatprep.subr.mxu0 0.0
    %2269 = vmatpush1.msra.mxu0 0.0
    %2270 = vmatprep.subr.mxu0 0.0
    %2271 = vmatpush1.msra.mxu0 0.0
    %2272 = vmatprep.subr.mxu0 0.0
    %2273 = vmatpush1.msra.mxu0 0.0
    %2274 = vmatprep.subr.mxu0 0.0
    %2275 = vmatpush1.msra.mxu0 0.0
    %2276 = vmatprep.subr.mxu0 0.0
    %2277 = vmatpush1.msra.mxu0 0.0
    %2278 = vmatprep.mubr.f32.mxu0 0.0
    %2279 = vmatmul.mubr.f32.gmra.mrb[0].mxu0 %v2072
    %v2280 = vpop.f32.mrb[0].mxu0
    %v2281 = vadd.f32 %v248, %v2280
    %v2282 = vpop.f32.mrb[0].mxu0
    %2283 = vdwg.mxu0
    %v2285 = vsel %vm531, %v1637, 0
    %2287 = vmatprep.subr.mxu0 0.0
    %2288 = vmatpush1.msra.mxu0 %v171
    %2289 = vmatprep.subr.mxu0 0.0
    %2290 = vmatpush1.msra.mxu0 %v172
    %2291 = vmatprep.subr.mxu0 0.0
    %2292 = vmatpush1.msra.mxu0 %v173
    %2293 = vmatprep.subr.mxu0 0.0
    %2294 = vmatpush1.msra.mxu0 %v174
    %2295 = vmatprep.subr.mxu0 0.0
    %2296 = vmatpush1.msra.mxu0 %v175
    %2297 = vmatprep.subr.mxu0 0.0
    %2298 = vmatpush1.msra.mxu0 %v176
    %2299 = vmatprep.subr.mxu0 0.0
    %2300 = vmatpush1.msra.mxu0 %v177
    %2301 = vmatprep.subr.mxu0 0.0
    %2302 = vmatpush1.msra.mxu0 %v178
    %2303 = vmatprep.subr.mxu0 0.0
    %2304 = vmatpush1.msra.mxu0 0.0
    %2305 = vmatprep.subr.mxu0 0.0
    %2306 = vmatpush1.msra.mxu0 0.0
    %2307 = vmatprep.subr.mxu0 0.0
    %2308 = vmatpush1.msra.mxu0 0.0
    %2309 = vmatprep.subr.mxu0 0.0
    %2310 = vmatpush1.msra.mxu0 0.0
    %2311 = vmatprep.subr.mxu0 0.0
    %2312 = vmatpush1.msra.mxu0 0.0
    %2313 = vmatprep.subr.mxu0 0.0
    %2314 = vmatpush1.msra.mxu0 0.0
    %2315 = vmatprep.subr.mxu0 0.0
    %2316 = vmatpush1.msra.mxu0 0.0
    %2317 = vmatprep.subr.mxu0 0.0
    %2318 = vmatpush1.msra.mxu0 0.0
    %2319 = vmatprep.subr.mxu0 0.0
    %2320 = vmatpush1.msra.mxu0 0.0
    %2321 = vmatprep.subr.mxu0 0.0
    %2322 = vmatpush1.msra.mxu0 0.0
    %2323 = vmatprep.subr.mxu0 0.0
    %2324 = vmatpush1.msra.mxu0 0.0
    %2325 = vmatprep.subr.mxu0 0.0
    %2326 = vmatpush1.msra.mxu0 0.0
    %2327 = vmatprep.subr.mxu0 0.0
    %2328 = vmatpush1.msra.mxu0 0.0
    %2329 = vmatprep.subr.mxu0 0.0
    %2330 = vmatpush1.msra.mxu0 0.0
    %2331 = vmatprep.subr.mxu0 0.0
    %2332 = vmatpush1.msra.mxu0 0.0
    %2333 = vmatprep.subr.mxu0 0.0
    %2334 = vmatpush1.msra.mxu0 0.0
    %2335 = vmatprep.subr.mxu0 0.0
    %2336 = vmatpush1.msra.mxu0 0.0
    %2337 = vmatprep.subr.mxu0 0.0
    %2338 = vmatpush1.msra.mxu0 0.0
    %2339 = vmatprep.subr.mxu0 0.0
    %2340 = vmatpush1.msra.mxu0 0.0
    %2341 = vmatprep.subr.mxu0 0.0
    %2342 = vmatpush1.msra.mxu0 0.0
    %2343 = vmatprep.subr.mxu0 0.0
    %2344 = vmatpush1.msra.mxu0 0.0
    %2345 = vmatprep.subr.mxu0 0.0
    %2346 = vmatpush1.msra.mxu0 0.0
    %2347 = vmatprep.subr.mxu0 0.0
    %2348 = vmatpush1.msra.mxu0 0.0
    %2349 = vmatprep.subr.mxu0 0.0
    %2350 = vmatpush1.msra.mxu0 0.0
    %2351 = vmatprep.mubr.f32.mxu0 0.0
    %2352 = vmatmul.mubr.f32.gmra.mrb[0].mxu0 %v2285
    %v2353 = vpop.f32.mrb[0].mxu0
    %v2354 = vadd.f32 %v252, %v2353
    %v2355 = vpop.f32.mrb[0].mxu0
    %2356 = vdwg.mxu0
    %2357 = vmatprep.subr.mxu0 0.0
    %2358 = vmatpush1.msra.mxu0 %v179
    %2359 = vmatprep.subr.mxu0 0.0
    %2360 = vmatpush1.msra.mxu0 %v180
    %2361 = vmatprep.subr.mxu0 0.0
    %2362 = vmatpush1.msra.mxu0 %v181
    %2363 = vmatprep.subr.mxu0 0.0
    %2364 = vmatpush1.msra.mxu0 %v182
    %2365 = vmatprep.subr.mxu0 0.0
    %2366 = vmatpush1.msra.mxu0 %v183
    %2367 = vmatprep.subr.mxu0 0.0
    %2368 = vmatpush1.msra.mxu0 %v184
    %2369 = vmatprep.subr.mxu0 0.0
    %2370 = vmatpush1.msra.mxu0 %v185
    %2371 = vmatprep.subr.mxu0 0.0
    %2372 = vmatpush1.msra.mxu0 %v186
    %2373 = vmatprep.subr.mxu0 0.0
    %2374 = vmatpush1.msra.mxu0 0.0
    %2375 = vmatprep.subr.mxu0 0.0
    %2376 = vmatpush1.msra.mxu0 0.0
    %2377 = vmatprep.subr.mxu0 0.0
    %2378 = vmatpush1.msra.mxu0 0.0
    %2379 = vmatprep.subr.mxu0 0.0
    %2380 = vmatpush1.msra.mxu0 0.0
    %2381 = vmatprep.subr.mxu0 0.0
    %2382 = vmatpush1.msra.mxu0 0.0
    %2383 = vmatprep.subr.mxu0 0.0
    %2384 = vmatpush1.msra.mxu0 0.0
    %2385 = vmatprep.subr.mxu0 0.0
    %2386 = vmatpush1.msra.mxu0 0.0
    %2387 = vmatprep.subr.mxu0 0.0
    %2388 = vmatpush1.msra.mxu0 0.0
    %2389 = vmatprep.subr.mxu0 0.0
    %2390 = vmatpush1.msra.mxu0 0.0
    %2391 = vmatprep.subr.mxu0 0.0
    %2392 = vmatpush1.msra.mxu0 0.0
    %2393 = vmatprep.subr.mxu0 0.0
    %2394 = vmatpush1.msra.mxu0 0.0
    %2395 = vmatprep.subr.mxu0 0.0
    %2396 = vmatpush1.msra.mxu0 0.0
    %2397 = vmatprep.subr.mxu0 0.0
    %2398 = vmatpush1.msra.mxu0 0.0
    %2399 = vmatprep.subr.mxu0 0.0
    %2400 = vmatpush1.msra.mxu0 0.0
    %2401 = vmatprep.subr.mxu0 0.0
    %2402 = vmatpush1.msra.mxu0 0.0
    %2403 = vmatprep.subr.mxu0 0.0
    %2404 = vmatpush1.msra.mxu0 0.0
    %2405 = vmatprep.subr.mxu0 0.0
    %2406 = vmatpush1.msra.mxu0 0.0
    %2407 = vmatprep.subr.mxu0 0.0
    %2408 = vmatpush1.msra.mxu0 0.0
    %2409 = vmatprep.subr.mxu0 0.0
    %2410 = vmatpush1.msra.mxu0 0.0
    %2411 = vmatprep.subr.mxu0 0.0
    %2412 = vmatpush1.msra.mxu0 0.0
    %2413 = vmatprep.subr.mxu0 0.0
    %2414 = vmatpush1.msra.mxu0 0.0
    %2415 = vmatprep.subr.mxu0 0.0
    %2416 = vmatpush1.msra.mxu0 0.0
    %2417 = vmatprep.subr.mxu0 0.0
    %2418 = vmatpush1.msra.mxu0 0.0
    %2419 = vmatprep.subr.mxu0 0.0
    %2420 = vmatpush1.msra.mxu0 0.0
    %2421 = vmatprep.mubr.f32.mxu0 0.0
    %2422 = vmatmul.mubr.f32.gmra.mrb[0].mxu0 %v2285
    %v2423 = vpop.f32.mrb[0].mxu0
    %v2424 = vadd.f32 %v256, %v2423
    %v2425 = vpop.f32.mrb[0].mxu0
    %2426 = vdwg.mxu0
    %2427 = vmatprep.subr.mxu0 0.0
    %2428 = vmatpush1.msra.mxu0 %v187
    %2429 = vmatprep.subr.mxu0 0.0
    %2430 = vmatpush1.msra.mxu0 %v188
    %2431 = vmatprep.subr.mxu0 0.0
    %2432 = vmatpush1.msra.mxu0 %v189
    %2433 = vmatprep.subr.mxu0 0.0
    %2434 = vmatpush1.msra.mxu0 %v190
    %2435 = vmatprep.subr.mxu0 0.0
    %2436 = vmatpush1.msra.mxu0 %v191
    %2437 = vmatprep.subr.mxu0 0.0
    %2438 = vmatpush1.msra.mxu0 %v192
    %2439 = vmatprep.subr.mxu0 0.0
    %2440 = vmatpush1.msra.mxu0 %v193
    %2441 = vmatprep.subr.mxu0 0.0
    %2442 = vmatpush1.msra.mxu0 %v194
    %2443 = vmatprep.subr.mxu0 0.0
    %2444 = vmatpush1.msra.mxu0 0.0
    %2445 = vmatprep.subr.mxu0 0.0
    %2446 = vmatpush1.msra.mxu0 0.0
    %2447 = vmatprep.subr.mxu0 0.0
    %2448 = vmatpush1.msra.mxu0 0.0
    %2449 = vmatprep.subr.mxu0 0.0
    %2450 = vmatpush1.msra.mxu0 0.0
    %2451 = vmatprep.subr.mxu0 0.0
    %2452 = vmatpush1.msra.mxu0 0.0
    %2453 = vmatprep.subr.mxu0 0.0
    %2454 = vmatpush1.msra.mxu0 0.0
    %2455 = vmatprep.subr.mxu0 0.0
    %2456 = vmatpush1.msra.mxu0 0.0
    %2457 = vmatprep.subr.mxu0 0.0
    %2458 = vmatpush1.msra.mxu0 0.0
    %2459 = vmatprep.subr.mxu0 0.0
    %2460 = vmatpush1.msra.mxu0 0.0
    %2461 = vmatprep.subr.mxu0 0.0
    %2462 = vmatpush1.msra.mxu0 0.0
    %2463 = vmatprep.subr.mxu0 0.0
    %2464 = vmatpush1.msra.mxu0 0.0
    %2465 = vmatprep.subr.mxu0 0.0
    %2466 = vmatpush1.msra.mxu0 0.0
    %2467 = vmatprep.subr.mxu0 0.0
    %2468 = vmatpush1.msra.mxu0 0.0
    %2469 = vmatprep.subr.mxu0 0.0
    %2470 = vmatpush1.msra.mxu0 0.0
    %2471 = vmatprep.subr.mxu0 0.0
    %2472 = vmatpush1.msra.mxu0 0.0
    %2473 = vmatprep.subr.mxu0 0.0
    %2474 = vmatpush1.msra.mxu0 0.0
    %2475 = vmatprep.subr.mxu0 0.0
    %2476 = vmatpush1.msra.mxu0 0.0
    %2477 = vmatprep.subr.mxu0 0.0
    %2478 = vmatpush1.msra.mxu0 0.0
    %2479 = vmatprep.subr.mxu0 0.0
    %2480 = vmatpush1.msra.mxu0 0.0
    %2481 = vmatprep.subr.mxu0 0.0
    %2482 = vmatpush1.msra.mxu0 0.0
    %2483 = vmatprep.subr.mxu0 0.0
    %2484 = vmatpush1.msra.mxu0 0.0
    %2485 = vmatprep.subr.mxu0 0.0
    %2486 = vmatpush1.msra.mxu0 0.0
    %2487 = vmatprep.subr.mxu0 0.0
    %2488 = vmatpush1.msra.mxu0 0.0
    %2489 = vmatprep.subr.mxu0 0.0
    %2490 = vmatpush1.msra.mxu0 0.0
    %2491 = vmatprep.mubr.f32.mxu0 0.0
    %2492 = vmatmul.mubr.f32.gmra.mrb[0].mxu0 %v2285
    %v2493 = vpop.f32.mrb[0].mxu0
    %v2494 = vadd.f32 %v260, %v2493
    %v2495 = vpop.f32.mrb[0].mxu0
    %2496 = vdwg.mxu0
    %v2497 = vadd.f32 %v2141, %v2354
    %v2498 = vxor.u32 %v2497, 2147483648
    %v2499 = vmul.f32 %v2498, 1.442695
    %v2500 = vpow.pop %v2499
    %v2501 = vadd.f32 %v2500, 1.0
    %v2502 = vrcp.pop %v2501
    %v2503 = vmul.f32 1.0, %v2502
    %v2504 = vadd.f32 %v2211, %v2424
    %v2505 = vxor.u32 %v2504, 2147483648
    %v2506 = vmul.f32 %v2505, 1.442695
    %v2507 = vpow.pop %v2506
    %v2508 = vadd.f32 %v2507, 1.0
    %v2509 = vrcp.pop %v2508
    %v2510 = vmul.f32 1.0, %v2509
    %v2511 = vmul.f32 %v2503, %v2494
    %v2512 = vadd.f32 %v2281, %v2511
    %v2513 = vtanh.pop %v2512
    %v2514 = vsub.f32 1.0, %v2510
    %v2515 = vmul.f32 %v2514, %v2513
    %v2516 = vmul.f32 %v2510, %v1637
    %v2517 = vadd.f32 %v2515, %v2516
    %v2518 = vsel %vm531, %v2517, 0.0
    %2519 = vadd.xlane.f32.xlu0 %v2518
    %v2520 = vpop.xlane.xlu0 %2519
    %v2521 = vmul.f32 %v2520, %v535
    %v2522 = vsub.f32 %v2517, %v2521
    %v2523 = vmul.f32 %v2522, %v2522
    %v2524 = vsel %vm531, %v2523, 0.0
    %2525 = vadd.xlane.f32.xlu0 %v2524
    %v2526 = vpop.xlane.xlu0 %2525
    %v2527 = vmul.f32 %v2526, %v535
    %v2528 = vadd.f32 %v2527, 1e-05
    %v2529 = vrsqrt.pop %v2528
    %v2530 = vmul.f32 %v2522, %v2529
    %v2531 = vmul.f32 %v2530, %v232
    %v2532 = vadd.f32 %v2531, %v236
    %v2534 = vsel %vm531, %v2532, 0
    %2536 = vmatprep.subr.mxu0 0.0
    %2537 = vmatpush1.msra.mxu0 %v195
    %2538 = vmatprep.subr.mxu0 0.0
    %2539 = vmatpush1.msra.mxu0 %v196
    %2540 = vmatprep.subr.mxu0 0.0
    %2541 = vmatpush1.msra.mxu0 %v197
    %2542 = vmatprep.subr.mxu0 0.0
    %2543 = vmatpush1.msra.mxu0 %v198
    %2544 = vmatprep.subr.mxu0 0.0
    %2545 = vmatpush1.msra.mxu0 %v199
    %2546 = vmatprep.subr.mxu0 0.0
    %2547 = vmatpush1.msra.mxu0 %v200
    %2548 = vmatprep.subr.mxu0 0.0
    %2549 = vmatpush1.msra.mxu0 %v201
    %2550 = vmatprep.subr.mxu0 0.0
    %2551 = vmatpush1.msra.mxu0 %v202
    %2552 = vmatprep.subr.mxu0 0.0
    %2553 = vmatpush1.msra.mxu0 0.0
    %2554 = vmatprep.subr.mxu0 0.0
    %2555 = vmatpush1.msra.mxu0 0.0
    %2556 = vmatprep.subr.mxu0 0.0
    %2557 = vmatpush1.msra.mxu0 0.0
    %2558 = vmatprep.subr.mxu0 0.0
    %2559 = vmatpush1.msra.mxu0 0.0
    %2560 = vmatprep.subr.mxu0 0.0
    %2561 = vmatpush1.msra.mxu0 0.0
    %2562 = vmatprep.subr.mxu0 0.0
    %2563 = vmatpush1.msra.mxu0 0.0
    %2564 = vmatprep.subr.mxu0 0.0
    %2565 = vmatpush1.msra.mxu0 0.0
    %2566 = vmatprep.subr.mxu0 0.0
    %2567 = vmatpush1.msra.mxu0 0.0
    %2568 = vmatprep.subr.mxu0 0.0
    %2569 = vmatpush1.msra.mxu0 0.0
    %2570 = vmatprep.subr.mxu0 0.0
    %2571 = vmatpush1.msra.mxu0 0.0
    %2572 = vmatprep.subr.mxu0 0.0
    %2573 = vmatpush1.msra.mxu0 0.0
    %2574 = vmatprep.subr.mxu0 0.0
    %2575 = vmatpush1.msra.mxu0 0.0
    %2576 = vmatprep.subr.mxu0 0.0
    %2577 = vmatpush1.msra.mxu0 0.0
    %2578 = vmatprep.subr.mxu0 0.0
    %2579 = vmatpush1.msra.mxu0 0.0
    %2580 = vmatprep.subr.mxu0 0.0
    %2581 = vmatpush1.msra.mxu0 0.0
    %2582 = vmatprep.subr.mxu0 0.0
    %2583 = vmatpush1.msra.mxu0 0.0
    %2584 = vmatprep.subr.mxu0 0.0
    %2585 = vmatpush1.msra.mxu0 0.0
    %2586 = vmatprep.subr.mxu0 0.0
    %2587 = vmatpush1.msra.mxu0 0.0
    %2588 = vmatprep.subr.mxu0 0.0
    %2589 = vmatpush1.msra.mxu0 0.0
    %2590 = vmatprep.subr.mxu0 0.0
    %2591 = vmatpush1.msra.mxu0 0.0
    %2592 = vmatprep.subr.mxu0 0.0
    %2593 = vmatpush1.msra.mxu0 0.0
    %2594 = vmatprep.subr.mxu0 0.0
    %2595 = vmatpush1.msra.mxu0 0.0
    %2596 = vmatprep.subr.mxu0 0.0
    %2597 = vmatpush1.msra.mxu0 0.0
    %2598 = vmatprep.subr.mxu0 0.0
    %2599 = vmatpush1.msra.mxu0 0.0
    %2600 = vmatprep.mubr.f32.mxu0 0.0
    %2601 = vmatmul.mubr.f32.gmra.mrb[0].mxu0 %v2534
    %v2602 = vpop.f32.mrb[0].mxu0
    %v2603 = vadd.f32 %v264, %v2602
    %v2604 = vpop.f32.mrb[0].mxu0
    %2605 = vdwg.mxu0
    %v2606 = vmax.f32 %v2603, 0.0
    %2607 = vmatprep.subr.mxu0 0.0
    %2608 = vmatpush1.msra.mxu0 %v203
    %2609 = vmatprep.subr.mxu0 0.0
    %2610 = vmatpush1.msra.mxu0 %v204
    %2611 = vmatprep.subr.mxu0 0.0
    %2612 = vmatpush1.msra.mxu0 %v205
    %2613 = vmatprep.subr.mxu0 0.0
    %2614 = vmatpush1.msra.mxu0 %v206
    %2615 = vmatprep.subr.mxu0 0.0
    %2616 = vmatpush1.msra.mxu0 %v207
    %2617 = vmatprep.subr.mxu0 0.0
    %2618 = vmatpush1.msra.mxu0 %v208
    %2619 = vmatprep.subr.mxu0 0.0
    %2620 = vmatpush1.msra.mxu0 %v209
    %2621 = vmatprep.subr.mxu0 0.0
    %2622 = vmatpush1.msra.mxu0 %v210
    %2623 = vmatprep.subr.mxu0 0.0
    %2624 = vmatpush1.msra.mxu0 %v211
    %2625 = vmatprep.subr.mxu0 0.0
    %2626 = vmatpush1.msra.mxu0 %v212
    %2627 = vmatprep.subr.mxu0 0.0
    %2628 = vmatpush1.msra.mxu0 %v213
    %2629 = vmatprep.subr.mxu0 0.0
    %2630 = vmatpush1.msra.mxu0 %v214
    %2631 = vmatprep.subr.mxu0 0.0
    %2632 = vmatpush1.msra.mxu0 %v215
    %2633 = vmatprep.subr.mxu0 0.0
    %2634 = vmatpush1.msra.mxu0 %v216
    %2635 = vmatprep.subr.mxu0 0.0
    %2636 = vmatpush1.msra.mxu0 %v217
    %2637 = vmatprep.subr.mxu0 0.0
    %2638 = vmatpush1.msra.mxu0 %v218
    %2639 = vmatprep.subr.mxu0 0.0
    %2640 = vmatpush1.msra.mxu0 0.0
    %2641 = vmatprep.subr.mxu0 0.0
    %2642 = vmatpush1.msra.mxu0 0.0
    %2643 = vmatprep.subr.mxu0 0.0
    %2644 = vmatpush1.msra.mxu0 0.0
    %2645 = vmatprep.subr.mxu0 0.0
    %2646 = vmatpush1.msra.mxu0 0.0
    %2647 = vmatprep.subr.mxu0 0.0
    %2648 = vmatpush1.msra.mxu0 0.0
    %2649 = vmatprep.subr.mxu0 0.0
    %2650 = vmatpush1.msra.mxu0 0.0
    %2651 = vmatprep.subr.mxu0 0.0
    %2652 = vmatpush1.msra.mxu0 0.0
    %2653 = vmatprep.subr.mxu0 0.0
    %2654 = vmatpush1.msra.mxu0 0.0
    %2655 = vmatprep.subr.mxu0 0.0
    %2656 = vmatpush1.msra.mxu0 0.0
    %2657 = vmatprep.subr.mxu0 0.0
    %2658 = vmatpush1.msra.mxu0 0.0
    %2659 = vmatprep.subr.mxu0 0.0
    %2660 = vmatpush1.msra.mxu0 0.0
    %2661 = vmatprep.subr.mxu0 0.0
    %2662 = vmatpush1.msra.mxu0 0.0
    %2663 = vmatprep.subr.mxu0 0.0
    %2664 = vmatpush1.msra.mxu0 0.0
    %2665 = vmatprep.subr.mxu0 0.0
    %2666 = vmatpush1.msra.mxu0 0.0
    %2667 = vmatprep.subr.mxu0 0.0
    %2668 = vmatpush1.msra.mxu0 0.0
    %2669 = vmatprep.subr.mxu0 0.0
    %2670 = vmatpush1.msra.mxu0 0.0
    %2671 = vmatprep.mubr.f32.mxu0 0.0
    %2672 = vmatmul.mubr.f32.gmra.mrb[0].mxu0 %v2606
    %v2673 = vpop.f32.mrb[0].mxu0
    %v2674 = vadd.f32 0.0, %v2673
    %v2675 = vpop.f32.mrb[0].mxu0
    %2676 = vdwg.mxu0
    %v2677 = vadd.f32 %v2517, %v2674
    %v2678 = vadd.f32 %v2677, %v268
    %v2679 = vsel %vm531, %v2678, 0.0
    %2680 = vadd.xlane.f32.xlu0 %v2679
    %v2681 = vpop.xlane.xlu0 %2680
    %v2682 = vmul.f32 %v2681, %v535
    %v2683 = vsub.f32 %v2678, %v2682
    %v2684 = vmul.f32 %v2683, %v2683
    %v2685 = vsel %vm531, %v2684, 0.0
    %2686 = vadd.xlane.f32.xlu0 %v2685
    %v2687 = vpop.xlane.xlu0 %2686
    %v2688 = vmul.f32 %v2687, %v535
    %v2689 = vadd.f32 %v2688, 1e-05
    %v2690 = vrsqrt.pop %v2689
    %v2691 = vmul.f32 %v2683, %v2690
    %v2692 = vmul.f32 %v2691, %v224
    %v2693 = vadd.f32 %v2692, %v228
    %v2695 = vsel %vm531, %v2693, 0
    %2697 = vmatprep.subr.mxu0 0.0
    %2698 = vmatpush1.msra.mxu0 %v139
    %2699 = vmatprep.subr.mxu0 0.0
    %2700 = vmatpush1.msra.mxu0 %v140
    %2701 = vmatprep.subr.mxu0 0.0
    %2702 = vmatpush1.msra.mxu0 %v141
    %2703 = vmatprep.subr.mxu0 0.0
    %2704 = vmatpush1.msra.mxu0 %v142
    %2705 = vmatprep.subr.mxu0 0.0
    %2706 = vmatpush1.msra.mxu0 %v143
    %2707 = vmatprep.subr.mxu0 0.0
    %2708 = vmatpush1.msra.mxu0 %v144
    %2709 = vmatprep.subr.mxu0 0.0
    %2710 = vmatpush1.msra.mxu0 %v145
    %2711 = vmatprep.subr.mxu0 0.0
    %2712 = vmatpush1.msra.mxu0 %v146
    %2713 = vmatprep.subr.mxu0 0.0
    %2714 = vmatpush1.msra.mxu0 0.0
    %2715 = vmatprep.subr.mxu0 0.0
    %2716 = vmatpush1.msra.mxu0 0.0
    %2717 = vmatprep.subr.mxu0 0.0
    %2718 = vmatpush1.msra.mxu0 0.0
    %2719 = vmatprep.subr.mxu0 0.0
    %2720 = vmatpush1.msra.mxu0 0.0
    %2721 = vmatprep.subr.mxu0 0.0
    %2722 = vmatpush1.msra.mxu0 0.0
    %2723 = vmatprep.subr.mxu0 0.0
    %2724 = vmatpush1.msra.mxu0 0.0
    %2725 = vmatprep.subr.mxu0 0.0
    %2726 = vmatpush1.msra.mxu0 0.0
    %2727 = vmatprep.subr.mxu0 0.0
    %2728 = vmatpush1.msra.mxu0 0.0
    %2729 = vmatprep.subr.mxu0 0.0
    %2730 = vmatpush1.msra.mxu0 0.0
    %2731 = vmatprep.subr.mxu0 0.0
    %2732 = vmatpush1.msra.mxu0 0.0
    %2733 = vmatprep.subr.mxu0 0.0
    %2734 = vmatpush1.msra.mxu0 0.0
    %2735 = vmatprep.subr.mxu0 0.0
    %2736 = vmatpush1.msra.mxu0 0.0
    %2737 = vmatprep.subr.mxu0 0.0
    %2738 = vmatpush1.msra.mxu0 0.0
    %2739 = vmatprep.subr.mxu0 0.0
    %2740 = vmatpush1.msra.mxu0 0.0
    %2741 = vmatprep.subr.mxu0 0.0
    %2742 = vmatpush1.msra.mxu0 0.0
    %2743 = vmatprep.subr.mxu0 0.0
    %2744 = vmatpush1.msra.mxu0 0.0
    %2745 = vmatprep.subr.mxu0 0.0
    %2746 = vmatpush1.msra.mxu0 0.0
    %2747 = vmatprep.subr.mxu0 0.0
    %2748 = vmatpush1.msra.mxu0 0.0
    %2749 = vmatprep.subr.mxu0 0.0
    %2750 = vmatpush1.msra.mxu0 0.0
    %2751 = vmatprep.subr.mxu0 0.0
    %2752 = vmatpush1.msra.mxu0 0.0
    %2753 = vmatprep.subr.mxu0 0.0
    %2754 = vmatpush1.msra.mxu0 0.0
    %2755 = vmatprep.subr.mxu0 0.0
    %2756 = vmatpush1.msra.mxu0 0.0
    %2757 = vmatprep.subr.mxu0 0.0
    %2758 = vmatpush1.msra.mxu0 0.0
    %2759 = vmatprep.subr.mxu0 0.0
    %2760 = vmatpush1.msra.mxu0 0.0
    %2761 = vmatprep.mubr.f32.mxu0 0.0
    %2762 = vmatmul.mubr.f32.gmra.mrb[0].mxu0 %v2695
    %v2763 = vpop.f32.mrb[0].mxu0
    %v2764 = vadd.f32 0.0, %v2763
    %v2765 = vpop.f32.mrb[0].mxu0
    %2766 = vdwg.mxu0
    %v2767 = vmul.f32 %v2764, 0.125
    %v2769 = vcombine.high %v2767, %v2767
    %v2770 = vsel %vm531, %v2767, 0
    %2772 = vmatprep.subr.mxu0 0.0
    %2773 = vmatpush1.xpose.msra.mxu0 %v678
    %2774 = vmatprep.subr.mxu0 0.0
    %2775 = vmatpush1.xpose.msra.mxu0 %v681
    %2776 = vmatprep.subr.mxu0 0.0
    %2777 = vmatpush1.xpose.msra.mxu0 0.0
    %2778 = vmatprep.subr.mxu0 0.0
    %2779 = vmatpush1.xpose.msra.mxu0 0.0
    %2780 = vmatprep.subr.mxu0 0.0
    %2781 = vmatpush1.xpose.msra.mxu0 0.0
    %2782 = vmatprep.subr.mxu0 0.0
    %2783 = vmatpush1.xpose.msra.mxu0 0.0
    %2784 = vmatprep.subr.mxu0 0.0
    %2785 = vmatpush1.xpose.msra.mxu0 0.0
    %2786 = vmatprep.subr.mxu0 0.0
    %2787 = vmatpush1.xpose.msra.mxu0 0.0
    %2788 = vmatprep.subr.mxu0 0.0
    %2789 = vmatpush1.xpose.msra.mxu0 0.0
    %2790 = vmatprep.subr.mxu0 0.0
    %2791 = vmatpush1.xpose.msra.mxu0 0.0
    %2792 = vmatprep.subr.mxu0 0.0
    %2793 = vmatpush1.xpose.msra.mxu0 0.0
    %2794 = vmatprep.subr.mxu0 0.0
    %2795 = vmatpush1.xpose.msra.mxu0 0.0
    %2796 = vmatprep.subr.mxu0 0.0
    %2797 = vmatpush1.xpose.msra.mxu0 0.0
    %2798 = vmatprep.subr.mxu0 0.0
    %2799 = vmatpush1.xpose.msra.mxu0 0.0
    %2800 = vmatprep.subr.mxu0 0.0
    %2801 = vmatpush1.xpose.msra.mxu0 0.0
    %2802 = vmatprep.subr.mxu0 0.0
    %2803 = vmatpush1.xpose.msra.mxu0 0.0
    %2804 = vmatprep.subr.mxu0 0.0
    %2805 = vmatpush1.xpose.msra.mxu0 0.0
    %2806 = vmatprep.subr.mxu0 0.0
    %2807 = vmatpush1.xpose.msra.mxu0 0.0
    %2808 = vmatprep.subr.mxu0 0.0
    %2809 = vmatpush1.xpose.msra.mxu0 0.0
    %2810 = vmatprep.subr.mxu0 0.0
    %2811 = vmatpush1.xpose.msra.mxu0 0.0
    %2812 = vmatprep.subr.mxu0 0.0
    %2813 = vmatpush1.xpose.msra.mxu0 0.0
    %2814 = vmatprep.subr.mxu0 0.0
    %2815 = vmatpush1.xpose.msra.mxu0 0.0
    %2816 = vmatprep.subr.mxu0 0.0
    %2817 = vmatpush1.xpose.msra.mxu0 0.0
    %2818 = vmatprep.subr.mxu0 0.0
    %2819 = vmatpush1.xpose.msra.mxu0 0.0
    %2820 = vmatprep.subr.mxu0 0.0
    %2821 = vmatpush1.xpose.msra.mxu0 0.0
    %2822 = vmatprep.subr.mxu0 0.0
    %2823 = vmatpush1.xpose.msra.mxu0 0.0
    %2824 = vmatprep.subr.mxu0 0.0
    %2825 = vmatpush1.xpose.msra.mxu0 0.0
    %2826 = vmatprep.subr.mxu0 0.0
    %2827 = vmatpush1.xpose.msra.mxu0 0.0
    %2828 = vmatprep.subr.mxu0 0.0
    %2829 = vmatpush1.xpose.msra.mxu0 0.0
    %2830 = vmatprep.subr.mxu0 0.0
    %2831 = vmatpush1.xpose.msra.mxu0 0.0
    %2832 = vmatprep.subr.mxu0 0.0
    %2833 = vmatpush1.xpose.msra.mxu0 0.0
    %2834 = vmatprep.subr.mxu0 0.0
    %2835 = vmatpush1.xpose.msra.mxu0 0.0
    %2836 = vmatprep.mubr.f32.mxu0 0.0
    %2837 = vmatmul.mubr.f32.gmra.mrb[0].mxu0 %v2770
    %v2838 = vpop.f32.mrb[0].mxu0
    %v2839 = vadd.f32 0.0, %v2838
    %v2840 = vpop.f32.mrb[0].mxu0
    %2841 = vdwg.mxu0
    %v2842 = vsel %vm531, %v2769, 0
    %2844 = vmatprep.subr.mxu0 0.0
    %2845 = vmatpush1.xpose.msra.mxu0 %v756
    %2846 = vmatprep.subr.mxu0 0.0
    %2847 = vmatpush1.xpose.msra.mxu0 %v759
    %2848 = vmatprep.subr.mxu0 0.0
    %2849 = vmatpush1.xpose.msra.mxu0 0.0
    %2850 = vmatprep.subr.mxu0 0.0
    %2851 = vmatpush1.xpose.msra.mxu0 0.0
    %2852 = vmatprep.subr.mxu0 0.0
    %2853 = vmatpush1.xpose.msra.mxu0 0.0
    %2854 = vmatprep.subr.mxu0 0.0
    %2855 = vmatpush1.xpose.msra.mxu0 0.0
    %2856 = vmatprep.subr.mxu0 0.0
    %2857 = vmatpush1.xpose.msra.mxu0 0.0
    %2858 = vmatprep.subr.mxu0 0.0
    %2859 = vmatpush1.xpose.msra.mxu0 0.0
    %2860 = vmatprep.subr.mxu0 0.0
    %2861 = vmatpush1.xpose.msra.mxu0 0.0
    %2862 = vmatprep.subr.mxu0 0.0
    %2863 = vmatpush1.xpose.msra.mxu0 0.0
    %2864 = vmatprep.subr.mxu0 0.0
    %2865 = vmatpush1.xpose.msra.mxu0 0.0
    %2866 = vmatprep.subr.mxu0 0.0
    %2867 = vmatpush1.xpose.msra.mxu0 0.0
    %2868 = vmatprep.subr.mxu0 0.0
    %2869 = vmatpush1.xpose.msra.mxu0 0.0
    %2870 = vmatprep.subr.mxu0 0.0
    %2871 = vmatpush1.xpose.msra.mxu0 0.0
    %2872 = vmatprep.subr.mxu0 0.0
    %2873 = vmatpush1.xpose.msra.mxu0 0.0
    %2874 = vmatprep.subr.mxu0 0.0
    %2875 = vmatpush1.xpose.msra.mxu0 0.0
    %2876 = vmatprep.subr.mxu0 0.0
    %2877 = vmatpush1.xpose.msra.mxu0 0.0
    %2878 = vmatprep.subr.mxu0 0.0
    %2879 = vmatpush1.xpose.msra.mxu0 0.0
    %2880 = vmatprep.subr.mxu0 0.0
    %2881 = vmatpush1.xpose.msra.mxu0 0.0
    %2882 = vmatprep.subr.mxu0 0.0
    %2883 = vmatpush1.xpose.msra.mxu0 0.0
    %2884 = vmatprep.subr.mxu0 0.0
    %2885 = vmatpush1.xpose.msra.mxu0 0.0
    %2886 = vmatprep.subr.mxu0 0.0
    %2887 = vmatpush1.xpose.msra.mxu0 0.0
    %2888 = vmatprep.subr.mxu0 0.0
    %2889 = vmatpush1.xpose.msra.mxu0 0.0
    %2890 = vmatprep.subr.mxu0 0.0
    %2891 = vmatpush1.xpose.msra.mxu0 0.0
    %2892 = vmatprep.subr.mxu0 0.0
    %2893 = vmatpush1.xpose.msra.mxu0 0.0
    %2894 = vmatprep.subr.mxu0 0.0
    %2895 = vmatpush1.xpose.msra.mxu0 0.0
    %2896 = vmatprep.subr.mxu0 0.0
    %2897 = vmatpush1.xpose.msra.mxu0 0.0
    %2898 = vmatprep.subr.mxu0 0.0
    %2899 = vmatpush1.xpose.msra.mxu0 0.0
    %2900 = vmatprep.subr.mxu0 0.0
    %2901 = vmatpush1.xpose.msra.mxu0 0.0
    %2902 = vmatprep.subr.mxu0 0.0
    %2903 = vmatpush1.xpose.msra.mxu0 0.0
    %2904 = vmatprep.subr.mxu0 0.0
    %2905 = vmatpush1.xpose.msra.mxu0 0.0
    %2906 = vmatprep.subr.mxu0 0.0
    %2907 = vmatpush1.xpose.msra.mxu0 0.0
    %2908 = vmatprep.mubr.f32.mxu0 0.0
    %2909 = vmatmul.mubr.f32.gmra.mrb[0].mxu0 %v2842
    %v2910 = vpop.f32.mrb[0].mxu0
    %v2911 = vadd.f32 0.0, %v2910
    %v2912 = vpop.f32.mrb[0].mxu0
    %2913 = vdwg.mxu0
    %v2914 = vsel %vm831, %v2839, -inf
    %v2915 = vrot.slane %v2914, 4
    %v2916 = vmax.f32 %v2914, %v2915
    %v2917 = vrot.slane %v2916, 2
    %v2918 = vmax.f32 %v2916, %v2917
    %v2919 = vrot.slane %v2918, 1
    %v2920 = vmax.f32 %v2918, %v2919
    %v2921 = vsel %vm831, %v2911, -inf
    %v2922 = vrot.slane %v2921, 4
    %v2923 = vmax.f32 %v2921, %v2922
    %v2924 = vrot.slane %v2923, 2
    %v2925 = vmax.f32 %v2923, %v2924
    %v2926 = vrot.slane %v2925, 1
    %v2927 = vmax.f32 %v2925, %v2926
    %v2928 = vsub.f32 %v2839, %v2920
    %v2929 = vsub.f32 %v2911, %v2927
    %v2930 = vmul.f32 %v2928, 1.442695
    %v2931 = vpow.pop %v2930
    %v2932 = vmul.f32 %v2929, 1.442695
    %v2933 = vpow.pop %v2932
    %v2934 = vsel %vm831, %v2931, 0.0
    %v2935 = vrot.slane %v2934, 4
    %v2936 = vadd.f32 %v2934, %v2935
    %v2937 = vrot.slane %v2936, 2
    %v2938 = vadd.f32 %v2936, %v2937
    %v2939 = vrot.slane %v2938, 1
    %v2940 = vadd.f32 %v2938, %v2939
    %v2941 = vsel %vm831, %v2933, 0.0
    %v2942 = vrot.slane %v2941, 4
    %v2943 = vadd.f32 %v2941, %v2942
    %v2944 = vrot.slane %v2943, 2
    %v2945 = vadd.f32 %v2943, %v2944
    %v2946 = vrot.slane %v2945, 1
    %v2947 = vadd.f32 %v2945, %v2946
    %v2948 = vrcp.pop %v2940
    %v2949 = vrcp.pop %v2947
    %v2950 = vmul.f32 %v2931, %v2948
    %v2951 = vmul.f32 %v2933, %v2949
    %v2952 = vadd.f32 %v2950, 1e-08
    %v2953 = vadd.f32 %v2951, 1e-08
    %v2954 = vsel %vm831, %v2952, 0.0
    %2955 = vadd.xlane.f32.xlu0 %v2954
    %v2956 = vpop.xlane.xlu0 %2955
    %v2957 = vsel %vm831, %v2953, 0.0
    %2958 = vadd.xlane.f32.xlu0 %v2957
    %v2959 = vpop.xlane.xlu0 %2958
    %v2960 = vrcp.pop %v2956
    %v2961 = vrcp.pop %v2959
    %v2962 = vmul.f32 %v2952, %v2960
    %v2963 = vmul.f32 %v2953, %v2961
    %v2965 = vsel %vm882, %v2962, 0
    %2967 = vmatprep.subr.mxu0 0.0
    %2968 = vmatpush1.msra.mxu0 %v507
    %2969 = vmatprep.subr.mxu0 0.0
    %2970 = vmatpush1.msra.mxu0 %v512
    %2971 = vmatprep.subr.mxu0 0.0
    %2972 = vmatpush1.msra.mxu0 0.0
    %2973 = vmatprep.subr.mxu0 0.0
    %2974 = vmatpush1.msra.mxu0 0.0
    %2975 = vmatprep.subr.mxu0 0.0
    %2976 = vmatpush1.msra.mxu0 0.0
    %2977 = vmatprep.subr.mxu0 0.0
    %2978 = vmatpush1.msra.mxu0 0.0
    %2979 = vmatprep.subr.mxu0 0.0
    %2980 = vmatpush1.msra.mxu0 0.0
    %2981 = vmatprep.subr.mxu0 0.0
    %2982 = vmatpush1.msra.mxu0 0.0
    %2983 = vmatprep.subr.mxu0 0.0
    %2984 = vmatpush1.msra.mxu0 0.0
    %2985 = vmatprep.subr.mxu0 0.0
    %2986 = vmatpush1.msra.mxu0 0.0
    %2987 = vmatprep.subr.mxu0 0.0
    %2988 = vmatpush1.msra.mxu0 0.0
    %2989 = vmatprep.subr.mxu0 0.0
    %2990 = vmatpush1.msra.mxu0 0.0
    %2991 = vmatprep.subr.mxu0 0.0
    %2992 = vmatpush1.msra.mxu0 0.0
    %2993 = vmatprep.subr.mxu0 0.0
    %2994 = vmatpush1.msra.mxu0 0.0
    %2995 = vmatprep.subr.mxu0 0.0
    %2996 = vmatpush1.msra.mxu0 0.0
    %2997 = vmatprep.subr.mxu0 0.0
    %2998 = vmatpush1.msra.mxu0 0.0
    %2999 = vmatprep.subr.mxu0 0.0
    %3000 = vmatpush1.msra.mxu0 0.0
    %3001 = vmatprep.subr.mxu0 0.0
    %3002 = vmatpush1.msra.mxu0 0.0
    %3003 = vmatprep.subr.mxu0 0.0
    %3004 = vmatpush1.msra.mxu0 0.0
    %3005 = vmatprep.subr.mxu0 0.0
    %3006 = vmatpush1.msra.mxu0 0.0
    %3007 = vmatprep.subr.mxu0 0.0
    %3008 = vmatpush1.msra.mxu0 0.0
    %3009 = vmatprep.subr.mxu0 0.0
    %3010 = vmatpush1.msra.mxu0 0.0
    %3011 = vmatprep.subr.mxu0 0.0
    %3012 = vmatpush1.msra.mxu0 0.0
    %3013 = vmatprep.subr.mxu0 0.0
    %3014 = vmatpush1.msra.mxu0 0.0
    %3015 = vmatprep.subr.mxu0 0.0
    %3016 = vmatpush1.msra.mxu0 0.0
    %3017 = vmatprep.subr.mxu0 0.0
    %3018 = vmatpush1.msra.mxu0 0.0
    %3019 = vmatprep.subr.mxu0 0.0
    %3020 = vmatpush1.msra.mxu0 0.0
    %3021 = vmatprep.subr.mxu0 0.0
    %3022 = vmatpush1.msra.mxu0 0.0
    %3023 = vmatprep.subr.mxu0 0.0
    %3024 = vmatpush1.msra.mxu0 0.0
    %3025 = vmatprep.subr.mxu0 0.0
    %3026 = vmatpush1.msra.mxu0 0.0
    %3027 = vmatprep.subr.mxu0 0.0
    %3028 = vmatpush1.msra.mxu0 0.0
    %3029 = vmatprep.subr.mxu0 0.0
    %3030 = vmatpush1.msra.mxu0 0.0
    %3031 = vmatprep.mubr.f32.mxu0 0.0
    %3032 = vmatmul.mubr.f32.gmra.mrb[0].mxu0 %v2965
    %v3033 = vpop.f32.mrb[0].mxu0
    %v3034 = vadd.f32 0.0, %v3033
    %v3035 = vpop.f32.mrb[0].mxu0
    %3036 = vdwg.mxu0
    %v3038 = vsel %vm882, %v2963, 0
    %3040 = vmatprep.subr.mxu0 0.0
    %3041 = vmatpush1.msra.mxu0 %v517
    %3042 = vmatprep.subr.mxu0 0.0
    %3043 = vmatpush1.msra.mxu0 %v522
    %3044 = vmatprep.subr.mxu0 0.0
    %3045 = vmatpush1.msra.mxu0 0.0
    %3046 = vmatprep.subr.mxu0 0.0
    %3047 = vmatpush1.msra.mxu0 0.0
    %3048 = vmatprep.subr.mxu0 0.0
    %3049 = vmatpush1.msra.mxu0 0.0
    %3050 = vmatprep.subr.mxu0 0.0
    %3051 = vmatpush1.msra.mxu0 0.0
    %3052 = vmatprep.subr.mxu0 0.0
    %3053 = vmatpush1.msra.mxu0 0.0
    %3054 = vmatprep.subr.mxu0 0.0
    %3055 = vmatpush1.msra.mxu0 0.0
    %3056 = vmatprep.subr.mxu0 0.0
    %3057 = vmatpush1.msra.mxu0 0.0
    %3058 = vmatprep.subr.mxu0 0.0
    %3059 = vmatpush1.msra.mxu0 0.0
    %3060 = vmatprep.subr.mxu0 0.0
    %3061 = vmatpush1.msra.mxu0 0.0
    %3062 = vmatprep.subr.mxu0 0.0
    %3063 = vmatpush1.msra.mxu0 0.0
    %3064 = vmatprep.subr.mxu0 0.0
    %3065 = vmatpush1.msra.mxu0 0.0
    %3066 = vmatprep.subr.mxu0 0.0
    %3067 = vmatpush1.msra.mxu0 0.0
    %3068 = vmatprep.subr.mxu0 0.0
    %3069 = vmatpush1.msra.mxu0 0.0
    %3070 = vmatprep.subr.mxu0 0.0
    %3071 = vmatpush1.msra.mxu0 0.0
    %3072 = vmatprep.subr.mxu0 0.0
    %3073 = vmatpush1.msra.mxu0 0.0
    %3074 = vmatprep.subr.mxu0 0.0
    %3075 = vmatpush1.msra.mxu0 0.0
    %3076 = vmatprep.subr.mxu0 0.0
    %3077 = vmatpush1.msra.mxu0 0.0
    %3078 = vmatprep.subr.mxu0 0.0
    %3079 = vmatpush1.msra.mxu0 0.0
    %3080 = vmatprep.subr.mxu0 0.0
    %3081 = vmatpush1.msra.mxu0 0.0
    %3082 = vmatprep.subr.mxu0 0.0
    %3083 = vmatpush1.msra.mxu0 0.0
    %3084 = vmatprep.subr.mxu0 0.0
    %3085 = vmatpush1.msra.mxu0 0.0
    %3086 = vmatprep.subr.mxu0 0.0
    %3087 = vmatpush1.msra.mxu0 0.0
    %3088 = vmatprep.subr.mxu0 0.0
    %3089 = vmatpush1.msra.mxu0 0.0
    %3090 = vmatprep.subr.mxu0 0.0
    %3091 = vmatpush1.msra.mxu0 0.0
    %3092 = vmatprep.subr.mxu0 0.0
    %3093 = vmatpush1.msra.mxu0 0.0
    %3094 = vmatprep.subr.mxu0 0.0
    %3095 = vmatpush1.msra.mxu0 0.0
    %3096 = vmatprep.subr.mxu0 0.0
    %3097 = vmatpush1.msra.mxu0 0.0
    %3098 = vmatprep.subr.mxu0 0.0
    %3099 = vmatpush1.msra.mxu0 0.0
    %3100 = vmatprep.subr.mxu0 0.0
    %3101 = vmatpush1.msra.mxu0 0.0
    %3102 = vmatprep.subr.mxu0 0.0
    %3103 = vmatpush1.msra.mxu0 0.0
    %3104 = vmatprep.mubr.f32.mxu0 0.0
    %3105 = vmatmul.mubr.f32.gmra.mrb[0].mxu0 %v3038
    %v3106 = vpop.f32.mrb[0].mxu0
    %v3107 = vadd.f32 0.0, %v3106
    %v3108 = vpop.f32.mrb[0].mxu0
    %3109 = vdwg.mxu0
    %v3112 = vcombine.low %v3034, %v3107
    %v3113 = vsel %vm531, %v3112, 0
    %3115 = vmatprep.subr.mxu0 0.0
    %3116 = vmatpush1.msra.mxu0 %v147
    %3117 = vmatprep.subr.mxu0 0.0
    %3118 = vmatpush1.msra.mxu0 %v148
    %3119 = vmatprep.subr.mxu0 0.0
    %3120 = vmatpush1.msra.mxu0 %v149
    %3121 = vmatprep.subr.mxu0 0.0
    %3122 = vmatpush1.msra.mxu0 %v150
    %3123 = vmatprep.subr.mxu0 0.0
    %3124 = vmatpush1.msra.mxu0 %v151
    %3125 = vmatprep.subr.mxu0 0.0
    %3126 = vmatpush1.msra.mxu0 %v152
    %3127 = vmatprep.subr.mxu0 0.0
    %3128 = vmatpush1.msra.mxu0 %v153
    %3129 = vmatprep.subr.mxu0 0.0
    %3130 = vmatpush1.msra.mxu0 %v154
    %3131 = vmatprep.subr.mxu0 0.0
    %3132 = vmatpush1.msra.mxu0 0.0
    %3133 = vmatprep.subr.mxu0 0.0
    %3134 = vmatpush1.msra.mxu0 0.0
    %3135 = vmatprep.subr.mxu0 0.0
    %3136 = vmatpush1.msra.mxu0 0.0
    %3137 = vmatprep.subr.mxu0 0.0
    %3138 = vmatpush1.msra.mxu0 0.0
    %3139 = vmatprep.subr.mxu0 0.0
    %3140 = vmatpush1.msra.mxu0 0.0
    %3141 = vmatprep.subr.mxu0 0.0
    %3142 = vmatpush1.msra.mxu0 0.0
    %3143 = vmatprep.subr.mxu0 0.0
    %3144 = vmatpush1.msra.mxu0 0.0
    %3145 = vmatprep.subr.mxu0 0.0
    %3146 = vmatpush1.msra.mxu0 0.0
    %3147 = vmatprep.subr.mxu0 0.0
    %3148 = vmatpush1.msra.mxu0 0.0
    %3149 = vmatprep.subr.mxu0 0.0
    %3150 = vmatpush1.msra.mxu0 0.0
    %3151 = vmatprep.subr.mxu0 0.0
    %3152 = vmatpush1.msra.mxu0 0.0
    %3153 = vmatprep.subr.mxu0 0.0
    %3154 = vmatpush1.msra.mxu0 0.0
    %3155 = vmatprep.subr.mxu0 0.0
    %3156 = vmatpush1.msra.mxu0 0.0
    %3157 = vmatprep.subr.mxu0 0.0
    %3158 = vmatpush1.msra.mxu0 0.0
    %3159 = vmatprep.subr.mxu0 0.0
    %3160 = vmatpush1.msra.mxu0 0.0
    %3161 = vmatprep.subr.mxu0 0.0
    %3162 = vmatpush1.msra.mxu0 0.0
    %3163 = vmatprep.subr.mxu0 0.0
    %3164 = vmatpush1.msra.mxu0 0.0
    %3165 = vmatprep.subr.mxu0 0.0
    %3166 = vmatpush1.msra.mxu0 0.0
    %3167 = vmatprep.subr.mxu0 0.0
    %3168 = vmatpush1.msra.mxu0 0.0
    %3169 = vmatprep.subr.mxu0 0.0
    %3170 = vmatpush1.msra.mxu0 0.0
    %3171 = vmatprep.subr.mxu0 0.0
    %3172 = vmatpush1.msra.mxu0 0.0
    %3173 = vmatprep.subr.mxu0 0.0
    %3174 = vmatpush1.msra.mxu0 0.0
    %3175 = vmatprep.subr.mxu0 0.0
    %3176 = vmatpush1.msra.mxu0 0.0
    %3177 = vmatprep.subr.mxu0 0.0
    %3178 = vmatpush1.msra.mxu0 0.0
    %3179 = vmatprep.mubr.f32.mxu0 0.0
    %3180 = vmatmul.mubr.f32.gmra.mrb[0].mxu0 %v3113
    %v3181 = vpop.f32.mrb[0].mxu0
    %v3182 = vadd.f32 %v240, %v3181
    %v3183 = vpop.f32.mrb[0].mxu0
    %3184 = vdwg.mxu0
    %3185 = vmatprep.subr.mxu0 0.0
    %3186 = vmatpush1.msra.mxu0 %v155
    %3187 = vmatprep.subr.mxu0 0.0
    %3188 = vmatpush1.msra.mxu0 %v156
    %3189 = vmatprep.subr.mxu0 0.0
    %3190 = vmatpush1.msra.mxu0 %v157
    %3191 = vmatprep.subr.mxu0 0.0
    %3192 = vmatpush1.msra.mxu0 %v158
    %3193 = vmatprep.subr.mxu0 0.0
    %3194 = vmatpush1.msra.mxu0 %v159
    %3195 = vmatprep.subr.mxu0 0.0
    %3196 = vmatpush1.msra.mxu0 %v160
    %3197 = vmatprep.subr.mxu0 0.0
    %3198 = vmatpush1.msra.mxu0 %v161
    %3199 = vmatprep.subr.mxu0 0.0
    %3200 = vmatpush1.msra.mxu0 %v162
    %3201 = vmatprep.subr.mxu0 0.0
    %3202 = vmatpush1.msra.mxu0 0.0
    %3203 = vmatprep.subr.mxu0 0.0
    %3204 = vmatpush1.msra.mxu0 0.0
    %3205 = vmatprep.subr.mxu0 0.0
    %3206 = vmatpush1.msra.mxu0 0.0
    %3207 = vmatprep.subr.mxu0 0.0
    %3208 = vmatpush1.msra.mxu0 0.0
    %3209 = vmatprep.subr.mxu0 0.0
    %3210 = vmatpush1.msra.mxu0 0.0
    %3211 = vmatprep.subr.mxu0 0.0
    %3212 = vmatpush1.msra.mxu0 0.0
    %3213 = vmatprep.subr.mxu0 0.0
    %3214 = vmatpush1.msra.mxu0 0.0
    %3215 = vmatprep.subr.mxu0 0.0
    %3216 = vmatpush1.msra.mxu0 0.0
    %3217 = vmatprep.subr.mxu0 0.0
    %3218 = vmatpush1.msra.mxu0 0.0
    %3219 = vmatprep.subr.mxu0 0.0
    %3220 = vmatpush1.msra.mxu0 0.0
    %3221 = vmatprep.subr.mxu0 0.0
    %3222 = vmatpush1.msra.mxu0 0.0
    %3223 = vmatprep.subr.mxu0 0.0
    %3224 = vmatpush1.msra.mxu0 0.0
    %3225 = vmatprep.subr.mxu0 0.0
    %3226 = vmatpush1.msra.mxu0 0.0
    %3227 = vmatprep.subr.mxu0 0.0
    %3228 = vmatpush1.msra.mxu0 0.0
    %3229 = vmatprep.subr.mxu0 0.0
    %3230 = vmatpush1.msra.mxu0 0.0
    %3231 = vmatprep.subr.mxu0 0.0
    %3232 = vmatpush1.msra.mxu0 0.0
    %3233 = vmatprep.subr.mxu0 0.0
    %3234 = vmatpush1.msra.mxu0 0.0
    %3235 = vmatprep.subr.mxu0 0.0
    %3236 = vmatpush1.msra.mxu0 0.0
    %3237 = vmatprep.subr.mxu0 0.0
    %3238 = vmatpush1.msra.mxu0 0.0
    %3239 = vmatprep.subr.mxu0 0.0
    %3240 = vmatpush1.msra.mxu0 0.0
    %3241 = vmatprep.subr.mxu0 0.0
    %3242 = vmatpush1.msra.mxu0 0.0
    %3243 = vmatprep.subr.mxu0 0.0
    %3244 = vmatpush1.msra.mxu0 0.0
    %3245 = vmatprep.subr.mxu0 0.0
    %3246 = vmatpush1.msra.mxu0 0.0
    %3247 = vmatprep.subr.mxu0 0.0
    %3248 = vmatpush1.msra.mxu0 0.0
    %3249 = vmatprep.mubr.f32.mxu0 0.0
    %3250 = vmatmul.mubr.f32.gmra.mrb[0].mxu0 %v3113
    %v3251 = vpop.f32.mrb[0].mxu0
    %v3252 = vadd.f32 %v244, %v3251
    %v3253 = vpop.f32.mrb[0].mxu0
    %3254 = vdwg.mxu0
    %3255 = vmatprep.subr.mxu0 0.0
    %3256 = vmatpush1.msra.mxu0 %v163
    %3257 = vmatprep.subr.mxu0 0.0
    %3258 = vmatpush1.msra.mxu0 %v164
    %3259 = vmatprep.subr.mxu0 0.0
    %3260 = vmatpush1.msra.mxu0 %v165
    %3261 = vmatprep.subr.mxu0 0.0
    %3262 = vmatpush1.msra.mxu0 %v166
    %3263 = vmatprep.subr.mxu0 0.0
    %3264 = vmatpush1.msra.mxu0 %v167
    %3265 = vmatprep.subr.mxu0 0.0
    %3266 = vmatpush1.msra.mxu0 %v168
    %3267 = vmatprep.subr.mxu0 0.0
    %3268 = vmatpush1.msra.mxu0 %v169
    %3269 = vmatprep.subr.mxu0 0.0
    %3270 = vmatpush1.msra.mxu0 %v170
    %3271 = vmatprep.subr.mxu0 0.0
    %3272 = vmatpush1.msra.mxu0 0.0
    %3273 = vmatprep.subr.mxu0 0.0
    %3274 = vmatpush1.msra.mxu0 0.0
    %3275 = vmatprep.subr.mxu0 0.0
    %3276 = vmatpush1.msra.mxu0 0.0
    %3277 = vmatprep.subr.mxu0 0.0
    %3278 = vmatpush1.msra.mxu0 0.0
    %3279 = vmatprep.subr.mxu0 0.0
    %3280 = vmatpush1.msra.mxu0 0.0
    %3281 = vmatprep.subr.mxu0 0.0
    %3282 = vmatpush1.msra.mxu0 0.0
    %3283 = vmatprep.subr.mxu0 0.0
    %3284 = vmatpush1.msra.mxu0 0.0
    %3285 = vmatprep.subr.mxu0 0.0
    %3286 = vmatpush1.msra.mxu0 0.0
    %3287 = vmatprep.subr.mxu0 0.0
    %3288 = vmatpush1.msra.mxu0 0.0
    %3289 = vmatprep.subr.mxu0 0.0
    %3290 = vmatpush1.msra.mxu0 0.0
    %3291 = vmatprep.subr.mxu0 0.0
    %3292 = vmatpush1.msra.mxu0 0.0
    %3293 = vmatprep.subr.mxu0 0.0
    %3294 = vmatpush1.msra.mxu0 0.0
    %3295 = vmatprep.subr.mxu0 0.0
    %3296 = vmatpush1.msra.mxu0 0.0
    %3297 = vmatprep.subr.mxu0 0.0
    %3298 = vmatpush1.msra.mxu0 0.0
    %3299 = vmatprep.subr.mxu0 0.0
    %3300 = vmatpush1.msra.mxu0 0.0
    %3301 = vmatprep.subr.mxu0 0.0
    %3302 = vmatpush1.msra.mxu0 0.0
    %3303 = vmatprep.subr.mxu0 0.0
    %3304 = vmatpush1.msra.mxu0 0.0
    %3305 = vmatprep.subr.mxu0 0.0
    %3306 = vmatpush1.msra.mxu0 0.0
    %3307 = vmatprep.subr.mxu0 0.0
    %3308 = vmatpush1.msra.mxu0 0.0
    %3309 = vmatprep.subr.mxu0 0.0
    %3310 = vmatpush1.msra.mxu0 0.0
    %3311 = vmatprep.subr.mxu0 0.0
    %3312 = vmatpush1.msra.mxu0 0.0
    %3313 = vmatprep.subr.mxu0 0.0
    %3314 = vmatpush1.msra.mxu0 0.0
    %3315 = vmatprep.subr.mxu0 0.0
    %3316 = vmatpush1.msra.mxu0 0.0
    %3317 = vmatprep.subr.mxu0 0.0
    %3318 = vmatpush1.msra.mxu0 0.0
    %3319 = vmatprep.mubr.f32.mxu0 0.0
    %3320 = vmatmul.mubr.f32.gmra.mrb[0].mxu0 %v3113
    %v3321 = vpop.f32.mrb[0].mxu0
    %v3322 = vadd.f32 %v248, %v3321
    %v3323 = vpop.f32.mrb[0].mxu0
    %3324 = vdwg.mxu0
    %v3326 = vsel %vm531, %v2678, 0
    %3328 = vmatprep.subr.mxu0 0.0
    %3329 = vmatpush1.msra.mxu0 %v171
    %3330 = vmatprep.subr.mxu0 0.0
    %3331 = vmatpush1.msra.mxu0 %v172
    %3332 = vmatprep.subr.mxu0 0.0
    %3333 = vmatpush1.msra.mxu0 %v173
    %3334 = vmatprep.subr.mxu0 0.0
    %3335 = vmatpush1.msra.mxu0 %v174
    %3336 = vmatprep.subr.mxu0 0.0
    %3337 = vmatpush1.msra.mxu0 %v175
    %3338 = vmatprep.subr.mxu0 0.0
    %3339 = vmatpush1.msra.mxu0 %v176
    %3340 = vmatprep.subr.mxu0 0.0
    %3341 = vmatpush1.msra.mxu0 %v177
    %3342 = vmatprep.subr.mxu0 0.0
    %3343 = vmatpush1.msra.mxu0 %v178
    %3344 = vmatprep.subr.mxu0 0.0
    %3345 = vmatpush1.msra.mxu0 0.0
    %3346 = vmatprep.subr.mxu0 0.0
    %3347 = vmatpush1.msra.mxu0 0.0
    %3348 = vmatprep.subr.mxu0 0.0
    %3349 = vmatpush1.msra.mxu0 0.0
    %3350 = vmatprep.subr.mxu0 0.0
    %3351 = vmatpush1.msra.mxu0 0.0
    %3352 = vmatprep.subr.mxu0 0.0
    %3353 = vmatpush1.msra.mxu0 0.0
    %3354 = vmatprep.subr.mxu0 0.0
    %3355 = vmatpush1.msra.mxu0 0.0
    %3356 = vmatprep.subr.mxu0 0.0
    %3357 = vmatpush1.msra.mxu0 0.0
    %3358 = vmatprep.subr.mxu0 0.0
    %3359 = vmatpush1.msra.mxu0 0.0
    %3360 = vmatprep.subr.mxu0 0.0
    %3361 = vmatpush1.msra.mxu0 0.0
    %3362 = vmatprep.subr.mxu0 0.0
    %3363 = vmatpush1.msra.mxu0 0.0
    %3364 = vmatprep.subr.mxu0 0.0
    %3365 = vmatpush1.msra.mxu0 0.0
    %3366 = vmatprep.subr.mxu0 0.0
    %3367 = vmatpush1.msra.mxu0 0.0
    %3368 = vmatprep.subr.mxu0 0.0
    %3369 = vmatpush1.msra.mxu0 0.0
    %3370 = vmatprep.subr.mxu0 0.0
    %3371 = vmatpush1.msra.mxu0 0.0
    %3372 = vmatprep.subr.mxu0 0.0
    %3373 = vmatpush1.msra.mxu0 0.0
    %3374 = vmatprep.subr.mxu0 0.0
    %3375 = vmatpush1.msra.mxu0 0.0
    %3376 = vmatprep.subr.mxu0 0.0
    %3377 = vmatpush1.msra.mxu0 0.0
    %3378 = vmatprep.subr.mxu0 0.0
    %3379 = vmatpush1.msra.mxu0 0.0
    %3380 = vmatprep.subr.mxu0 0.0
    %3381 = vmatpush1.msra.mxu0 0.0
    %3382 = vmatprep.subr.mxu0 0.0
    %3383 = vmatpush1.msra.mxu0 0.0
    %3384 = vmatprep.subr.mxu0 0.0
    %3385 = vmatpush1.msra.mxu0 0.0
    %3386 = vmatprep.subr.mxu0 0.0
    %3387 = vmatpush1.msra.mxu0 0.0
    %3388 = vmatprep.subr.mxu0 0.0
    %3389 = vmatpush1.msra.mxu0 0.0
    %3390 = vmatprep.subr.mxu0 0.0
    %3391 = vmatpush1.msra.mxu0 0.0
    %3392 = vmatprep.mubr.f32.mxu0 0.0
    %3393 = vmatmul.mubr.f32.gmra.mrb[0].mxu0 %v3326
    %v3394 = vpop.f32.mrb[0].mxu0
    %v3395 = vadd.f32 %v252, %v3394
    %v3396 = vpop.f32.mrb[0].mxu0
    %3397 = vdwg.mxu0
    %3398 = vmatprep.subr.mxu0 0.0
    %3399 = vmatpush1.msra.mxu0 %v179
    %3400 = vmatprep.subr.mxu0 0.0
    %3401 = vmatpush1.msra.mxu0 %v180
    %3402 = vmatprep.subr.mxu0 0.0
    %3403 = vmatpush1.msra.mxu0 %v181
    %3404 = vmatprep.subr.mxu0 0.0
    %3405 = vmatpush1.msra.mxu0 %v182
    %3406 = vmatprep.subr.mxu0 0.0
    %3407 = vmatpush1.msra.mxu0 %v183
    %3408 = vmatprep.subr.mxu0 0.0
    %3409 = vmatpush1.msra.mxu0 %v184
    %3410 = vmatprep.subr.mxu0 0.0
    %3411 = vmatpush1.msra.mxu0 %v185
    %3412 = vmatprep.subr.mxu0 0.0
    %3413 = vmatpush1.msra.mxu0 %v186
    %3414 = vmatprep.subr.mxu0 0.0
    %3415 = vmatpush1.msra.mxu0 0.0
    %3416 = vmatprep.subr.mxu0 0.0
    %3417 = vmatpush1.msra.mxu0 0.0
    %3418 = vmatprep.subr.mxu0 0.0
    %3419 = vmatpush1.msra.mxu0 0.0
    %3420 = vmatprep.subr.mxu0 0.0
    %3421 = vmatpush1.msra.mxu0 0.0
    %3422 = vmatprep.subr.mxu0 0.0
    %3423 = vmatpush1.msra.mxu0 0.0
    %3424 = vmatprep.subr.mxu0 0.0
    %3425 = vmatpush1.msra.mxu0 0.0
    %3426 = vmatprep.subr.mxu0 0.0
    %3427 = vmatpush1.msra.mxu0 0.0
    %3428 = vmatprep.subr.mxu0 0.0
    %3429 = vmatpush1.msra.mxu0 0.0
    %3430 = vmatprep.subr.mxu0 0.0
    %3431 = vmatpush1.msra.mxu0 0.0
    %3432 = vmatprep.subr.mxu0 0.0
    %3433 = vmatpush1.msra.mxu0 0.0
    %3434 = vmatprep.subr.mxu0 0.0
    %3435 = vmatpush1.msra.mxu0 0.0
    %3436 = vmatprep.subr.mxu0 0.0
    %3437 = vmatpush1.msra.mxu0 0.0
    %3438 = vmatprep.subr.mxu0 0.0
    %3439 = vmatpush1.msra.mxu0 0.0
    %3440 = vmatprep.subr.mxu0 0.0
    %3441 = vmatpush1.msra.mxu0 0.0
    %3442 = vmatprep.subr.mxu0 0.0
    %3443 = vmatpush1.msra.mxu0 0.0
    %3444 = vmatprep.subr.mxu0 0.0
    %3445 = vmatpush1.msra.mxu0 0.0
    %3446 = vmatprep.subr.mxu0 0.0
    %3447 = vmatpush1.msra.mxu0 0.0
    %3448 = vmatprep.subr.mxu0 0.0
    %3449 = vmatpush1.msra.mxu0 0.0
    %3450 = vmatprep.subr.mxu0 0.0
    %3451 = vmatpush1.msra.mxu0 0.0
    %3452 = vmatprep.subr.mxu0 0.0
    %3453 = vmatpush1.msra.mxu0 0.0
    %3454 = vmatprep.subr.mxu0 0.0
    %3455 = vmatpush1.msra.mxu0 0.0
    %3456 = vmatprep.subr.mxu0 0.0
    %3457 = vmatpush1.msra.mxu0 0.0
    %3458 = vmatprep.subr.mxu0 0.0
    %3459 = vmatpush1.msra.mxu0 0.0
    %3460 = vmatprep.subr.mxu0 0.0
    %3461 = vmatpush1.msra.mxu0 0.0
    %3462 = vmatprep.mubr.f32.mxu0 0.0
    %3463 = vmatmul.mubr.f32.gmra.mrb[0].mxu0 %v3326
    %v3464 = vpop.f32.mrb[0].mxu0
    %v3465 = vadd.f32 %v256, %v3464
    %v3466 = vpop.f32.mrb[0].mxu0
    %3467 = vdwg.mxu0
    %3468 = vmatprep.subr.mxu0 0.0
    %3469 = vmatpush1.msra.mxu0 %v187
    %3470 = vmatprep.subr.mxu0 0.0
    %3471 = vmatpush1.msra.mxu0 %v188
    %3472 = vmatprep.subr.mxu0 0.0
    %3473 = vmatpush1.msra.mxu0 %v189
    %3474 = vmatprep.subr.mxu0 0.0
    %3475 = vmatpush1.msra.mxu0 %v190
    %3476 = vmatprep.subr.mxu0 0.0
    %3477 = vmatpush1.msra.mxu0 %v191
    %3478 = vmatprep.subr.mxu0 0.0
    %3479 = vmatpush1.msra.mxu0 %v192
    %3480 = vmatprep.subr.mxu0 0.0
    %3481 = vmatpush1.msra.mxu0 %v193
    %3482 = vmatprep.subr.mxu0 0.0
    %3483 = vmatpush1.msra.mxu0 %v194
    %3484 = vmatprep.subr.mxu0 0.0
    %3485 = vmatpush1.msra.mxu0 0.0
    %3486 = vmatprep.subr.mxu0 0.0
    %3487 = vmatpush1.msra.mxu0 0.0
    %3488 = vmatprep.subr.mxu0 0.0
    %3489 = vmatpush1.msra.mxu0 0.0
    %3490 = vmatprep.subr.mxu0 0.0
    %3491 = vmatpush1.msra.mxu0 0.0
    %3492 = vmatprep.subr.mxu0 0.0
    %3493 = vmatpush1.msra.mxu0 0.0
    %3494 = vmatprep.subr.mxu0 0.0
    %3495 = vmatpush1.msra.mxu0 0.0
    %3496 = vmatprep.subr.mxu0 0.0
    %3497 = vmatpush1.msra.mxu0 0.0
    %3498 = vmatprep.subr.mxu0 0.0
    %3499 = vmatpush1.msra.mxu0 0.0
    %3500 = vmatprep.subr.mxu0 0.0
    %3501 = vmatpush1.msra.mxu0 0.0
    %3502 = vmatprep.subr.mxu0 0.0
    %3503 = vmatpush1.msra.mxu0 0.0
    %3504 = vmatprep.subr.mxu0 0.0
    %3505 = vmatpush1.msra.mxu0 0.0
    %3506 = vmatprep.subr.mxu0 0.0
    %3507 = vmatpush1.msra.mxu0 0.0
    %3508 = vmatprep.subr.mxu0 0.0
    %3509 = vmatpush1.msra.mxu0 0.0
    %3510 = vmatprep.subr.mxu0 0.0
    %3511 = vmatpush1.msra.mxu0 0.0
    %3512 = vmatprep.subr.mxu0 0.0
    %3513 = vmatpush1.msra.mxu0 0.0
    %3514 = vmatprep.subr.mxu0 0.0
    %3515 = vmatpush1.msra.mxu0 0.0
    %3516 = vmatprep.subr.mxu0 0.0
    %3517 = vmatpush1.msra.mxu0 0.0
    %3518 = vmatprep.subr.mxu0 0.0
    %3519 = vmatpush1.msra.mxu0 0.0
    %3520 = vmatprep.subr.mxu0 0.0
    %3521 = vmatpush1.msra.mxu0 0.0
    %3522 = vmatprep.subr.mxu0 0.0
    %3523 = vmatpush1.msra.mxu0 0.0
    %3524 = vmatprep.subr.mxu0 0.0
    %3525 = vmatpush1.msra.mxu0 0.0
    %3526 = vmatprep.subr.mxu0 0.0
    %3527 = vmatpush1.msra.mxu0 0.0
    %3528 = vmatprep.subr.mxu0 0.0
    %3529 = vmatpush1.msra.mxu0 0.0
    %3530 = vmatprep.subr.mxu0 0.0
    %3531 = vmatpush1.msra.mxu0 0.0
    %3532 = vmatprep.mubr.f32.mxu0 0.0
    %3533 = vmatmul.mubr.f32.gmra.mrb[0].mxu0 %v3326
    %v3534 = vpop.f32.mrb[0].mxu0
    %v3535 = vadd.f32 %v260, %v3534
    %v3536 = vpop.f32.mrb[0].mxu0
    %3537 = vdwg.mxu0
    %v3538 = vadd.f32 %v3182, %v3395
    %v3539 = vxor.u32 %v3538, 2147483648
    %v3540 = vmul.f32 %v3539, 1.442695
    %v3541 = vpow.pop %v3540
    %v3542 = vadd.f32 %v3541, 1.0
    %v3543 = vrcp.pop %v3542
    %v3544 = vmul.f32 1.0, %v3543
    %v3545 = vadd.f32 %v3252, %v3465
    %v3546 = vxor.u32 %v3545, 2147483648
    %v3547 = vmul.f32 %v3546, 1.442695
    %v3548 = vpow.pop %v3547
    %v3549 = vadd.f32 %v3548, 1.0
    %v3550 = vrcp.pop %v3549
    %v3551 = vmul.f32 1.0, %v3550
    %v3552 = vmul.f32 %v3544, %v3535
    %v3553 = vadd.f32 %v3322, %v3552
    %v3554 = vtanh.pop %v3553
    %v3555 = vsub.f32 1.0, %v3551
    %v3556 = vmul.f32 %v3555, %v3554
    %v3557 = vmul.f32 %v3551, %v2678
    %v3558 = vadd.f32 %v3556, %v3557
    %v3559 = vsel %vm531, %v3558, 0.0
    %3560 = vadd.xlane.f32.xlu0 %v3559
    %v3561 = vpop.xlane.xlu0 %3560
    %v3562 = vmul.f32 %v3561, %v535
    %v3563 = vsub.f32 %v3558, %v3562
    %v3564 = vmul.f32 %v3563, %v3563
    %v3565 = vsel %vm531, %v3564, 0.0
    %3566 = vadd.xlane.f32.xlu0 %v3565
    %v3567 = vpop.xlane.xlu0 %3566
    %v3568 = vmul.f32 %v3567, %v535
    %v3569 = vadd.f32 %v3568, 1e-05
    %v3570 = vrsqrt.pop %v3569
    %v3571 = vmul.f32 %v3563, %v3570
    %v3572 = vmul.f32 %v3571, %v232
    %v3573 = vadd.f32 %v3572, %v236
    %v3575 = vsel %vm531, %v3573, 0
    %3577 = vmatprep.subr.mxu0 0.0
    %3578 = vmatpush1.msra.mxu0 %v195
    %3579 = vmatprep.subr.mxu0 0.0
    %3580 = vmatpush1.msra.mxu0 %v196
    %3581 = vmatprep.subr.mxu0 0.0
    %3582 = vmatpush1.msra.mxu0 %v197
    %3583 = vmatprep.subr.mxu0 0.0
    %3584 = vmatpush1.msra.mxu0 %v198
    %3585 = vmatprep.subr.mxu0 0.0
    %3586 = vmatpush1.msra.mxu0 %v199
    %3587 = vmatprep.subr.mxu0 0.0
    %3588 = vmatpush1.msra.mxu0 %v200
    %3589 = vmatprep.subr.mxu0 0.0
    %3590 = vmatpush1.msra.mxu0 %v201
    %3591 = vmatprep.subr.mxu0 0.0
    %3592 = vmatpush1.msra.mxu0 %v202
    %3593 = vmatprep.subr.mxu0 0.0
    %3594 = vmatpush1.msra.mxu0 0.0
    %3595 = vmatprep.subr.mxu0 0.0
    %3596 = vmatpush1.msra.mxu0 0.0
    %3597 = vmatprep.subr.mxu0 0.0
    %3598 = vmatpush1.msra.mxu0 0.0
    %3599 = vmatprep.subr.mxu0 0.0
    %3600 = vmatpush1.msra.mxu0 0.0
    %3601 = vmatprep.subr.mxu0 0.0
    %3602 = vmatpush1.msra.mxu0 0.0
    %3603 = vmatprep.subr.mxu0 0.0
    %3604 = vmatpush1.msra.mxu0 0.0
    %3605 = vmatprep.subr.mxu0 0.0
    %3606 = vmatpush1.msra.mxu0 0.0
    %3607 = vmatprep.subr.mxu0 0.0
    %3608 = vmatpush1.msra.mxu0 0.0
    %3609 = vmatprep.subr.mxu0 0.0
    %3610 = vmatpush1.msra.mxu0 0.0
    %3611 = vmatprep.subr.mxu0 0.0
    %3612 = vmatpush1.msra.mxu0 0.0
    %3613 = vmatprep.subr.mxu0 0.0
    %3614 = vmatpush1.msra.mxu0 0.0
    %3615 = vmatprep.subr.mxu0 0.0
    %3616 = vmatpush1.msra.mxu0 0.0
    %3617 = vmatprep.subr.mxu0 0.0
    %3618 = vmatpush1.msra.mxu0 0.0
    %3619 = vmatprep.subr.mxu0 0.0
    %3620 = vmatpush1.msra.mxu0 0.0
    %3621 = vmatprep.subr.mxu0 0.0
    %3622 = vmatpush1.msra.mxu0 0.0
    %3623 = vmatprep.subr.mxu0 0.0
    %3624 = vmatpush1.msra.mxu0 0.0
    %3625 = vmatprep.subr.mxu0 0.0
    %3626 = vmatpush1.msra.mxu0 0.0
    %3627 = vmatprep.subr.mxu0 0.0
    %3628 = vmatpush1.msra.mxu0 0.0
    %3629 = vmatprep.subr.mxu0 0.0
    %3630 = vmatpush1.msra.mxu0 0.0
    %3631 = vmatprep.subr.mxu0 0.0
    %3632 = vmatpush1.msra.mxu0 0.0
    %3633 = vmatprep.subr.mxu0 0.0
    %3634 = vmatpush1.msra.mxu0 0.0
    %3635 = vmatprep.subr.mxu0 0.0
    %3636 = vmatpush1.msra.mxu0 0.0
    %3637 = vmatprep.subr.mxu0 0.0
    %3638 = vmatpush1.msra.mxu0 0.0
    %3639 = vmatprep.subr.mxu0 0.0
    %3640 = vmatpush1.msra.mxu0 0.0
    %3641 = vmatprep.mubr.f32.mxu0 0.0
    %3642 = vmatmul.mubr.f32.gmra.mrb[0].mxu0 %v3575
    %v3643 = vpop.f32.mrb[0].mxu0
    %v3644 = vadd.f32 %v264, %v3643
    %v3645 = vpop.f32.mrb[0].mxu0
    %3646 = vdwg.mxu0
    %v3647 = vmax.f32 %v3644, 0.0
    %3648 = vmatprep.subr.mxu0 0.0
    %3649 = vmatpush1.msra.mxu0 %v203
    %3650 = vmatprep.subr.mxu0 0.0
    %3651 = vmatpush1.msra.mxu0 %v204
    %3652 = vmatprep.subr.mxu0 0.0
    %3653 = vmatpush1.msra.mxu0 %v205
    %3654 = vmatprep.subr.mxu0 0.0
    %3655 = vmatpush1.msra.mxu0 %v206
    %3656 = vmatprep.subr.mxu0 0.0
    %3657 = vmatpush1.msra.mxu0 %v207
    %3658 = vmatprep.subr.mxu0 0.0
    %3659 = vmatpush1.msra.mxu0 %v208
    %3660 = vmatprep.subr.mxu0 0.0
    %3661 = vmatpush1.msra.mxu0 %v209
    %3662 = vmatprep.subr.mxu0 0.0
    %3663 = vmatpush1.msra.mxu0 %v210
    %3664 = vmatprep.subr.mxu0 0.0
    %3665 = vmatpush1.msra.mxu0 %v211
    %3666 = vmatprep.subr.mxu0 0.0
    %3667 = vmatpush1.msra.mxu0 %v212
    %3668 = vmatprep.subr.mxu0 0.0
    %3669 = vmatpush1.msra.mxu0 %v213
    %3670 = vmatprep.subr.mxu0 0.0
    %3671 = vmatpush1.msra.mxu0 %v214
    %3672 = vmatprep.subr.mxu0 0.0
    %3673 = vmatpush1.msra.mxu0 %v215
    %3674 = vmatprep.subr.mxu0 0.0
    %3675 = vmatpush1.msra.mxu0 %v216
    %3676 = vmatprep.subr.mxu0 0.0
    %3677 = vmatpush1.msra.mxu0 %v217
    %3678 = vmatprep.subr.mxu0 0.0
    %3679 = vmatpush1.msra.mxu0 %v218
    %3680 = vmatprep.subr.mxu0 0.0
    %3681 = vmatpush1.msra.mxu0 0.0
    %3682 = vmatprep.subr.mxu0 0.0
    %3683 = vmatpush1.msra.mxu0 0.0
    %3684 = vmatprep.subr.mxu0 0.0
    %3685 = vmatpush1.msra.mxu0 0.0
    %3686 = vmatprep.subr.mxu0 0.0
    %3687 = vmatpush1.msra.mxu0 0.0
    %3688 = vmatprep.subr.mxu0 0.0
    %3689 = vmatpush1.msra.mxu0 0.0
    %3690 = vmatprep.subr.mxu0 0.0
    %3691 = vmatpush1.msra.mxu0 0.0
    %3692 = vmatprep.subr.mxu0 0.0
    %3693 = vmatpush1.msra.mxu0 0.0
    %3694 = vmatprep.subr.mxu0 0.0
    %3695 = vmatpush1.msra.mxu0 0.0
    %3696 = vmatprep.subr.mxu0 0.0
    %3697 = vmatpush1.msra.mxu0 0.0
    %3698 = vmatprep.subr.mxu0 0.0
    %3699 = vmatpush1.msra.mxu0 0.0
    %3700 = vmatprep.subr.mxu0 0.0
    %3701 = vmatpush1.msra.mxu0 0.0
    %3702 = vmatprep.subr.mxu0 0.0
    %3703 = vmatpush1.msra.mxu0 0.0
    %3704 = vmatprep.subr.mxu0 0.0
    %3705 = vmatpush1.msra.mxu0 0.0
    %3706 = vmatprep.subr.mxu0 0.0
    %3707 = vmatpush1.msra.mxu0 0.0
    %3708 = vmatprep.subr.mxu0 0.0
    %3709 = vmatpush1.msra.mxu0 0.0
    %3710 = vmatprep.subr.mxu0 0.0
    %3711 = vmatpush1.msra.mxu0 0.0
    %3712 = vmatprep.mubr.f32.mxu0 0.0
    %3713 = vmatmul.mubr.f32.gmra.mrb[0].mxu0 %v3647
    %v3714 = vpop.f32.mrb[0].mxu0
    %v3715 = vadd.f32 0.0, %v3714
    %v3716 = vpop.f32.mrb[0].mxu0
    %3717 = vdwg.mxu0
    %v3718 = vadd.f32 %v3558, %v3715
    %v3719 = vadd.f32 %v3718, %v268
    %v3721 = vcombine.high %v3719, %v3719
    %vm3723 = vcmask 519168
    %3724 = vst.msk [vmem:[#allocation14] sm:$0xf] %vm3723, %v3719
    %3725 = vst.msk [vmem:[#allocation14 + $0x4] sm:$0xf] %vm3723, %v3721
    // Predicated region
    $region70: #{tpu_custom_call.1} parent=1 // pred_check
      _
    $region71: #{tpu_custom_call.1} parent=1 // pred_check_branch
      %3727 = sbr.rel (0) target = $region73
    $region72: #{tpu_custom_call.1} parent=1 // pred_region
      %s3729 = ssub.s32 128, 128
      %3730 = vsyncadd [#allocation4], %s3729
      %s3731 = sshll.u32 [#allocation14], 4
      %s3732 = int_to_ptr.vmem [resolvable:$true] %s3731
      %3737 = dma.vmem_to_hbm [thread:$0]  %s3732, 128, %s10, [#allocation4], 64, 64, 4
    $region73: #{tpu_custom_call.1} parent=1 // pred_fallthru
      _
    // Predicated region
    $region74: #{tpu_custom_call.1} parent=1 // pred_check
      _
    $region75: #{tpu_custom_call.1} parent=1 // pred_check_branch
      %3739 = sbr.rel (0) target = $region77
    $region76: #{tpu_custom_call.1} parent=1 // pred_region
      %3740 = dma.done [#allocation4], 128
    $region77: #{tpu_custom_call.1} parent=1 // pred_fallthru
      _
    %3741 = vsyncpa [#allocation3], 1
    %3742 = vsyncpa [#allocation6], 1
    %3743 = vsyncpa [#allocation9], 1
    %3744 = vsyncpa [#allocation12], 1
    %3745 = vsyncpa [#allocation4], 1

</llo_original>
